<compile_context>
chip_gen: v7x
topology: tpu7x:2x2x1
jax: 0.10.0
libtpu: 0.0.40
codegen_flags: <defaults>
</compile_context>

<pallas_src>
import functools

import numpy as np
import jax
import jax.numpy as jnp
from jax.experimental import pallas as pl
from jax.experimental.pallas import tpu as pltpu


# -----------------------------------------------------------------------------
# Static module configuration (mirrors MultiscaleDeformableAttention.__init__)
# -----------------------------------------------------------------------------
EMB_DIM = 32
HIDDEN_DIM = 32
NUM_LEVELS = 2
NUM_HEADS = 4
NUM_POINTS = 4
PADDING_MODE = "zeros"        # "border" or "zeros"
ALIGN_CORNERS = False
CH = HIDDEN_DIM // NUM_HEADS
LP = NUM_LEVELS * NUM_POINTS
HLP = NUM_HEADS * LP
QDIM = HLP * 3

LEVEL_SHAPES = ((16, 16), (8, 8))            # (h, w) per pyramid level (static)
I_TOTAL = sum(h * w for h, w in LEVEL_SHAPES)

LANE = 128


def _round_up(x, m):
    return (x + m - 1) // m * m


LVL_PAD_SIZES = tuple(_round_up(h * w, LANE) for h, w in LEVEL_SHAPES)
_cum = np.cumsum((0,) + LVL_PAD_SIZES)
LVL_PAD_OFFS = tuple(int(_cum[i]) for i in range(NUM_LEVELS))
I_PAD = int(_cum[-1])

# TODO(synk): runtime-dynamic img_shapes (level sizes) are not supported; the
# pixel-coordinate constants are baked statically from LEVEL_SHAPES.


# -----------------------------------------------------------------------------
# Fused MSDA kernel.  One grid step processes `bb` batch items (bb=B on
# single-TC chips, bb=1 with grid=(B,) on multi-TC chips).
# -----------------------------------------------------------------------------
def _fused_msda_kernel(img_ref, q_ref, rp_ref, w_img_ref, b_img_ref,
                       w_q_ref, b_q_ref, w_out_ref, b_out_ref,
                       coef_ref, gridc_ref, smax_ref, bdmask_ref, out_ref, *,
                       level_shapes, lvl_sizes, lvl_offs, num_heads, num_points,
                       padding_mode, align_corners, rp_last, bb, n_q):
    # img_ref    : [bb, I_PAD, EMB]   zero-padded pyramid (each level 128-lane aligned)
    # q_ref      : [bb, N, EMB]
    # rp_ref     : [bb, N, 2 or 4]
    # w_img_ref  : [EMB, HIDDEN]            b_img_ref : [1, HIDDEN]
    # w_q_ref    : [EMB, 3*H*L*P]  (cols permuted to [x | y | logit])
    # b_q_ref    : [1, 3*H*L*P]
    # w_out_ref  : [HIDDEN, EMB]            b_out_ref : [1, EMB]
    # coef_ref   : [6, H*L*P]   rows: inv_h, inv_w, x_scale, y_scale, xmax, ymax
    # gridc_ref  : [2, I_PAD]   rows: pixel x-coord, pixel y-coord (pad = -1e6)
    # smax_ref   : [HLP, HLP]   per-head block-of-ones (softmax segment sum)
    # bdmask_ref : [H*N, HIDDEN] block-diagonal head mask
    # out_ref    : [bb, N, EMB]
    H, P = num_heads, num_points
    L = len(level_shapes)
    lp = L * P
    hlp = H * lp
    emb = w_img_ref.shape[0]
    hidden = w_img_ref.shape[1]
    i_pad = gridc_ref.shape[1]
    n_rows = bb * n_q

    # ---- image input projection: both batch items in ONE MXU call ----------
    img_flat = img_ref[...].reshape(bb * i_pad, emb)
    img_p = (jnp.dot(img_flat, w_img_ref[...],
                     preferred_element_type=jnp.float32)
             + b_img_ref[...])                               # [bb*I_PAD, HIDDEN]

    # ---- query projection + coordinate math, hoisted over batch/head/level --
    q_flat = q_ref[...].reshape(n_rows, emb)
    qp = (jnp.dot(q_flat, w_q_ref[...], preferred_element_type=jnp.float32)
          + b_q_ref[...])                                    # [bb*N, 3*HLP]
    x_off = qp[:, 0:hlp]
    y_off = qp[:, hlp:2 * hlp]
    logits = qp[:, 2 * hlp:3 * hlp]

    rp = rp_ref[...].reshape(n_rows, rp_last)
    rx = rp[:, 0:1]
    ry = rp[:, 1:2]
    if rp_last == 2:
        # Mirrors the reference broadcast exactly: x offsets are divided by
        # img_shapes[...,0]=h and y offsets by img_shapes[...,1]=w.
        sx = rx + x_off * coef_ref[0:1, :]
        sy = ry + y_off * coef_ref[1:2, :]
    else:
        sx = rx + x_off / rp[:, 2:3]
        sy = ry + y_off / rp[:, 3:4]

    # F.grid_sample coordinate transform:  [0,1] -> [-1,1] -> pixel coords
    shift = 0.0 if align_corners else -0.5
    px = sx * coef_ref[2:3, :] + shift                       # [bb*N, HLP]
    py = sy * coef_ref[3:4, :] + shift
    if padding_mode == "border":
        px = jnp.clip(px, 0.0, coef_ref[4:5, :])
        py = jnp.clip(py, 0.0, coef_ref[5:6, :])

    # ---- fused per-head softmax over (level, point) -------------------------
    m = jnp.max(logits, axis=-1, keepdims=True)              # row max (valid per-head too)
    e = jnp.exp(logits - m)
    den = jnp.dot(e, smax_ref[...], preferred_element_type=jnp.float32)
    attn = e / den                                           # exact; [bb*N, HLP]

    # per-level pixel coordinate lane-vectors (constants, hoisted)
    col_bands = [gridc_ref[0:1, o:o + s] for o, s in zip(lvl_offs, lvl_sizes)]
    row_bands = [gridc_ref[1:2, o:o + s] for o, s in zip(lvl_offs, lvl_sizes)]

    bd_mask = bdmask_ref[...]
    w_out = w_out_ref[...]
    b_out = b_out_ref[...]

    for b in range(bb):
        r0 = b * n_q
        px_b = px[r0:r0 + n_q, :]
        py_b = py[r0:r0 + n_q, :]
        at_b = attn[r0:r0 + n_q, :]
        img_b = img_p[b * i_pad:(b + 1) * i_pad, :]          # [I_PAD, HIDDEN]

        # Separable tent weights: for each point,
        #   w[n, i] = relu(1-|px-col_i|) * relu(1-|py-row_i|) * attn[n, point]
        # This is exactly bilinear interpolation with zeros-padding; for
        # border mode px/py were clipped above.  Padded lanes use a -1e6
        # coordinate sentinel so their tent weight is 0.
        head_rows = []
        for h in range(H):
            bands = []
            for l in range(L):
                col_l = col_bands[l]
                row_l = row_bands[l]
                band = jnp.zeros((n_q, lvl_sizes[l]), jnp.float32)
                for p in range(P):
                    c = (h * L + l) * P + p
                    tx = jnp.maximum(1.0 - jnp.abs(px_b[:, c:c + 1] - col_l), 0.0)
                    ty = jnp.maximum(1.0 - jnp.abs(py_b[:, c:c + 1] - row_l), 0.0)
                    band = band + at_b[:, c:c + 1] * (tx * ty)
                bands.append(band)
            head_rows.append(bands[0] if L == 1
                             else jnp.concatenate(bands, axis=1))   # [N, I_PAD]
        wcomb = jnp.concatenate(head_rows, axis=0)           # [H*N, I_PAD]

        # ONE gather matmul for all heads, then block-diag extract + ONE
        # output-projection matmul, then sum over head groups.
        big = jnp.dot(wcomb, img_b, preferred_element_type=jnp.float32)   # [H*N, HIDDEN]
        proj = jnp.dot(big * bd_mask, w_out,
                       preferred_element_type=jnp.float32)                # [H*N, EMB]
        out_b = proj[0:n_q, :]
        for h in range(1, H):
            out_b = out_b + proj[h * n_q:(h + 1) * n_q, :]
        out_ref[b, :, :] = out_b + b_out


# -----------------------------------------------------------------------------
# Host-side constant builders
# -----------------------------------------------------------------------------
def _build_grid_const():
    """[2, I_PAD] f32: row0 = pixel x coord, row1 = pixel y coord, pads = -1e6."""
    cols, rows = [], []
    for (h_l, w_l), sz in zip(LEVEL_SHAPES, LVL_PAD_SIZES):
        i_l = h_l * w_l
        x = (np.arange(i_l) % w_l).astype(np.float32)
        y = (np.arange(i_l) // w_l).astype(np.float32)
        pad = sz - i_l
        cols.append(np.concatenate([x, np.full(pad, -1e6, np.float32)]))
        rows.append(np.concatenate([y, np.full(pad, -1e6, np.float32)]))
    return np.stack([np.concatenate(cols), np.concatenate(rows)]).astype(np.float32)


def _build_coef():
    """[6, HLP] f32 per-point-column constants."""
    lvl_of_col = (np.arange(HLP) // NUM_POINTS) % NUM_LEVELS
    h_arr = np.array([LEVEL_SHAPES[l][0] for l in lvl_of_col], np.float32)
    w_arr = np.array([LEVEL_SHAPES[l][1] for l in lvl_of_col], np.float32)
    inv_h = 1.0 / h_arr
    inv_w = 1.0 / w_arr
    if ALIGN_CORNERS:
        ax, ay = w_arr - 1.0, h_arr - 1.0
    else:
        ax, ay = w_arr, h_arr
    xmax, ymax = w_arr - 1.0, h_arr - 1.0
    return np.stack([inv_h, inv_w, ax, ay, xmax, ymax]).astype(np.float32)


_COEF = _build_coef()
_GRIDC = _build_grid_const()
_SMAX_M = np.kron(np.eye(NUM_HEADS, dtype=np.float32),
                  np.ones((LP, LP), np.float32))             # [HLP, HLP]


def _pad_levels(img):
    """Pad each pyramid level to a 128-lane multiple along the pixel axis."""
    parts, off = [], 0
    for (h_l, w_l), sz in zip(LEVEL_SHAPES, LVL_PAD_SIZES):
        i_l = h_l * w_l
        part = img[:, off:off + i_l]
        if sz > i_l:
            part = jnp.pad(part, ((0, 0), (0, sz - i_l), (0, 0)))
        parts.append(part)
        off += i_l
    return jnp.concatenate(parts, axis=1)                    # [B, I_PAD, EMB]


def _permute_wq(w_q, b_q):
    """Reorder query-proj features from (h, l, p, comp) to (comp, h, l, p)."""
    h, l, p = NUM_HEADS, NUM_LEVELS, NUM_POINTS
    w = w_q.reshape(EMB_DIM, h, l, p, 3)
    b = b_q.reshape(h, l, p, 3)
    w_perm = jnp.transpose(w, (0, 4, 1, 2, 3)).reshape(EMB_DIM, QDIM)
    b_perm = jnp.transpose(b, (3, 0, 1, 2)).reshape(1, QDIM)
    return w_perm, b_perm


def _should_fold_batch():
    """Fold batch into one grid step on single-TensorCore chips (v5e/v6e)."""
    try:
        kind = jax.devices()[0].device_kind.lower()
    except Exception:
        return True
    multi_tc = ("7" in kind) or ("v4" in kind) or ("v5p" in kind)
    return not multi_tc


# -----------------------------------------------------------------------------
# Parameter init (deterministic, synthetic — shapes match the torch module)
# -----------------------------------------------------------------------------
def init_params(key):
    ks = jax.random.split(key, 6)
    return {
        "w_img": 0.1 * jax.random.normal(ks[0], (EMB_DIM, HIDDEN_DIM), jnp.float32),
        "b_img": 0.1 * jax.random.normal(ks[1], (HIDDEN_DIM,), jnp.float32),
        "w_q": 0.1 * jax.random.normal(ks[2], (EMB_DIM, QDIM), jnp.float32),
        "b_q": 0.1 * jax.random.normal(ks[3], (QDIM,), jnp.float32),
        "w_out": 0.1 * jax.random.normal(ks[4], (HIDDEN_DIM, EMB_DIM), jnp.float32),
        "b_out": 0.1 * jax.random.normal(ks[5], (EMB_DIM,), jnp.float32),
    }


# -----------------------------------------------------------------------------
# Forward pass: a single fused pallas_call
# -----------------------------------------------------------------------------
def msda_forward(params, img, img_shapes_f, queries, reference_points,
                 fold_batch=None):
    del img_shapes_f  # level shapes are static (LEVEL_SHAPES); kept for API parity
    b = img.shape[0]
    n_q = queries.shape[1]
    rp_last = reference_points.shape[-1]
    if fold_batch is None:
        fold_batch = _should_fold_batch()
    bb = b if fold_batch else 1
    grid = (1,) if fold_batch else (b,)

    # Wrapper-side layout plumbing (all tiny).
    img_pad = _pad_levels(img)                               # [B, I_PAD, EMB]
    b_img = params["b_img"].reshape(1, HIDDEN_DIM)
    w_q_p, b_q_p = _permute_wq(params["w_q"], params["b_q"])
    b_out = params["b_out"].reshape(1, EMB_DIM)
    coef = jnp.asarray(_COEF)
    gridc = jnp.asarray(_GRIDC)
    smax_m = jnp.asarray(_SMAX_M)
    bd_mask = jnp.asarray(np.kron(np.eye(NUM_HEADS, dtype=np.float32),
                                  np.ones((n_q, CH), np.float32)))  # [H*N, HIDDEN]

    if fold_batch:
        bmap = lambda i: (0, 0, 0)
    else:
        bmap = lambda i: (i, 0, 0)
    zmap = lambda i: (0, 0)

    kern = functools.partial(
        _fused_msda_kernel,
        level_shapes=LEVEL_SHAPES,
        lvl_sizes=LVL_PAD_SIZES,
        lvl_offs=LVL_PAD_OFFS,
        num_heads=NUM_HEADS,
        num_points=NUM_POINTS,
        padding_mode=PADDING_MODE,
        align_corners=ALIGN_CORNERS,
        rp_last=rp_last,
        bb=bb,
        n_q=n_q,
    )

    # TODO(synk): at realistic sizes (N in the thousands) the query axis must
    # be tiled and the [N_tile, I_PAD] weight slab budgeted against v7x's
    # 64 MiB VMEM (vmem_limit_bytes); irrelevant at these toy shapes.
    return pl.pallas_call(
        kern,
        out_shape=jax.ShapeDtypeStruct((b, n_q, EMB_DIM), jnp.float32),
        grid_spec=pltpu.PrefetchScalarGridSpec(
            num_scalar_prefetch=0,
            grid=grid,
            in_specs=[
                pl.BlockSpec((bb, I_PAD, EMB_DIM), bmap),        # padded img
                pl.BlockSpec((bb, n_q, EMB_DIM), bmap),          # queries
                pl.BlockSpec((bb, n_q, rp_last), bmap),          # reference pts
                pl.BlockSpec((EMB_DIM, HIDDEN_DIM), zmap),       # w_img
                pl.BlockSpec((1, HIDDEN_DIM), zmap),             # b_img
                pl.BlockSpec((EMB_DIM, QDIM), zmap),             # w_q (permuted)
                pl.BlockSpec((1, QDIM), zmap),                   # b_q (permuted)
                pl.BlockSpec((HIDDEN_DIM, EMB_DIM), zmap),       # w_out
                pl.BlockSpec((1, EMB_DIM), zmap),                # b_out
                pl.BlockSpec((6, HLP), zmap),                    # coord coefs
                pl.BlockSpec((2, I_PAD), zmap),                  # pixel col/row
                pl.BlockSpec((HLP, HLP), zmap),                  # softmax blocks
                pl.BlockSpec((NUM_HEADS * n_q, HIDDEN_DIM), zmap),  # blk-diag mask
            ],
            out_specs=pl.BlockSpec((bb, n_q, EMB_DIM), bmap),
        ),
        compiler_params=pltpu.CompilerParams(
            dimension_semantics=("parallel",)),
    )(img_pad, queries, reference_points, params["w_img"], b_img,
      w_q_p, b_q_p, params["w_out"], b_out, coef, gridc, smax_m, bd_mask)


# -----------------------------------------------------------------------------
# Plain-JAX reference of the full forward (gather-based) for a sanity check
# -----------------------------------------------------------------------------
def msda_forward_ref(params, img, img_shapes_f, queries, reference_points):
    b, i_tot, _ = img.shape
    _, n_q, _ = queries.shape
    h, l, p, ch = NUM_HEADS, NUM_LEVELS, NUM_POINTS, CH

    img_p = (img @ params["w_img"] + params["b_img"]).reshape(b, i_tot, h, ch)
    qp = (queries @ params["w_q"] + params["b_q"]).reshape(b, n_q, h, l, p, 3)
    offsets = qp[..., :2]
    logits = qp[..., 2]
    attn = jax.nn.softmax(logits.reshape(b, n_q, h, l * p), axis=-1)
    attn = attn.reshape(b, n_q, h, l, p)

    last = reference_points.shape[-1]
    if last == 2:
        sampling = (reference_points[:, :, None, None, None, :]
                    + offsets / img_shapes_f[:, None, :])
    else:
        sampling = (reference_points[:, :, None, None, None, :2]
                    + offsets / reference_points[:, :, None, None, None, 2:])

    out = jnp.zeros((b, n_q, h, ch), jnp.float32)
    offset = 0
    for lvl, (h_l, w_l) in enumerate(LEVEL_SHAPES):
        pts = sampling[:, :, :, lvl]          # [B, N, H, P, 2]
        aw = attn[:, :, :, lvl]               # [B, N, H, P]
        gx = 2.0 * pts[..., 0] - 1.0
        gy = 2.0 * pts[..., 1] - 1.0
        if ALIGN_CORNERS:
            px = (gx + 1.0) * 0.5 * (w_l - 1)
            py = (gy + 1.0) * 0.5 * (h_l - 1)
        else:
            px = ((gx + 1.0) * w_l - 1.0) * 0.5
            py = ((gy + 1.0) * h_l - 1.0) * 0.5
        if PADDING_MODE == "border":
            px = jnp.clip(px, 0.0, w_l - 1.0)
            py = jnp.clip(py, 0.0, h_l - 1.0)
        x0 = jnp.floor(px)
        y0 = jnp.floor(py)
        x1 = x0 + 1.0
        y1 = y0 + 1.0
        wx1 = px - x0
        wx0 = 1.0 - wx1
        wy1 = py - y0
        wy0 = 1.0 - wy1
        img_lvl = jnp.transpose(img_p[:, offset:offset + h_l * w_l], (0, 2, 1, 3))
        for cx, cy, cw in ((x0, y0, wx0 * wy0), (x1, y0, wx1 * wy0),
                           (x0, y1, wx0 * wy1), (x1, y1, wx1 * wy1)):
            if PADDING_MODE == "zeros":
                valid = ((cx >= 0) & (cx <= w_l - 1) & (cy >= 0) & (cy <= h_l - 1))
                cw = jnp.where(valid, cw, 0.0)
            cxi = jnp.clip(cx, 0, w_l - 1).astype(jnp.int32)
            cyi = jnp.clip(cy, 0, h_l - 1).astype(jnp.int32)
            idx = cyi * w_l + cxi                                 # [B, N, H, P]
            idx_bh = jnp.transpose(idx, (0, 2, 1, 3)).reshape(b, h, n_q * p, 1)
            idx_bh = jnp.broadcast_to(idx_bh, (b, h, n_q * p, ch))
            vals = jnp.take_along_axis(img_lvl, idx_bh, axis=2)
            vals = jnp.transpose(vals.reshape(b, h, n_q, p, ch), (0, 2, 1, 3, 4))
            out = out + jnp.sum((aw * cw)[..., None] * vals, axis=3)
        offset += h_l * w_l
    out = out.reshape(b, n_q, HIDDEN_DIM)
    return out @ params["w_out"] + params["b_out"]


# -----------------------------------------------------------------------------
if __name__ == "__main__":
    key = jax.random.PRNGKey(0)
    kp, ki, kq, kr = jax.random.split(key, 4)

    params = init_params(kp)

    B, N = 2, 8
    img_shapes_f = jnp.array(LEVEL_SHAPES, jnp.float32)              # [L, 2] (h, w)
    img = jax.random.normal(ki, (B, I_TOTAL, EMB_DIM), jnp.float32)  # [B, I, emb]
    queries = jax.random.normal(kq, (B, N, EMB_DIM), jnp.float32)    # [B, N, emb]
    reference_points = jax.random.uniform(kr, (B, N, 2), jnp.float32)

    fwd = jax.jit(msda_forward)
    out = jax.block_until_ready(
        fwd(params, img, img_shapes_f, queries, reference_points))
    assert out.shape == (B, N, EMB_DIM)

    ref = jax.block_until_ready(
        msda_forward_ref(params, img, img_shapes_f, queries, reference_points))
    assert jnp.allclose(out, ref, rtol=2e-3, atol=2e-3), (
        float(jnp.max(jnp.abs(out - ref))))

    print("KERNEL_OK")
</pallas_src>

<mosaic_0001>
module attributes {stable_mosaic.version = 11 : i64} {
  func.func @_fused_msda_kernel(%arg0: i32, %arg1: memref<2x384x32xf32, #tpu.memory_space<vmem>>, %arg2: memref<2x8x32xf32, #tpu.memory_space<vmem>>, %arg3: memref<2x8x2xf32, #tpu.memory_space<vmem>>, %arg4: memref<32x32xf32, #tpu.memory_space<vmem>>, %arg5: memref<1x32xf32, #tpu.memory_space<vmem>>, %arg6: memref<32x96xf32, #tpu.memory_space<vmem>>, %arg7: memref<1x96xf32, #tpu.memory_space<vmem>>, %arg8: memref<32x32xf32, #tpu.memory_space<vmem>>, %arg9: memref<1x32xf32, #tpu.memory_space<vmem>>, %arg10: memref<6x32xf32, #tpu.memory_space<vmem>>, %arg11: memref<2x384xf32, #tpu.memory_space<vmem>>, %arg12: memref<32x32xf32, #tpu.memory_space<vmem>>, %arg13: memref<32x32xf32, #tpu.memory_space<vmem>>, %arg14: memref<2x8x32xf32, #tpu.memory_space<vmem>>) attributes {dimension_semantics = [#tpu.dimension_semantics<parallel>], iteration_bounds = array<i64: 1>, scalar_prefetch = 0 : i64, scratch_operands = 0 : i64, tpu.core_type = #tpu.core_type<tc>, window_params = [{pipeline_mode = #tpu.pipeline_mode<synchronous>, transform_indices = @transform_0, window_bounds = array<i64: 2, 384, 32>}, {pipeline_mode = #tpu.pipeline_mode<synchronous>, transform_indices = @transform_1, window_bounds = array<i64: 2, 8, 32>}, {pipeline_mode = #tpu.pipeline_mode<synchronous>, transform_indices = @transform_2, window_bounds = array<i64: 2, 8, 2>}, {pipeline_mode = #tpu.pipeline_mode<synchronous>, transform_indices = @transform_3, window_bounds = array<i64: 32, 32>}, {pipeline_mode = #tpu.pipeline_mode<synchronous>, transform_indices = @transform_4, window_bounds = array<i64: 1, 32>}, {pipeline_mode = #tpu.pipeline_mode<synchronous>, transform_indices = @transform_5, window_bounds = array<i64: 32, 96>}, {pipeline_mode = #tpu.pipeline_mode<synchronous>, transform_indices = @transform_6, window_bounds = array<i64: 1, 96>}, {pipeline_mode = #tpu.pipeline_mode<synchronous>, transform_indices = @transform_7, window_bounds = array<i64: 32, 32>}, {pipeline_mode = #tpu.pipeline_mode<synchronous>, transform_indices = @transform_8, window_bounds = array<i64: 1, 32>}, {pipeline_mode = #tpu.pipeline_mode<synchronous>, transform_indices = @transform_9, window_bounds = array<i64: 6, 32>}, {pipeline_mode = #tpu.pipeline_mode<synchronous>, transform_indices = @transform_10, window_bounds = array<i64: 2, 384>}, {pipeline_mode = #tpu.pipeline_mode<synchronous>, transform_indices = @transform_11, window_bounds = array<i64: 32, 32>}, {pipeline_mode = #tpu.pipeline_mode<synchronous>, transform_indices = @transform_12, window_bounds = array<i64: 32, 32>}, {pipeline_mode = #tpu.pipeline_mode<synchronous>, transform_indices = @transform_13, window_bounds = array<i64: 2, 8, 32>}]} {
    %c0 = arith.constant 0 : index
    %c0_0 = arith.constant 0 : index
    %c0_1 = arith.constant 0 : index
    %0 = vector.load %arg1[%c0, %c0_0, %c0_1] : memref<2x384x32xf32, #tpu.memory_space<vmem>>, vector<2x384x32xf32>
    %1 = vector.shape_cast %0 : vector<2x384x32xf32> to vector<768x32xf32>
    %c0_2 = arith.constant 0 : index
    %c0_3 = arith.constant 0 : index
    %2 = vector.load %arg4[%c0_2, %c0_3] : memref<32x32xf32, #tpu.memory_space<vmem>>, vector<32x32xf32>
    %cst = arith.constant dense<0.000000e+00> : vector<768x32xf32>
    %3 = tpu.matmul %1, %2, %cst {dimension_numbers = #tpu.dot_dimension_numbers<[1], [0], [0], [1], [0, 0, 1, 1], [], []>} : vector<768x32xf32>, vector<32x32xf32>, vector<768x32xf32> -> vector<768x32xf32>
    %c0_4 = arith.constant 0 : index
    %c0_5 = arith.constant 0 : index
    %4 = vector.load %arg5[%c0_4, %c0_5] : memref<1x32xf32, #tpu.memory_space<vmem>>, vector<1x32xf32>
    %5 = vector.broadcast %4 : vector<1x32xf32> to vector<768x32xf32>
    %6 = arith.addf %3, %5 : vector<768x32xf32>
    %c0_6 = arith.constant 0 : index
    %c0_7 = arith.constant 0 : index
    %c0_8 = arith.constant 0 : index
    %7 = vector.load %arg2[%c0_6, %c0_7, %c0_8] : memref<2x8x32xf32, #tpu.memory_space<vmem>>, vector<2x8x32xf32>
    %8 = vector.shape_cast %7 : vector<2x8x32xf32> to vector<16x32xf32>
    %c0_9 = arith.constant 0 : index
    %c0_10 = arith.constant 0 : index
    %9 = vector.load %arg6[%c0_9, %c0_10] : memref<32x96xf32, #tpu.memory_space<vmem>>, vector<32x96xf32>
    %cst_11 = arith.constant dense<0.000000e+00> : vector<16x96xf32>
    %10 = tpu.matmul %8, %9, %cst_11 {dimension_numbers = #tpu.dot_dimension_numbers<[1], [0], [0], [1], [0, 0, 1, 1], [], []>} : vector<16x32xf32>, vector<32x96xf32>, vector<16x96xf32> -> vector<16x96xf32>
    %c0_12 = arith.constant 0 : index
    %c0_13 = arith.constant 0 : index
    %11 = vector.load %arg7[%c0_12, %c0_13] : memref<1x96xf32, #tpu.memory_space<vmem>>, vector<1x96xf32>
    %12 = vector.broadcast %11 : vector<1x96xf32> to vector<16x96xf32>
    %13 = arith.addf %10, %12 : vector<16x96xf32>
    %14 = vector.extract_strided_slice %13 {offsets = [0, 0], sizes = [16, 32], strides = [1, 1]} : vector<16x96xf32> to vector<16x32xf32>
    %15 = vector.extract_strided_slice %13 {offsets = [0, 32], sizes = [16, 32], strides = [1, 1]} : vector<16x96xf32> to vector<16x32xf32>
    %16 = vector.extract_strided_slice %13 {offsets = [0, 64], sizes = [16, 32], strides = [1, 1]} : vector<16x96xf32> to vector<16x32xf32>
    %c0_14 = arith.constant 0 : index
    %c0_15 = arith.constant 0 : index
    %c0_16 = arith.constant 0 : index
    %17 = vector.load %arg3[%c0_14, %c0_15, %c0_16] : memref<2x8x2xf32, #tpu.memory_space<vmem>>, vector<2x8x2xf32>
    %18 = vector.shape_cast %17 : vector<2x8x2xf32> to vector<16x2xf32>
    %19 = vector.extract_strided_slice %18 {offsets = [0, 0], sizes = [16, 1], strides = [1, 1]} : vector<16x2xf32> to vector<16x1xf32>
    %20 = vector.extract_strided_slice %18 {offsets = [0, 1], sizes = [16, 1], strides = [1, 1]} : vector<16x2xf32> to vector<16x1xf32>
    %c0_17 = arith.constant 0 : index
    %c0_18 = arith.constant 0 : index
    %21 = vector.load %arg10[%c0_17, %c0_18] : memref<6x32xf32, #tpu.memory_space<vmem>>, vector<1x32xf32>
    %22 = vector.broadcast %21 : vector<1x32xf32> to vector<16x32xf32>
    %23 = arith.mulf %14, %22 : vector<16x32xf32>
    %24 = vector.broadcast %19 : vector<16x1xf32> to vector<16x32xf32>
    %25 = arith.addf %24, %23 : vector<16x32xf32>
    %c1 = arith.constant 1 : index
    %c0_19 = arith.constant 0 : index
    %26 = vector.load %arg10[%c1, %c0_19] : memref<6x32xf32, #tpu.memory_space<vmem>>, vector<1x32xf32>
    %27 = vector.broadcast %26 : vector<1x32xf32> to vector<16x32xf32>
    %28 = arith.mulf %15, %27 : vector<16x32xf32>
    %29 = vector.broadcast %20 : vector<16x1xf32> to vector<16x32xf32>
    %30 = arith.addf %29, %28 : vector<16x32xf32>
    %c2 = arith.constant 2 : index
    %c0_20 = arith.constant 0 : index
    %31 = vector.load %arg10[%c2, %c0_20] : memref<6x32xf32, #tpu.memory_space<vmem>>, vector<1x32xf32>
    %32 = vector.broadcast %31 : vector<1x32xf32> to vector<16x32xf32>
    %33 = arith.mulf %25, %32 : vector<16x32xf32>
    %cst_21 = arith.constant -5.000000e-01 : f32
    %34 = vector.broadcast %cst_21 : f32 to vector<16x32xf32>
    %35 = arith.addf %33, %34 : vector<16x32xf32>
    %c3 = arith.constant 3 : index
    %c0_22 = arith.constant 0 : index
    %36 = vector.load %arg10[%c3, %c0_22] : memref<6x32xf32, #tpu.memory_space<vmem>>, vector<1x32xf32>
    %37 = vector.broadcast %36 : vector<1x32xf32> to vector<16x32xf32>
    %38 = arith.mulf %30, %37 : vector<16x32xf32>
    %cst_23 = arith.constant -5.000000e-01 : f32
    %39 = vector.broadcast %cst_23 : f32 to vector<16x32xf32>
    %40 = arith.addf %38, %39 : vector<16x32xf32>
    %cst_24 = arith.constant dense<0xFF800000> : vector<16xf32>
    %41 = vector.multi_reduction <maximumf>, %16, %cst_24 [1] : vector<16x32xf32> to vector<16xf32>
    %42 = vector.shape_cast %41 : vector<16xf32> to vector<16x1xf32>
    %43 = vector.broadcast %42 : vector<16x1xf32> to vector<16x32xf32>
    %44 = arith.subf %16, %43 : vector<16x32xf32>
    %45 = math.exp %44 : vector<16x32xf32>
    %c0_25 = arith.constant 0 : index
    %c0_26 = arith.constant 0 : index
    %46 = vector.load %arg12[%c0_25, %c0_26] : memref<32x32xf32, #tpu.memory_space<vmem>>, vector<32x32xf32>
    %cst_27 = arith.constant dense<0.000000e+00> : vector<16x32xf32>
    %47 = tpu.matmul %45, %46, %cst_27 {dimension_numbers = #tpu.dot_dimension_numbers<[1], [0], [0], [1], [0, 0, 1, 1], [], []>} : vector<16x32xf32>, vector<32x32xf32>, vector<16x32xf32> -> vector<16x32xf32>
    %48 = arith.divf %45, %47 : vector<16x32xf32>
    %c0_28 = arith.constant 0 : index
    %c0_29 = arith.constant 0 : index
    %49 = vector.load %arg11[%c0_28, %c0_29] : memref<2x384xf32, #tpu.memory_space<vmem>>, vector<1x256xf32>
    %c0_30 = arith.constant 0 : index
    %c256 = arith.constant 256 : index
    %50 = vector.load %arg11[%c0_30, %c256] : memref<2x384xf32, #tpu.memory_space<vmem>>, vector<1x128xf32>
    %c1_31 = arith.constant 1 : index
    %c0_32 = arith.constant 0 : index
    %51 = vector.load %arg11[%c1_31, %c0_32] : memref<2x384xf32, #tpu.memory_space<vmem>>, vector<1x256xf32>
    %c1_33 = arith.constant 1 : index
    %c256_34 = arith.constant 256 : index
    %52 = vector.load %arg11[%c1_33, %c256_34] : memref<2x384xf32, #tpu.memory_space<vmem>>, vector<1x128xf32>
    %c0_35 = arith.constant 0 : index
    %c0_36 = arith.constant 0 : index
    %53 = vector.load %arg13[%c0_35, %c0_36] : memref<32x32xf32, #tpu.memory_space<vmem>>, vector<32x32xf32>
    %c0_37 = arith.constant 0 : index
    %c0_38 = arith.constant 0 : index
    %54 = vector.load %arg8[%c0_37, %c0_38] : memref<32x32xf32, #tpu.memory_space<vmem>>, vector<32x32xf32>
    %c0_39 = arith.constant 0 : index
    %c0_40 = arith.constant 0 : index
    %55 = vector.load %arg9[%c0_39, %c0_40] : memref<1x32xf32, #tpu.memory_space<vmem>>, vector<1x32xf32>
    %56 = vector.extract_strided_slice %35 {offsets = [0, 0], sizes = [8, 32], strides = [1, 1]} : vector<16x32xf32> to vector<8x32xf32>
    %57 = vector.extract_strided_slice %40 {offsets = [0, 0], sizes = [8, 32], strides = [1, 1]} : vector<16x32xf32> to vector<8x32xf32>
    %58 = vector.extract_strided_slice %48 {offsets = [0, 0], sizes = [8, 32], strides = [1, 1]} : vector<16x32xf32> to vector<8x32xf32>
    %59 = vector.extract_strided_slice %6 {offsets = [0, 0], sizes = [384, 32], strides = [1, 1]} : vector<768x32xf32> to vector<384x32xf32>
    %cst_41 = arith.constant 0.000000e+00 : f32
    %60 = vector.broadcast %cst_41 : f32 to vector<8x256xf32>
    %61 = vector.extract_strided_slice %56 {offsets = [0, 0], sizes = [8, 1], strides = [1, 1]} : vector<8x32xf32> to vector<8x1xf32>
    %62 = vector.broadcast %61 : vector<8x1xf32> to vector<8x256xf32>
    %63 = vector.broadcast %49 : vector<1x256xf32> to vector<8x256xf32>
    %64 = arith.subf %62, %63 : vector<8x256xf32>
    %65 = math.absf %64 : vector<8x256xf32>
    %cst_42 = arith.constant 1.000000e+00 : f32
    %66 = vector.broadcast %cst_42 : f32 to vector<8x256xf32>
    %67 = arith.subf %66, %65 : vector<8x256xf32>
    %cst_43 = arith.constant 0.000000e+00 : f32
    %68 = vector.broadcast %cst_43 : f32 to vector<8x256xf32>
    %69 = arith.maximumf %67, %68 : vector<8x256xf32>
    %70 = vector.extract_strided_slice %57 {offsets = [0, 0], sizes = [8, 1], strides = [1, 1]} : vector<8x32xf32> to vector<8x1xf32>
    %71 = vector.broadcast %70 : vector<8x1xf32> to vector<8x256xf32>
    %72 = vector.broadcast %51 : vector<1x256xf32> to vector<8x256xf32>
    %73 = arith.subf %71, %72 : vector<8x256xf32>
    %74 = math.absf %73 : vector<8x256xf32>
    %cst_44 = arith.constant 1.000000e+00 : f32
    %75 = vector.broadcast %cst_44 : f32 to vector<8x256xf32>
    %76 = arith.subf %75, %74 : vector<8x256xf32>
    %cst_45 = arith.constant 0.000000e+00 : f32
    %77 = vector.broadcast %cst_45 : f32 to vector<8x256xf32>
    %78 = arith.maximumf %76, %77 : vector<8x256xf32>
    %79 = vector.extract_strided_slice %58 {offsets = [0, 0], sizes = [8, 1], strides = [1, 1]} : vector<8x32xf32> to vector<8x1xf32>
    %80 = arith.mulf %69, %78 : vector<8x256xf32>
    %81 = vector.broadcast %79 : vector<8x1xf32> to vector<8x256xf32>
    %82 = arith.mulf %81, %80 : vector<8x256xf32>
    %83 = arith.addf %60, %82 : vector<8x256xf32>
    %84 = vector.extract_strided_slice %56 {offsets = [0, 1], sizes = [8, 1], strides = [1, 1]} : vector<8x32xf32> to vector<8x1xf32>
    %85 = vector.broadcast %84 : vector<8x1xf32> to vector<8x256xf32>
    %86 = vector.broadcast %49 : vector<1x256xf32> to vector<8x256xf32>
    %87 = arith.subf %85, %86 : vector<8x256xf32>
    %88 = math.absf %87 : vector<8x256xf32>
    %cst_46 = arith.constant 1.000000e+00 : f32
    %89 = vector.broadcast %cst_46 : f32 to vector<8x256xf32>
    %90 = arith.subf %89, %88 : vector<8x256xf32>
    %cst_47 = arith.constant 0.000000e+00 : f32
    %91 = vector.broadcast %cst_47 : f32 to vector<8x256xf32>
    %92 = arith.maximumf %90, %91 : vector<8x256xf32>
    %93 = vector.extract_strided_slice %57 {offsets = [0, 1], sizes = [8, 1], strides = [1, 1]} : vector<8x32xf32> to vector<8x1xf32>
    %94 = vector.broadcast %93 : vector<8x1xf32> to vector<8x256xf32>
    %95 = vector.broadcast %51 : vector<1x256xf32> to vector<8x256xf32>
    %96 = arith.subf %94, %95 : vector<8x256xf32>
    %97 = math.absf %96 : vector<8x256xf32>
    %cst_48 = arith.constant 1.000000e+00 : f32
    %98 = vector.broadcast %cst_48 : f32 to vector<8x256xf32>
    %99 = arith.subf %98, %97 : vector<8x256xf32>
    %cst_49 = arith.constant 0.000000e+00 : f32
    %100 = vector.broadcast %cst_49 : f32 to vector<8x256xf32>
    %101 = arith.maximumf %99, %100 : vector<8x256xf32>
    %102 = vector.extract_strided_slice %58 {offsets = [0, 1], sizes = [8, 1], strides = [1, 1]} : vector<8x32xf32> to vector<8x1xf32>
    %103 = arith.mulf %92, %101 : vector<8x256xf32>
    %104 = vector.broadcast %102 : vector<8x1xf32> to vector<8x256xf32>
    %105 = arith.mulf %104, %103 : vector<8x256xf32>
    %106 = arith.addf %83, %105 : vector<8x256xf32>
    %107 = vector.extract_strided_slice %56 {offsets = [0, 2], sizes = [8, 1], strides = [1, 1]} : vector<8x32xf32> to vector<8x1xf32>
    %108 = vector.broadcast %107 : vector<8x1xf32> to vector<8x256xf32>
    %109 = vector.broadcast %49 : vector<1x256xf32> to vector<8x256xf32>
    %110 = arith.subf %108, %109 : vector<8x256xf32>
    %111 = math.absf %110 : vector<8x256xf32>
    %cst_50 = arith.constant 1.000000e+00 : f32
    %112 = vector.broadcast %cst_50 : f32 to vector<8x256xf32>
    %113 = arith.subf %112, %111 : vector<8x256xf32>
    %cst_51 = arith.constant 0.000000e+00 : f32
    %114 = vector.broadcast %cst_51 : f32 to vector<8x256xf32>
    %115 = arith.maximumf %113, %114 : vector<8x256xf32>
    %116 = vector.extract_strided_slice %57 {offsets = [0, 2], sizes = [8, 1], strides = [1, 1]} : vector<8x32xf32> to vector<8x1xf32>
    %117 = vector.broadcast %116 : vector<8x1xf32> to vector<8x256xf32>
    %118 = vector.broadcast %51 : vector<1x256xf32> to vector<8x256xf32>
    %119 = arith.subf %117, %118 : vector<8x256xf32>
    %120 = math.absf %119 : vector<8x256xf32>
    %cst_52 = arith.constant 1.000000e+00 : f32
    %121 = vector.broadcast %cst_52 : f32 to vector<8x256xf32>
    %122 = arith.subf %121, %120 : vector<8x256xf32>
    %cst_53 = arith.constant 0.000000e+00 : f32
    %123 = vector.broadcast %cst_53 : f32 to vector<8x256xf32>
    %124 = arith.maximumf %122, %123 : vector<8x256xf32>
    %125 = vector.extract_strided_slice %58 {offsets = [0, 2], sizes = [8, 1], strides = [1, 1]} : vector<8x32xf32> to vector<8x1xf32>
    %126 = arith.mulf %115, %124 : vector<8x256xf32>
    %127 = vector.broadcast %125 : vector<8x1xf32> to vector<8x256xf32>
    %128 = arith.mulf %127, %126 : vector<8x256xf32>
    %129 = arith.addf %106, %128 : vector<8x256xf32>
    %130 = vector.extract_strided_slice %56 {offsets = [0, 3], sizes = [8, 1], strides = [1, 1]} : vector<8x32xf32> to vector<8x1xf32>
    %131 = vector.broadcast %130 : vector<8x1xf32> to vector<8x256xf32>
    %132 = vector.broadcast %49 : vector<1x256xf32> to vector<8x256xf32>
    %133 = arith.subf %131, %132 : vector<8x256xf32>
    %134 = math.absf %133 : vector<8x256xf32>
    %cst_54 = arith.constant 1.000000e+00 : f32
    %135 = vector.broadcast %cst_54 : f32 to vector<8x256xf32>
    %136 = arith.subf %135, %134 : vector<8x256xf32>
    %cst_55 = arith.constant 0.000000e+00 : f32
    %137 = vector.broadcast %cst_55 : f32 to vector<8x256xf32>
    %138 = arith.maximumf %136, %137 : vector<8x256xf32>
    %139 = vector.extract_strided_slice %57 {offsets = [0, 3], sizes = [8, 1], strides = [1, 1]} : vector<8x32xf32> to vector<8x1xf32>
    %140 = vector.broadcast %139 : vector<8x1xf32> to vector<8x256xf32>
    %141 = vector.broadcast %51 : vector<1x256xf32> to vector<8x256xf32>
    %142 = arith.subf %140, %141 : vector<8x256xf32>
    %143 = math.absf %142 : vector<8x256xf32>
    %cst_56 = arith.constant 1.000000e+00 : f32
    %144 = vector.broadcast %cst_56 : f32 to vector<8x256xf32>
    %145 = arith.subf %144, %143 : vector<8x256xf32>
    %cst_57 = arith.constant 0.000000e+00 : f32
    %146 = vector.broadcast %cst_57 : f32 to vector<8x256xf32>
    %147 = arith.maximumf %145, %146 : vector<8x256xf32>
    %148 = vector.extract_strided_slice %58 {offsets = [0, 3], sizes = [8, 1], strides = [1, 1]} : vector<8x32xf32> to vector<8x1xf32>
    %149 = arith.mulf %138, %147 : vector<8x256xf32>
    %150 = vector.broadcast %148 : vector<8x1xf32> to vector<8x256xf32>
    %151 = arith.mulf %150, %149 : vector<8x256xf32>
    %152 = arith.addf %129, %151 : vector<8x256xf32>
    %cst_58 = arith.constant 0.000000e+00 : f32
    %153 = vector.broadcast %cst_58 : f32 to vector<8x128xf32>
    %154 = vector.extract_strided_slice %56 {offsets = [0, 4], sizes = [8, 1], strides = [1, 1]} : vector<8x32xf32> to vector<8x1xf32>
    %155 = vector.broadcast %154 : vector<8x1xf32> to vector<8x128xf32>
    %156 = vector.broadcast %50 : vector<1x128xf32> to vector<8x128xf32>
    %157 = arith.subf %155, %156 : vector<8x128xf32>
    %158 = math.absf %157 : vector<8x128xf32>
    %cst_59 = arith.constant 1.000000e+00 : f32
    %159 = vector.broadcast %cst_59 : f32 to vector<8x128xf32>
    %160 = arith.subf %159, %158 : vector<8x128xf32>
    %cst_60 = arith.constant 0.000000e+00 : f32
    %161 = vector.broadcast %cst_60 : f32 to vector<8x128xf32>
    %162 = arith.maximumf %160, %161 : vector<8x128xf32>
    %163 = vector.extract_strided_slice %57 {offsets = [0, 4], sizes = [8, 1], strides = [1, 1]} : vector<8x32xf32> to vector<8x1xf32>
    %164 = vector.broadcast %163 : vector<8x1xf32> to vector<8x128xf32>
    %165 = vector.broadcast %52 : vector<1x128xf32> to vector<8x128xf32>
    %166 = arith.subf %164, %165 : vector<8x128xf32>
    %167 = math.absf %166 : vector<8x128xf32>
    %cst_61 = arith.constant 1.000000e+00 : f32
    %168 = vector.broadcast %cst_61 : f32 to vector<8x128xf32>
    %169 = arith.subf %168, %167 : vector<8x128xf32>
    %cst_62 = arith.constant 0.000000e+00 : f32
    %170 = vector.broadcast %cst_62 : f32 to vector<8x128xf32>
    %171 = arith.maximumf %169, %170 : vector<8x128xf32>
    %172 = vector.extract_strided_slice %58 {offsets = [0, 4], sizes = [8, 1], strides = [1, 1]} : vector<8x32xf32> to vector<8x1xf32>
    %173 = arith.mulf %162, %171 : vector<8x128xf32>
    %174 = vector.broadcast %172 : vector<8x1xf32> to vector<8x128xf32>
    %175 = arith.mulf %174, %173 : vector<8x128xf32>
    %176 = arith.addf %153, %175 : vector<8x128xf32>
    %177 = vector.extract_strided_slice %56 {offsets = [0, 5], sizes = [8, 1], strides = [1, 1]} : vector<8x32xf32> to vector<8x1xf32>
    %178 = vector.broadcast %177 : vector<8x1xf32> to vector<8x128xf32>
    %179 = vector.broadcast %50 : vector<1x128xf32> to vector<8x128xf32>
    %180 = arith.subf %178, %179 : vector<8x128xf32>
    %181 = math.absf %180 : vector<8x128xf32>
    %cst_63 = arith.constant 1.000000e+00 : f32
    %182 = vector.broadcast %cst_63 : f32 to vector<8x128xf32>
    %183 = arith.subf %182, %181 : vector<8x128xf32>
    %cst_64 = arith.constant 0.000000e+00 : f32
    %184 = vector.broadcast %cst_64 : f32 to vector<8x128xf32>
    %185 = arith.maximumf %183, %184 : vector<8x128xf32>
    %186 = vector.extract_strided_slice %57 {offsets = [0, 5], sizes = [8, 1], strides = [1, 1]} : vector<8x32xf32> to vector<8x1xf32>
    %187 = vector.broadcast %186 : vector<8x1xf32> to vector<8x128xf32>
    %188 = vector.broadcast %52 : vector<1x128xf32> to vector<8x128xf32>
    %189 = arith.subf %187, %188 : vector<8x128xf32>
    %190 = math.absf %189 : vector<8x128xf32>
    %cst_65 = arith.constant 1.000000e+00 : f32
    %191 = vector.broadcast %cst_65 : f32 to vector<8x128xf32>
    %192 = arith.subf %191, %190 : vector<8x128xf32>
    %cst_66 = arith.constant 0.000000e+00 : f32
    %193 = vector.broadcast %cst_66 : f32 to vector<8x128xf32>
    %194 = arith.maximumf %192, %193 : vector<8x128xf32>
    %195 = vector.extract_strided_slice %58 {offsets = [0, 5], sizes = [8, 1], strides = [1, 1]} : vector<8x32xf32> to vector<8x1xf32>
    %196 = arith.mulf %185, %194 : vector<8x128xf32>
    %197 = vector.broadcast %195 : vector<8x1xf32> to vector<8x128xf32>
    %198 = arith.mulf %197, %196 : vector<8x128xf32>
    %199 = arith.addf %176, %198 : vector<8x128xf32>
    %200 = vector.extract_strided_slice %56 {offsets = [0, 6], sizes = [8, 1], strides = [1, 1]} : vector<8x32xf32> to vector<8x1xf32>
    %201 = vector.broadcast %200 : vector<8x1xf32> to vector<8x128xf32>
    %202 = vector.broadcast %50 : vector<1x128xf32> to vector<8x128xf32>
    %203 = arith.subf %201, %202 : vector<8x128xf32>
    %204 = math.absf %203 : vector<8x128xf32>
    %cst_67 = arith.constant 1.000000e+00 : f32
    %205 = vector.broadcast %cst_67 : f32 to vector<8x128xf32>
    %206 = arith.subf %205, %204 : vector<8x128xf32>
    %cst_68 = arith.constant 0.000000e+00 : f32
    %207 = vector.broadcast %cst_68 : f32 to vector<8x128xf32>
    %208 = arith.maximumf %206, %207 : vector<8x128xf32>
    %209 = vector.extract_strided_slice %57 {offsets = [0, 6], sizes = [8, 1], strides = [1, 1]} : vector<8x32xf32> to vector<8x1xf32>
    %210 = vector.broadcast %209 : vector<8x1xf32> to vector<8x128xf32>
    %211 = vector.broadcast %52 : vector<1x128xf32> to vector<8x128xf32>
    %212 = arith.subf %210, %211 : vector<8x128xf32>
    %213 = math.absf %212 : vector<8x128xf32>
    %cst_69 = arith.constant 1.000000e+00 : f32
    %214 = vector.broadcast %cst_69 : f32 to vector<8x128xf32>
    %215 = arith.subf %214, %213 : vector<8x128xf32>
    %cst_70 = arith.constant 0.000000e+00 : f32
    %216 = vector.broadcast %cst_70 : f32 to vector<8x128xf32>
    %217 = arith.maximumf %215, %216 : vector<8x128xf32>
    %218 = vector.extract_strided_slice %58 {offsets = [0, 6], sizes = [8, 1], strides = [1, 1]} : vector<8x32xf32> to vector<8x1xf32>
    %219 = arith.mulf %208, %217 : vector<8x128xf32>
    %220 = vector.broadcast %218 : vector<8x1xf32> to vector<8x128xf32>
    %221 = arith.mulf %220, %219 : vector<8x128xf32>
    %222 = arith.addf %199, %221 : vector<8x128xf32>
    %223 = vector.extract_strided_slice %56 {offsets = [0, 7], sizes = [8, 1], strides = [1, 1]} : vector<8x32xf32> to vector<8x1xf32>
    %224 = vector.broadcast %223 : vector<8x1xf32> to vector<8x128xf32>
    %225 = vector.broadcast %50 : vector<1x128xf32> to vector<8x128xf32>
    %226 = arith.subf %224, %225 : vector<8x128xf32>
    %227 = math.absf %226 : vector<8x128xf32>
    %cst_71 = arith.constant 1.000000e+00 : f32
    %228 = vector.broadcast %cst_71 : f32 to vector<8x128xf32>
    %229 = arith.subf %228, %227 : vector<8x128xf32>
    %cst_72 = arith.constant 0.000000e+00 : f32
    %230 = vector.broadcast %cst_72 : f32 to vector<8x128xf32>
    %231 = arith.maximumf %229, %230 : vector<8x128xf32>
    %232 = vector.extract_strided_slice %57 {offsets = [0, 7], sizes = [8, 1], strides = [1, 1]} : vector<8x32xf32> to vector<8x1xf32>
    %233 = vector.broadcast %232 : vector<8x1xf32> to vector<8x128xf32>
    %234 = vector.broadcast %52 : vector<1x128xf32> to vector<8x128xf32>
    %235 = arith.subf %233, %234 : vector<8x128xf32>
    %236 = math.absf %235 : vector<8x128xf32>
    %cst_73 = arith.constant 1.000000e+00 : f32
    %237 = vector.broadcast %cst_73 : f32 to vector<8x128xf32>
    %238 = arith.subf %237, %236 : vector<8x128xf32>
    %cst_74 = arith.constant 0.000000e+00 : f32
    %239 = vector.broadcast %cst_74 : f32 to vector<8x128xf32>
    %240 = arith.maximumf %238, %239 : vector<8x128xf32>
    %241 = vector.extract_strided_slice %58 {offsets = [0, 7], sizes = [8, 1], strides = [1, 1]} : vector<8x32xf32> to vector<8x1xf32>
    %242 = arith.mulf %231, %240 : vector<8x128xf32>
    %243 = vector.broadcast %241 : vector<8x1xf32> to vector<8x128xf32>
    %244 = arith.mulf %243, %242 : vector<8x128xf32>
    %245 = arith.addf %222, %244 : vector<8x128xf32>
    %246 = tpu.concatenate %152, %245 in 1 : vector<8x256xf32>, vector<8x128xf32> -> vector<8x384xf32>
    %cst_75 = arith.constant 0.000000e+00 : f32
    %247 = vector.broadcast %cst_75 : f32 to vector<8x256xf32>
    %248 = vector.extract_strided_slice %56 {offsets = [0, 8], sizes = [8, 1], strides = [1, 1]} : vector<8x32xf32> to vector<8x1xf32>
    %249 = vector.broadcast %248 : vector<8x1xf32> to vector<8x256xf32>
    %250 = vector.broadcast %49 : vector<1x256xf32> to vector<8x256xf32>
    %251 = arith.subf %249, %250 : vector<8x256xf32>
    %252 = math.absf %251 : vector<8x256xf32>
    %cst_76 = arith.constant 1.000000e+00 : f32
    %253 = vector.broadcast %cst_76 : f32 to vector<8x256xf32>
    %254 = arith.subf %253, %252 : vector<8x256xf32>
    %cst_77 = arith.constant 0.000000e+00 : f32
    %255 = vector.broadcast %cst_77 : f32 to vector<8x256xf32>
    %256 = arith.maximumf %254, %255 : vector<8x256xf32>
    %257 = vector.extract_strided_slice %57 {offsets = [0, 8], sizes = [8, 1], strides = [1, 1]} : vector<8x32xf32> to vector<8x1xf32>
    %258 = vector.broadcast %257 : vector<8x1xf32> to vector<8x256xf32>
    %259 = vector.broadcast %51 : vector<1x256xf32> to vector<8x256xf32>
    %260 = arith.subf %258, %259 : vector<8x256xf32>
    %261 = math.absf %260 : vector<8x256xf32>
    %cst_78 = arith.constant 1.000000e+00 : f32
    %262 = vector.broadcast %cst_78 : f32 to vector<8x256xf32>
    %263 = arith.subf %262, %261 : vector<8x256xf32>
    %cst_79 = arith.constant 0.000000e+00 : f32
    %264 = vector.broadcast %cst_79 : f32 to vector<8x256xf32>
    %265 = arith.maximumf %263, %264 : vector<8x256xf32>
    %266 = vector.extract_strided_slice %58 {offsets = [0, 8], sizes = [8, 1], strides = [1, 1]} : vector<8x32xf32> to vector<8x1xf32>
    %267 = arith.mulf %256, %265 : vector<8x256xf32>
    %268 = vector.broadcast %266 : vector<8x1xf32> to vector<8x256xf32>
    %269 = arith.mulf %268, %267 : vector<8x256xf32>
    %270 = arith.addf %247, %269 : vector<8x256xf32>
    %271 = vector.extract_strided_slice %56 {offsets = [0, 9], sizes = [8, 1], strides = [1, 1]} : vector<8x32xf32> to vector<8x1xf32>
    %272 = vector.broadcast %271 : vector<8x1xf32> to vector<8x256xf32>
    %273 = vector.broadcast %49 : vector<1x256xf32> to vector<8x256xf32>
    %274 = arith.subf %272, %273 : vector<8x256xf32>
    %275 = math.absf %274 : vector<8x256xf32>
    %cst_80 = arith.constant 1.000000e+00 : f32
    %276 = vector.broadcast %cst_80 : f32 to vector<8x256xf32>
    %277 = arith.subf %276, %275 : vector<8x256xf32>
    %cst_81 = arith.constant 0.000000e+00 : f32
    %278 = vector.broadcast %cst_81 : f32 to vector<8x256xf32>
    %279 = arith.maximumf %277, %278 : vector<8x256xf32>
    %280 = vector.extract_strided_slice %57 {offsets = [0, 9], sizes = [8, 1], strides = [1, 1]} : vector<8x32xf32> to vector<8x1xf32>
    %281 = vector.broadcast %280 : vector<8x1xf32> to vector<8x256xf32>
    %282 = vector.broadcast %51 : vector<1x256xf32> to vector<8x256xf32>
    %283 = arith.subf %281, %282 : vector<8x256xf32>
    %284 = math.absf %283 : vector<8x256xf32>
    %cst_82 = arith.constant 1.000000e+00 : f32
    %285 = vector.broadcast %cst_82 : f32 to vector<8x256xf32>
    %286 = arith.subf %285, %284 : vector<8x256xf32>
    %cst_83 = arith.constant 0.000000e+00 : f32
    %287 = vector.broadcast %cst_83 : f32 to vector<8x256xf32>
    %288 = arith.maximumf %286, %287 : vector<8x256xf32>
    %289 = vector.extract_strided_slice %58 {offsets = [0, 9], sizes = [8, 1], strides = [1, 1]} : vector<8x32xf32> to vector<8x1xf32>
    %290 = arith.mulf %279, %288 : vector<8x256xf32>
    %291 = vector.broadcast %289 : vector<8x1xf32> to vector<8x256xf32>
    %292 = arith.mulf %291, %290 : vector<8x256xf32>
    %293 = arith.addf %270, %292 : vector<8x256xf32>
    %294 = vector.extract_strided_slice %56 {offsets = [0, 10], sizes = [8, 1], strides = [1, 1]} : vector<8x32xf32> to vector<8x1xf32>
    %295 = vector.broadcast %294 : vector<8x1xf32> to vector<8x256xf32>
    %296 = vector.broadcast %49 : vector<1x256xf32> to vector<8x256xf32>
    %297 = arith.subf %295, %296 : vector<8x256xf32>
    %298 = math.absf %297 : vector<8x256xf32>
    %cst_84 = arith.constant 1.000000e+00 : f32
    %299 = vector.broadcast %cst_84 : f32 to vector<8x256xf32>
    %300 = arith.subf %299, %298 : vector<8x256xf32>
    %cst_85 = arith.constant 0.000000e+00 : f32
    %301 = vector.broadcast %cst_85 : f32 to vector<8x256xf32>
    %302 = arith.maximumf %300, %301 : vector<8x256xf32>
    %303 = vector.extract_strided_slice %57 {offsets = [0, 10], sizes = [8, 1], strides = [1, 1]} : vector<8x32xf32> to vector<8x1xf32>
    %304 = vector.broadcast %303 : vector<8x1xf32> to vector<8x256xf32>
    %305 = vector.broadcast %51 : vector<1x256xf32> to vector<8x256xf32>
    %306 = arith.subf %304, %305 : vector<8x256xf32>
    %307 = math.absf %306 : vector<8x256xf32>
    %cst_86 = arith.constant 1.000000e+00 : f32
    %308 = vector.broadcast %cst_86 : f32 to vector<8x256xf32>
    %309 = arith.subf %308, %307 : vector<8x256xf32>
    %cst_87 = arith.constant 0.000000e+00 : f32
    %310 = vector.broadcast %cst_87 : f32 to vector<8x256xf32>
    %311 = arith.maximumf %309, %310 : vector<8x256xf32>
    %312 = vector.extract_strided_slice %58 {offsets = [0, 10], sizes = [8, 1], strides = [1, 1]} : vector<8x32xf32> to vector<8x1xf32>
    %313 = arith.mulf %302, %311 : vector<8x256xf32>
    %314 = vector.broadcast %312 : vector<8x1xf32> to vector<8x256xf32>
    %315 = arith.mulf %314, %313 : vector<8x256xf32>
    %316 = arith.addf %293, %315 : vector<8x256xf32>
    %317 = vector.extract_strided_slice %56 {offsets = [0, 11], sizes = [8, 1], strides = [1, 1]} : vector<8x32xf32> to vector<8x1xf32>
    %318 = vector.broadcast %317 : vector<8x1xf32> to vector<8x256xf32>
    %319 = vector.broadcast %49 : vector<1x256xf32> to vector<8x256xf32>
    %320 = arith.subf %318, %319 : vector<8x256xf32>
    %321 = math.absf %320 : vector<8x256xf32>
    %cst_88 = arith.constant 1.000000e+00 : f32
    %322 = vector.broadcast %cst_88 : f32 to vector<8x256xf32>
    %323 = arith.subf %322, %321 : vector<8x256xf32>
    %cst_89 = arith.constant 0.000000e+00 : f32
    %324 = vector.broadcast %cst_89 : f32 to vector<8x256xf32>
    %325 = arith.maximumf %323, %324 : vector<8x256xf32>
    %326 = vector.extract_strided_slice %57 {offsets = [0, 11], sizes = [8, 1], strides = [1, 1]} : vector<8x32xf32> to vector<8x1xf32>
    %327 = vector.broadcast %326 : vector<8x1xf32> to vector<8x256xf32>
    %328 = vector.broadcast %51 : vector<1x256xf32> to vector<8x256xf32>
    %329 = arith.subf %327, %328 : vector<8x256xf32>
    %330 = math.absf %329 : vector<8x256xf32>
    %cst_90 = arith.constant 1.000000e+00 : f32
    %331 = vector.broadcast %cst_90 : f32 to vector<8x256xf32>
    %332 = arith.subf %331, %330 : vector<8x256xf32>
    %cst_91 = arith.constant 0.000000e+00 : f32
    %333 = vector.broadcast %cst_91 : f32 to vector<8x256xf32>
    %334 = arith.maximumf %332, %333 : vector<8x256xf32>
    %335 = vector.extract_strided_slice %58 {offsets = [0, 11], sizes = [8, 1], strides = [1, 1]} : vector<8x32xf32> to vector<8x1xf32>
    %336 = arith.mulf %325, %334 : vector<8x256xf32>
    %337 = vector.broadcast %335 : vector<8x1xf32> to vector<8x256xf32>
    %338 = arith.mulf %337, %336 : vector<8x256xf32>
    %339 = arith.addf %316, %338 : vector<8x256xf32>
    %cst_92 = arith.constant 0.000000e+00 : f32
    %340 = vector.broadcast %cst_92 : f32 to vector<8x128xf32>
    %341 = vector.extract_strided_slice %56 {offsets = [0, 12], sizes = [8, 1], strides = [1, 1]} : vector<8x32xf32> to vector<8x1xf32>
    %342 = vector.broadcast %341 : vector<8x1xf32> to vector<8x128xf32>
    %343 = vector.broadcast %50 : vector<1x128xf32> to vector<8x128xf32>
    %344 = arith.subf %342, %343 : vector<8x128xf32>
    %345 = math.absf %344 : vector<8x128xf32>
    %cst_93 = arith.constant 1.000000e+00 : f32
    %346 = vector.broadcast %cst_93 : f32 to vector<8x128xf32>
    %347 = arith.subf %346, %345 : vector<8x128xf32>
    %cst_94 = arith.constant 0.000000e+00 : f32
    %348 = vector.broadcast %cst_94 : f32 to vector<8x128xf32>
    %349 = arith.maximumf %347, %348 : vector<8x128xf32>
    %350 = vector.extract_strided_slice %57 {offsets = [0, 12], sizes = [8, 1], strides = [1, 1]} : vector<8x32xf32> to vector<8x1xf32>
    %351 = vector.broadcast %350 : vector<8x1xf32> to vector<8x128xf32>
    %352 = vector.broadcast %52 : vector<1x128xf32> to vector<8x128xf32>
    %353 = arith.subf %351, %352 : vector<8x128xf32>
    %354 = math.absf %353 : vector<8x128xf32>
    %cst_95 = arith.constant 1.000000e+00 : f32
    %355 = vector.broadcast %cst_95 : f32 to vector<8x128xf32>
    %356 = arith.subf %355, %354 : vector<8x128xf32>
    %cst_96 = arith.constant 0.000000e+00 : f32
    %357 = vector.broadcast %cst_96 : f32 to vector<8x128xf32>
    %358 = arith.maximumf %356, %357 : vector<8x128xf32>
    %359 = vector.extract_strided_slice %58 {offsets = [0, 12], sizes = [8, 1], strides = [1, 1]} : vector<8x32xf32> to vector<8x1xf32>
    %360 = arith.mulf %349, %358 : vector<8x128xf32>
    %361 = vector.broadcast %359 : vector<8x1xf32> to vector<8x128xf32>
    %362 = arith.mulf %361, %360 : vector<8x128xf32>
    %363 = arith.addf %340, %362 : vector<8x128xf32>
    %364 = vector.extract_strided_slice %56 {offsets = [0, 13], sizes = [8, 1], strides = [1, 1]} : vector<8x32xf32> to vector<8x1xf32>
    %365 = vector.broadcast %364 : vector<8x1xf32> to vector<8x128xf32>
    %366 = vector.broadcast %50 : vector<1x128xf32> to vector<8x128xf32>
    %367 = arith.subf %365, %366 : vector<8x128xf32>
    %368 = math.absf %367 : vector<8x128xf32>
    %cst_97 = arith.constant 1.000000e+00 : f32
    %369 = vector.broadcast %cst_97 : f32 to vector<8x128xf32>
    %370 = arith.subf %369, %368 : vector<8x128xf32>
    %cst_98 = arith.constant 0.000000e+00 : f32
    %371 = vector.broadcast %cst_98 : f32 to vector<8x128xf32>
    %372 = arith.maximumf %370, %371 : vector<8x128xf32>
    %373 = vector.extract_strided_slice %57 {offsets = [0, 13], sizes = [8, 1], strides = [1, 1]} : vector<8x32xf32> to vector<8x1xf32>
    %374 = vector.broadcast %373 : vector<8x1xf32> to vector<8x128xf32>
    %375 = vector.broadcast %52 : vector<1x128xf32> to vector<8x128xf32>
    %376 = arith.subf %374, %375 : vector<8x128xf32>
    %377 = math.absf %376 : vector<8x128xf32>
    %cst_99 = arith.constant 1.000000e+00 : f32
    %378 = vector.broadcast %cst_99 : f32 to vector<8x128xf32>
    %379 = arith.subf %378, %377 : vector<8x128xf32>
    %cst_100 = arith.constant 0.000000e+00 : f32
    %380 = vector.broadcast %cst_100 : f32 to vector<8x128xf32>
    %381 = arith.maximumf %379, %380 : vector<8x128xf32>
    %382 = vector.extract_strided_slice %58 {offsets = [0, 13], sizes = [8, 1], strides = [1, 1]} : vector<8x32xf32> to vector<8x1xf32>
    %383 = arith.mulf %372, %381 : vector<8x128xf32>
    %384 = vector.broadcast %382 : vector<8x1xf32> to vector<8x128xf32>
    %385 = arith.mulf %384, %383 : vector<8x128xf32>
    %386 = arith.addf %363, %385 : vector<8x128xf32>
    %387 = vector.extract_strided_slice %56 {offsets = [0, 14], sizes = [8, 1], strides = [1, 1]} : vector<8x32xf32> to vector<8x1xf32>
    %388 = vector.broadcast %387 : vector<8x1xf32> to vector<8x128xf32>
    %389 = vector.broadcast %50 : vector<1x128xf32> to vector<8x128xf32>
    %390 = arith.subf %388, %389 : vector<8x128xf32>
    %391 = math.absf %390 : vector<8x128xf32>
    %cst_101 = arith.constant 1.000000e+00 : f32
    %392 = vector.broadcast %cst_101 : f32 to vector<8x128xf32>
    %393 = arith.subf %392, %391 : vector<8x128xf32>
    %cst_102 = arith.constant 0.000000e+00 : f32
    %394 = vector.broadcast %cst_102 : f32 to vector<8x128xf32>
    %395 = arith.maximumf %393, %394 : vector<8x128xf32>
    %396 = vector.extract_strided_slice %57 {offsets = [0, 14], sizes = [8, 1], strides = [1, 1]} : vector<8x32xf32> to vector<8x1xf32>
    %397 = vector.broadcast %396 : vector<8x1xf32> to vector<8x128xf32>
    %398 = vector.broadcast %52 : vector<1x128xf32> to vector<8x128xf32>
    %399 = arith.subf %397, %398 : vector<8x128xf32>
    %400 = math.absf %399 : vector<8x128xf32>
    %cst_103 = arith.constant 1.000000e+00 : f32
    %401 = vector.broadcast %cst_103 : f32 to vector<8x128xf32>
    %402 = arith.subf %401, %400 : vector<8x128xf32>
    %cst_104 = arith.constant 0.000000e+00 : f32
    %403 = vector.broadcast %cst_104 : f32 to vector<8x128xf32>
    %404 = arith.maximumf %402, %403 : vector<8x128xf32>
    %405 = vector.extract_strided_slice %58 {offsets = [0, 14], sizes = [8, 1], strides = [1, 1]} : vector<8x32xf32> to vector<8x1xf32>
    %406 = arith.mulf %395, %404 : vector<8x128xf32>
    %407 = vector.broadcast %405 : vector<8x1xf32> to vector<8x128xf32>
    %408 = arith.mulf %407, %406 : vector<8x128xf32>
    %409 = arith.addf %386, %408 : vector<8x128xf32>
    %410 = vector.extract_strided_slice %56 {offsets = [0, 15], sizes = [8, 1], strides = [1, 1]} : vector<8x32xf32> to vector<8x1xf32>
    %411 = vector.broadcast %410 : vector<8x1xf32> to vector<8x128xf32>
    %412 = vector.broadcast %50 : vector<1x128xf32> to vector<8x128xf32>
    %413 = arith.subf %411, %412 : vector<8x128xf32>
    %414 = math.absf %413 : vector<8x128xf32>
    %cst_105 = arith.constant 1.000000e+00 : f32
    %415 = vector.broadcast %cst_105 : f32 to vector<8x128xf32>
    %416 = arith.subf %415, %414 : vector<8x128xf32>
    %cst_106 = arith.constant 0.000000e+00 : f32
    %417 = vector.broadcast %cst_106 : f32 to vector<8x128xf32>
    %418 = arith.maximumf %416, %417 : vector<8x128xf32>
    %419 = vector.extract_strided_slice %57 {offsets = [0, 15], sizes = [8, 1], strides = [1, 1]} : vector<8x32xf32> to vector<8x1xf32>
    %420 = vector.broadcast %419 : vector<8x1xf32> to vector<8x128xf32>
    %421 = vector.broadcast %52 : vector<1x128xf32> to vector<8x128xf32>
    %422 = arith.subf %420, %421 : vector<8x128xf32>
    %423 = math.absf %422 : vector<8x128xf32>
    %cst_107 = arith.constant 1.000000e+00 : f32
    %424 = vector.broadcast %cst_107 : f32 to vector<8x128xf32>
    %425 = arith.subf %424, %423 : vector<8x128xf32>
    %cst_108 = arith.constant 0.000000e+00 : f32
    %426 = vector.broadcast %cst_108 : f32 to vector<8x128xf32>
    %427 = arith.maximumf %425, %426 : vector<8x128xf32>
    %428 = vector.extract_strided_slice %58 {offsets = [0, 15], sizes = [8, 1], strides = [1, 1]} : vector<8x32xf32> to vector<8x1xf32>
    %429 = arith.mulf %418, %427 : vector<8x128xf32>
    %430 = vector.broadcast %428 : vector<8x1xf32> to vector<8x128xf32>
    %431 = arith.mulf %430, %429 : vector<8x128xf32>
    %432 = arith.addf %409, %431 : vector<8x128xf32>
    %433 = tpu.concatenate %339, %432 in 1 : vector<8x256xf32>, vector<8x128xf32> -> vector<8x384xf32>
    %cst_109 = arith.constant 0.000000e+00 : f32
    %434 = vector.broadcast %cst_109 : f32 to vector<8x256xf32>
    %435 = vector.extract_strided_slice %56 {offsets = [0, 16], sizes = [8, 1], strides = [1, 1]} : vector<8x32xf32> to vector<8x1xf32>
    %436 = vector.broadcast %435 : vector<8x1xf32> to vector<8x256xf32>
    %437 = vector.broadcast %49 : vector<1x256xf32> to vector<8x256xf32>
    %438 = arith.subf %436, %437 : vector<8x256xf32>
    %439 = math.absf %438 : vector<8x256xf32>
    %cst_110 = arith.constant 1.000000e+00 : f32
    %440 = vector.broadcast %cst_110 : f32 to vector<8x256xf32>
    %441 = arith.subf %440, %439 : vector<8x256xf32>
    %cst_111 = arith.constant 0.000000e+00 : f32
    %442 = vector.broadcast %cst_111 : f32 to vector<8x256xf32>
    %443 = arith.maximumf %441, %442 : vector<8x256xf32>
    %444 = vector.extract_strided_slice %57 {offsets = [0, 16], sizes = [8, 1], strides = [1, 1]} : vector<8x32xf32> to vector<8x1xf32>
    %445 = vector.broadcast %444 : vector<8x1xf32> to vector<8x256xf32>
    %446 = vector.broadcast %51 : vector<1x256xf32> to vector<8x256xf32>
    %447 = arith.subf %445, %446 : vector<8x256xf32>
    %448 = math.absf %447 : vector<8x256xf32>
    %cst_112 = arith.constant 1.000000e+00 : f32
    %449 = vector.broadcast %cst_112 : f32 to vector<8x256xf32>
    %450 = arith.subf %449, %448 : vector<8x256xf32>
    %cst_113 = arith.constant 0.000000e+00 : f32
    %451 = vector.broadcast %cst_113 : f32 to vector<8x256xf32>
    %452 = arith.maximumf %450, %451 : vector<8x256xf32>
    %453 = vector.extract_strided_slice %58 {offsets = [0, 16], sizes = [8, 1], strides = [1, 1]} : vector<8x32xf32> to vector<8x1xf32>
    %454 = arith.mulf %443, %452 : vector<8x256xf32>
    %455 = vector.broadcast %453 : vector<8x1xf32> to vector<8x256xf32>
    %456 = arith.mulf %455, %454 : vector<8x256xf32>
    %457 = arith.addf %434, %456 : vector<8x256xf32>
    %458 = vector.extract_strided_slice %56 {offsets = [0, 17], sizes = [8, 1], strides = [1, 1]} : vector<8x32xf32> to vector<8x1xf32>
    %459 = vector.broadcast %458 : vector<8x1xf32> to vector<8x256xf32>
    %460 = vector.broadcast %49 : vector<1x256xf32> to vector<8x256xf32>
    %461 = arith.subf %459, %460 : vector<8x256xf32>
    %462 = math.absf %461 : vector<8x256xf32>
    %cst_114 = arith.constant 1.000000e+00 : f32
    %463 = vector.broadcast %cst_114 : f32 to vector<8x256xf32>
    %464 = arith.subf %463, %462 : vector<8x256xf32>
    %cst_115 = arith.constant 0.000000e+00 : f32
    %465 = vector.broadcast %cst_115 : f32 to vector<8x256xf32>
    %466 = arith.maximumf %464, %465 : vector<8x256xf32>
    %467 = vector.extract_strided_slice %57 {offsets = [0, 17], sizes = [8, 1], strides = [1, 1]} : vector<8x32xf32> to vector<8x1xf32>
    %468 = vector.broadcast %467 : vector<8x1xf32> to vector<8x256xf32>
    %469 = vector.broadcast %51 : vector<1x256xf32> to vector<8x256xf32>
    %470 = arith.subf %468, %469 : vector<8x256xf32>
    %471 = math.absf %470 : vector<8x256xf32>
    %cst_116 = arith.constant 1.000000e+00 : f32
    %472 = vector.broadcast %cst_116 : f32 to vector<8x256xf32>
    %473 = arith.subf %472, %471 : vector<8x256xf32>
    %cst_117 = arith.constant 0.000000e+00 : f32
    %474 = vector.broadcast %cst_117 : f32 to vector<8x256xf32>
    %475 = arith.maximumf %473, %474 : vector<8x256xf32>
    %476 = vector.extract_strided_slice %58 {offsets = [0, 17], sizes = [8, 1], strides = [1, 1]} : vector<8x32xf32> to vector<8x1xf32>
    %477 = arith.mulf %466, %475 : vector<8x256xf32>
    %478 = vector.broadcast %476 : vector<8x1xf32> to vector<8x256xf32>
    %479 = arith.mulf %478, %477 : vector<8x256xf32>
    %480 = arith.addf %457, %479 : vector<8x256xf32>
    %481 = vector.extract_strided_slice %56 {offsets = [0, 18], sizes = [8, 1], strides = [1, 1]} : vector<8x32xf32> to vector<8x1xf32>
    %482 = vector.broadcast %481 : vector<8x1xf32> to vector<8x256xf32>
    %483 = vector.broadcast %49 : vector<1x256xf32> to vector<8x256xf32>
    %484 = arith.subf %482, %483 : vector<8x256xf32>
    %485 = math.absf %484 : vector<8x256xf32>
    %cst_118 = arith.constant 1.000000e+00 : f32
    %486 = vector.broadcast %cst_118 : f32 to vector<8x256xf32>
    %487 = arith.subf %486, %485 : vector<8x256xf32>
    %cst_119 = arith.constant 0.000000e+00 : f32
    %488 = vector.broadcast %cst_119 : f32 to vector<8x256xf32>
    %489 = arith.maximumf %487, %488 : vector<8x256xf32>
    %490 = vector.extract_strided_slice %57 {offsets = [0, 18], sizes = [8, 1], strides = [1, 1]} : vector<8x32xf32> to vector<8x1xf32>
    %491 = vector.broadcast %490 : vector<8x1xf32> to vector<8x256xf32>
    %492 = vector.broadcast %51 : vector<1x256xf32> to vector<8x256xf32>
    %493 = arith.subf %491, %492 : vector<8x256xf32>
    %494 = math.absf %493 : vector<8x256xf32>
    %cst_120 = arith.constant 1.000000e+00 : f32
    %495 = vector.broadcast %cst_120 : f32 to vector<8x256xf32>
    %496 = arith.subf %495, %494 : vector<8x256xf32>
    %cst_121 = arith.constant 0.000000e+00 : f32
    %497 = vector.broadcast %cst_121 : f32 to vector<8x256xf32>
    %498 = arith.maximumf %496, %497 : vector<8x256xf32>
    %499 = vector.extract_strided_slice %58 {offsets = [0, 18], sizes = [8, 1], strides = [1, 1]} : vector<8x32xf32> to vector<8x1xf32>
    %500 = arith.mulf %489, %498 : vector<8x256xf32>
    %501 = vector.broadcast %499 : vector<8x1xf32> to vector<8x256xf32>
    %502 = arith.mulf %501, %500 : vector<8x256xf32>
    %503 = arith.addf %480, %502 : vector<8x256xf32>
    %504 = vector.extract_strided_slice %56 {offsets = [0, 19], sizes = [8, 1], strides = [1, 1]} : vector<8x32xf32> to vector<8x1xf32>
    %505 = vector.broadcast %504 : vector<8x1xf32> to vector<8x256xf32>
    %506 = vector.broadcast %49 : vector<1x256xf32> to vector<8x256xf32>
    %507 = arith.subf %505, %506 : vector<8x256xf32>
    %508 = math.absf %507 : vector<8x256xf32>
    %cst_122 = arith.constant 1.000000e+00 : f32
    %509 = vector.broadcast %cst_122 : f32 to vector<8x256xf32>
    %510 = arith.subf %509, %508 : vector<8x256xf32>
    %cst_123 = arith.constant 0.000000e+00 : f32
    %511 = vector.broadcast %cst_123 : f32 to vector<8x256xf32>
    %512 = arith.maximumf %510, %511 : vector<8x256xf32>
    %513 = vector.extract_strided_slice %57 {offsets = [0, 19], sizes = [8, 1], strides = [1, 1]} : vector<8x32xf32> to vector<8x1xf32>
    %514 = vector.broadcast %513 : vector<8x1xf32> to vector<8x256xf32>
    %515 = vector.broadcast %51 : vector<1x256xf32> to vector<8x256xf32>
    %516 = arith.subf %514, %515 : vector<8x256xf32>
    %517 = math.absf %516 : vector<8x256xf32>
    %cst_124 = arith.constant 1.000000e+00 : f32
    %518 = vector.broadcast %cst_124 : f32 to vector<8x256xf32>
    %519 = arith.subf %518, %517 : vector<8x256xf32>
    %cst_125 = arith.constant 0.000000e+00 : f32
    %520 = vector.broadcast %cst_125 : f32 to vector<8x256xf32>
    %521 = arith.maximumf %519, %520 : vector<8x256xf32>
    %522 = vector.extract_strided_slice %58 {offsets = [0, 19], sizes = [8, 1], strides = [1, 1]} : vector<8x32xf32> to vector<8x1xf32>
    %523 = arith.mulf %512, %521 : vector<8x256xf32>
    %524 = vector.broadcast %522 : vector<8x1xf32> to vector<8x256xf32>
    %525 = arith.mulf %524, %523 : vector<8x256xf32>
    %526 = arith.addf %503, %525 : vector<8x256xf32>
    %cst_126 = arith.constant 0.000000e+00 : f32
    %527 = vector.broadcast %cst_126 : f32 to vector<8x128xf32>
    %528 = vector.extract_strided_slice %56 {offsets = [0, 20], sizes = [8, 1], strides = [1, 1]} : vector<8x32xf32> to vector<8x1xf32>
    %529 = vector.broadcast %528 : vector<8x1xf32> to vector<8x128xf32>
    %530 = vector.broadcast %50 : vector<1x128xf32> to vector<8x128xf32>
    %531 = arith.subf %529, %530 : vector<8x128xf32>
    %532 = math.absf %531 : vector<8x128xf32>
    %cst_127 = arith.constant 1.000000e+00 : f32
    %533 = vector.broadcast %cst_127 : f32 to vector<8x128xf32>
    %534 = arith.subf %533, %532 : vector<8x128xf32>
    %cst_128 = arith.constant 0.000000e+00 : f32
    %535 = vector.broadcast %cst_128 : f32 to vector<8x128xf32>
    %536 = arith.maximumf %534, %535 : vector<8x128xf32>
    %537 = vector.extract_strided_slice %57 {offsets = [0, 20], sizes = [8, 1], strides = [1, 1]} : vector<8x32xf32> to vector<8x1xf32>
    %538 = vector.broadcast %537 : vector<8x1xf32> to vector<8x128xf32>
    %539 = vector.broadcast %52 : vector<1x128xf32> to vector<8x128xf32>
    %540 = arith.subf %538, %539 : vector<8x128xf32>
    %541 = math.absf %540 : vector<8x128xf32>
    %cst_129 = arith.constant 1.000000e+00 : f32
    %542 = vector.broadcast %cst_129 : f32 to vector<8x128xf32>
    %543 = arith.subf %542, %541 : vector<8x128xf32>
    %cst_130 = arith.constant 0.000000e+00 : f32
    %544 = vector.broadcast %cst_130 : f32 to vector<8x128xf32>
    %545 = arith.maximumf %543, %544 : vector<8x128xf32>
    %546 = vector.extract_strided_slice %58 {offsets = [0, 20], sizes = [8, 1], strides = [1, 1]} : vector<8x32xf32> to vector<8x1xf32>
    %547 = arith.mulf %536, %545 : vector<8x128xf32>
    %548 = vector.broadcast %546 : vector<8x1xf32> to vector<8x128xf32>
    %549 = arith.mulf %548, %547 : vector<8x128xf32>
    %550 = arith.addf %527, %549 : vector<8x128xf32>
    %551 = vector.extract_strided_slice %56 {offsets = [0, 21], sizes = [8, 1], strides = [1, 1]} : vector<8x32xf32> to vector<8x1xf32>
    %552 = vector.broadcast %551 : vector<8x1xf32> to vector<8x128xf32>
    %553 = vector.broadcast %50 : vector<1x128xf32> to vector<8x128xf32>
    %554 = arith.subf %552, %553 : vector<8x128xf32>
    %555 = math.absf %554 : vector<8x128xf32>
    %cst_131 = arith.constant 1.000000e+00 : f32
    %556 = vector.broadcast %cst_131 : f32 to vector<8x128xf32>
    %557 = arith.subf %556, %555 : vector<8x128xf32>
    %cst_132 = arith.constant 0.000000e+00 : f32
    %558 = vector.broadcast %cst_132 : f32 to vector<8x128xf32>
    %559 = arith.maximumf %557, %558 : vector<8x128xf32>
    %560 = vector.extract_strided_slice %57 {offsets = [0, 21], sizes = [8, 1], strides = [1, 1]} : vector<8x32xf32> to vector<8x1xf32>
    %561 = vector.broadcast %560 : vector<8x1xf32> to vector<8x128xf32>
    %562 = vector.broadcast %52 : vector<1x128xf32> to vector<8x128xf32>
    %563 = arith.subf %561, %562 : vector<8x128xf32>
    %564 = math.absf %563 : vector<8x128xf32>
    %cst_133 = arith.constant 1.000000e+00 : f32
    %565 = vector.broadcast %cst_133 : f32 to vector<8x128xf32>
    %566 = arith.subf %565, %564 : vector<8x128xf32>
    %cst_134 = arith.constant 0.000000e+00 : f32
    %567 = vector.broadcast %cst_134 : f32 to vector<8x128xf32>
    %568 = arith.maximumf %566, %567 : vector<8x128xf32>
    %569 = vector.extract_strided_slice %58 {offsets = [0, 21], sizes = [8, 1], strides = [1, 1]} : vector<8x32xf32> to vector<8x1xf32>
    %570 = arith.mulf %559, %568 : vector<8x128xf32>
    %571 = vector.broadcast %569 : vector<8x1xf32> to vector<8x128xf32>
    %572 = arith.mulf %571, %570 : vector<8x128xf32>
    %573 = arith.addf %550, %572 : vector<8x128xf32>
    %574 = vector.extract_strided_slice %56 {offsets = [0, 22], sizes = [8, 1], strides = [1, 1]} : vector<8x32xf32> to vector<8x1xf32>
    %575 = vector.broadcast %574 : vector<8x1xf32> to vector<8x128xf32>
    %576 = vector.broadcast %50 : vector<1x128xf32> to vector<8x128xf32>
    %577 = arith.subf %575, %576 : vector<8x128xf32>
    %578 = math.absf %577 : vector<8x128xf32>
    %cst_135 = arith.constant 1.000000e+00 : f32
    %579 = vector.broadcast %cst_135 : f32 to vector<8x128xf32>
    %580 = arith.subf %579, %578 : vector<8x128xf32>
    %cst_136 = arith.constant 0.000000e+00 : f32
    %581 = vector.broadcast %cst_136 : f32 to vector<8x128xf32>
    %582 = arith.maximumf %580, %581 : vector<8x128xf32>
    %583 = vector.extract_strided_slice %57 {offsets = [0, 22], sizes = [8, 1], strides = [1, 1]} : vector<8x32xf32> to vector<8x1xf32>
    %584 = vector.broadcast %583 : vector<8x1xf32> to vector<8x128xf32>
    %585 = vector.broadcast %52 : vector<1x128xf32> to vector<8x128xf32>
    %586 = arith.subf %584, %585 : vector<8x128xf32>
    %587 = math.absf %586 : vector<8x128xf32>
    %cst_137 = arith.constant 1.000000e+00 : f32
    %588 = vector.broadcast %cst_137 : f32 to vector<8x128xf32>
    %589 = arith.subf %588, %587 : vector<8x128xf32>
    %cst_138 = arith.constant 0.000000e+00 : f32
    %590 = vector.broadcast %cst_138 : f32 to vector<8x128xf32>
    %591 = arith.maximumf %589, %590 : vector<8x128xf32>
    %592 = vector.extract_strided_slice %58 {offsets = [0, 22], sizes = [8, 1], strides = [1, 1]} : vector<8x32xf32> to vector<8x1xf32>
    %593 = arith.mulf %582, %591 : vector<8x128xf32>
    %594 = vector.broadcast %592 : vector<8x1xf32> to vector<8x128xf32>
    %595 = arith.mulf %594, %593 : vector<8x128xf32>
    %596 = arith.addf %573, %595 : vector<8x128xf32>
    %597 = vector.extract_strided_slice %56 {offsets = [0, 23], sizes = [8, 1], strides = [1, 1]} : vector<8x32xf32> to vector<8x1xf32>
    %598 = vector.broadcast %597 : vector<8x1xf32> to vector<8x128xf32>
    %599 = vector.broadcast %50 : vector<1x128xf32> to vector<8x128xf32>
    %600 = arith.subf %598, %599 : vector<8x128xf32>
    %601 = math.absf %600 : vector<8x128xf32>
    %cst_139 = arith.constant 1.000000e+00 : f32
    %602 = vector.broadcast %cst_139 : f32 to vector<8x128xf32>
    %603 = arith.subf %602, %601 : vector<8x128xf32>
    %cst_140 = arith.constant 0.000000e+00 : f32
    %604 = vector.broadcast %cst_140 : f32 to vector<8x128xf32>
    %605 = arith.maximumf %603, %604 : vector<8x128xf32>
    %606 = vector.extract_strided_slice %57 {offsets = [0, 23], sizes = [8, 1], strides = [1, 1]} : vector<8x32xf32> to vector<8x1xf32>
    %607 = vector.broadcast %606 : vector<8x1xf32> to vector<8x128xf32>
    %608 = vector.broadcast %52 : vector<1x128xf32> to vector<8x128xf32>
    %609 = arith.subf %607, %608 : vector<8x128xf32>
    %610 = math.absf %609 : vector<8x128xf32>
    %cst_141 = arith.constant 1.000000e+00 : f32
    %611 = vector.broadcast %cst_141 : f32 to vector<8x128xf32>
    %612 = arith.subf %611, %610 : vector<8x128xf32>
    %cst_142 = arith.constant 0.000000e+00 : f32
    %613 = vector.broadcast %cst_142 : f32 to vector<8x128xf32>
    %614 = arith.maximumf %612, %613 : vector<8x128xf32>
    %615 = vector.extract_strided_slice %58 {offsets = [0, 23], sizes = [8, 1], strides = [1, 1]} : vector<8x32xf32> to vector<8x1xf32>
    %616 = arith.mulf %605, %614 : vector<8x128xf32>
    %617 = vector.broadcast %615 : vector<8x1xf32> to vector<8x128xf32>
    %618 = arith.mulf %617, %616 : vector<8x128xf32>
    %619 = arith.addf %596, %618 : vector<8x128xf32>
    %620 = tpu.concatenate %526, %619 in 1 : vector<8x256xf32>, vector<8x128xf32> -> vector<8x384xf32>
    %cst_143 = arith.constant 0.000000e+00 : f32
    %621 = vector.broadcast %cst_143 : f32 to vector<8x256xf32>
    %622 = vector.extract_strided_slice %56 {offsets = [0, 24], sizes = [8, 1], strides = [1, 1]} : vector<8x32xf32> to vector<8x1xf32>
    %623 = vector.broadcast %622 : vector<8x1xf32> to vector<8x256xf32>
    %624 = vector.broadcast %49 : vector<1x256xf32> to vector<8x256xf32>
    %625 = arith.subf %623, %624 : vector<8x256xf32>
    %626 = math.absf %625 : vector<8x256xf32>
    %cst_144 = arith.constant 1.000000e+00 : f32
    %627 = vector.broadcast %cst_144 : f32 to vector<8x256xf32>
    %628 = arith.subf %627, %626 : vector<8x256xf32>
    %cst_145 = arith.constant 0.000000e+00 : f32
    %629 = vector.broadcast %cst_145 : f32 to vector<8x256xf32>
    %630 = arith.maximumf %628, %629 : vector<8x256xf32>
    %631 = vector.extract_strided_slice %57 {offsets = [0, 24], sizes = [8, 1], strides = [1, 1]} : vector<8x32xf32> to vector<8x1xf32>
    %632 = vector.broadcast %631 : vector<8x1xf32> to vector<8x256xf32>
    %633 = vector.broadcast %51 : vector<1x256xf32> to vector<8x256xf32>
    %634 = arith.subf %632, %633 : vector<8x256xf32>
    %635 = math.absf %634 : vector<8x256xf32>
    %cst_146 = arith.constant 1.000000e+00 : f32
    %636 = vector.broadcast %cst_146 : f32 to vector<8x256xf32>
    %637 = arith.subf %636, %635 : vector<8x256xf32>
    %cst_147 = arith.constant 0.000000e+00 : f32
    %638 = vector.broadcast %cst_147 : f32 to vector<8x256xf32>
    %639 = arith.maximumf %637, %638 : vector<8x256xf32>
    %640 = vector.extract_strided_slice %58 {offsets = [0, 24], sizes = [8, 1], strides = [1, 1]} : vector<8x32xf32> to vector<8x1xf32>
    %641 = arith.mulf %630, %639 : vector<8x256xf32>
    %642 = vector.broadcast %640 : vector<8x1xf32> to vector<8x256xf32>
    %643 = arith.mulf %642, %641 : vector<8x256xf32>
    %644 = arith.addf %621, %643 : vector<8x256xf32>
    %645 = vector.extract_strided_slice %56 {offsets = [0, 25], sizes = [8, 1], strides = [1, 1]} : vector<8x32xf32> to vector<8x1xf32>
    %646 = vector.broadcast %645 : vector<8x1xf32> to vector<8x256xf32>
    %647 = vector.broadcast %49 : vector<1x256xf32> to vector<8x256xf32>
    %648 = arith.subf %646, %647 : vector<8x256xf32>
    %649 = math.absf %648 : vector<8x256xf32>
    %cst_148 = arith.constant 1.000000e+00 : f32
    %650 = vector.broadcast %cst_148 : f32 to vector<8x256xf32>
    %651 = arith.subf %650, %649 : vector<8x256xf32>
    %cst_149 = arith.constant 0.000000e+00 : f32
    %652 = vector.broadcast %cst_149 : f32 to vector<8x256xf32>
    %653 = arith.maximumf %651, %652 : vector<8x256xf32>
    %654 = vector.extract_strided_slice %57 {offsets = [0, 25], sizes = [8, 1], strides = [1, 1]} : vector<8x32xf32> to vector<8x1xf32>
    %655 = vector.broadcast %654 : vector<8x1xf32> to vector<8x256xf32>
    %656 = vector.broadcast %51 : vector<1x256xf32> to vector<8x256xf32>
    %657 = arith.subf %655, %656 : vector<8x256xf32>
    %658 = math.absf %657 : vector<8x256xf32>
    %cst_150 = arith.constant 1.000000e+00 : f32
    %659 = vector.broadcast %cst_150 : f32 to vector<8x256xf32>
    %660 = arith.subf %659, %658 : vector<8x256xf32>
    %cst_151 = arith.constant 0.000000e+00 : f32
    %661 = vector.broadcast %cst_151 : f32 to vector<8x256xf32>
    %662 = arith.maximumf %660, %661 : vector<8x256xf32>
    %663 = vector.extract_strided_slice %58 {offsets = [0, 25], sizes = [8, 1], strides = [1, 1]} : vector<8x32xf32> to vector<8x1xf32>
    %664 = arith.mulf %653, %662 : vector<8x256xf32>
    %665 = vector.broadcast %663 : vector<8x1xf32> to vector<8x256xf32>
    %666 = arith.mulf %665, %664 : vector<8x256xf32>
    %667 = arith.addf %644, %666 : vector<8x256xf32>
    %668 = vector.extract_strided_slice %56 {offsets = [0, 26], sizes = [8, 1], strides = [1, 1]} : vector<8x32xf32> to vector<8x1xf32>
    %669 = vector.broadcast %668 : vector<8x1xf32> to vector<8x256xf32>
    %670 = vector.broadcast %49 : vector<1x256xf32> to vector<8x256xf32>
    %671 = arith.subf %669, %670 : vector<8x256xf32>
    %672 = math.absf %671 : vector<8x256xf32>
    %cst_152 = arith.constant 1.000000e+00 : f32
    %673 = vector.broadcast %cst_152 : f32 to vector<8x256xf32>
    %674 = arith.subf %673, %672 : vector<8x256xf32>
    %cst_153 = arith.constant 0.000000e+00 : f32
    %675 = vector.broadcast %cst_153 : f32 to vector<8x256xf32>
    %676 = arith.maximumf %674, %675 : vector<8x256xf32>
    %677 = vector.extract_strided_slice %57 {offsets = [0, 26], sizes = [8, 1], strides = [1, 1]} : vector<8x32xf32> to vector<8x1xf32>
    %678 = vector.broadcast %677 : vector<8x1xf32> to vector<8x256xf32>
    %679 = vector.broadcast %51 : vector<1x256xf32> to vector<8x256xf32>
    %680 = arith.subf %678, %679 : vector<8x256xf32>
    %681 = math.absf %680 : vector<8x256xf32>
    %cst_154 = arith.constant 1.000000e+00 : f32
    %682 = vector.broadcast %cst_154 : f32 to vector<8x256xf32>
    %683 = arith.subf %682, %681 : vector<8x256xf32>
    %cst_155 = arith.constant 0.000000e+00 : f32
    %684 = vector.broadcast %cst_155 : f32 to vector<8x256xf32>
    %685 = arith.maximumf %683, %684 : vector<8x256xf32>
    %686 = vector.extract_strided_slice %58 {offsets = [0, 26], sizes = [8, 1], strides = [1, 1]} : vector<8x32xf32> to vector<8x1xf32>
    %687 = arith.mulf %676, %685 : vector<8x256xf32>
    %688 = vector.broadcast %686 : vector<8x1xf32> to vector<8x256xf32>
    %689 = arith.mulf %688, %687 : vector<8x256xf32>
    %690 = arith.addf %667, %689 : vector<8x256xf32>
    %691 = vector.extract_strided_slice %56 {offsets = [0, 27], sizes = [8, 1], strides = [1, 1]} : vector<8x32xf32> to vector<8x1xf32>
    %692 = vector.broadcast %691 : vector<8x1xf32> to vector<8x256xf32>
    %693 = vector.broadcast %49 : vector<1x256xf32> to vector<8x256xf32>
    %694 = arith.subf %692, %693 : vector<8x256xf32>
    %695 = math.absf %694 : vector<8x256xf32>
    %cst_156 = arith.constant 1.000000e+00 : f32
    %696 = vector.broadcast %cst_156 : f32 to vector<8x256xf32>
    %697 = arith.subf %696, %695 : vector<8x256xf32>
    %cst_157 = arith.constant 0.000000e+00 : f32
    %698 = vector.broadcast %cst_157 : f32 to vector<8x256xf32>
    %699 = arith.maximumf %697, %698 : vector<8x256xf32>
    %700 = vector.extract_strided_slice %57 {offsets = [0, 27], sizes = [8, 1], strides = [1, 1]} : vector<8x32xf32> to vector<8x1xf32>
    %701 = vector.broadcast %700 : vector<8x1xf32> to vector<8x256xf32>
    %702 = vector.broadcast %51 : vector<1x256xf32> to vector<8x256xf32>
    %703 = arith.subf %701, %702 : vector<8x256xf32>
    %704 = math.absf %703 : vector<8x256xf32>
    %cst_158 = arith.constant 1.000000e+00 : f32
    %705 = vector.broadcast %cst_158 : f32 to vector<8x256xf32>
    %706 = arith.subf %705, %704 : vector<8x256xf32>
    %cst_159 = arith.constant 0.000000e+00 : f32
    %707 = vector.broadcast %cst_159 : f32 to vector<8x256xf32>
    %708 = arith.maximumf %706, %707 : vector<8x256xf32>
    %709 = vector.extract_strided_slice %58 {offsets = [0, 27], sizes = [8, 1], strides = [1, 1]} : vector<8x32xf32> to vector<8x1xf32>
    %710 = arith.mulf %699, %708 : vector<8x256xf32>
    %711 = vector.broadcast %709 : vector<8x1xf32> to vector<8x256xf32>
    %712 = arith.mulf %711, %710 : vector<8x256xf32>
    %713 = arith.addf %690, %712 : vector<8x256xf32>
    %cst_160 = arith.constant 0.000000e+00 : f32
    %714 = vector.broadcast %cst_160 : f32 to vector<8x128xf32>
    %715 = vector.extract_strided_slice %56 {offsets = [0, 28], sizes = [8, 1], strides = [1, 1]} : vector<8x32xf32> to vector<8x1xf32>
    %716 = vector.broadcast %715 : vector<8x1xf32> to vector<8x128xf32>
    %717 = vector.broadcast %50 : vector<1x128xf32> to vector<8x128xf32>
    %718 = arith.subf %716, %717 : vector<8x128xf32>
    %719 = math.absf %718 : vector<8x128xf32>
    %cst_161 = arith.constant 1.000000e+00 : f32
    %720 = vector.broadcast %cst_161 : f32 to vector<8x128xf32>
    %721 = arith.subf %720, %719 : vector<8x128xf32>
    %cst_162 = arith.constant 0.000000e+00 : f32
    %722 = vector.broadcast %cst_162 : f32 to vector<8x128xf32>
    %723 = arith.maximumf %721, %722 : vector<8x128xf32>
    %724 = vector.extract_strided_slice %57 {offsets = [0, 28], sizes = [8, 1], strides = [1, 1]} : vector<8x32xf32> to vector<8x1xf32>
    %725 = vector.broadcast %724 : vector<8x1xf32> to vector<8x128xf32>
    %726 = vector.broadcast %52 : vector<1x128xf32> to vector<8x128xf32>
    %727 = arith.subf %725, %726 : vector<8x128xf32>
    %728 = math.absf %727 : vector<8x128xf32>
    %cst_163 = arith.constant 1.000000e+00 : f32
    %729 = vector.broadcast %cst_163 : f32 to vector<8x128xf32>
    %730 = arith.subf %729, %728 : vector<8x128xf32>
    %cst_164 = arith.constant 0.000000e+00 : f32
    %731 = vector.broadcast %cst_164 : f32 to vector<8x128xf32>
    %732 = arith.maximumf %730, %731 : vector<8x128xf32>
    %733 = vector.extract_strided_slice %58 {offsets = [0, 28], sizes = [8, 1], strides = [1, 1]} : vector<8x32xf32> to vector<8x1xf32>
    %734 = arith.mulf %723, %732 : vector<8x128xf32>
    %735 = vector.broadcast %733 : vector<8x1xf32> to vector<8x128xf32>
    %736 = arith.mulf %735, %734 : vector<8x128xf32>
    %737 = arith.addf %714, %736 : vector<8x128xf32>
    %738 = vector.extract_strided_slice %56 {offsets = [0, 29], sizes = [8, 1], strides = [1, 1]} : vector<8x32xf32> to vector<8x1xf32>
    %739 = vector.broadcast %738 : vector<8x1xf32> to vector<8x128xf32>
    %740 = vector.broadcast %50 : vector<1x128xf32> to vector<8x128xf32>
    %741 = arith.subf %739, %740 : vector<8x128xf32>
    %742 = math.absf %741 : vector<8x128xf32>
    %cst_165 = arith.constant 1.000000e+00 : f32
    %743 = vector.broadcast %cst_165 : f32 to vector<8x128xf32>
    %744 = arith.subf %743, %742 : vector<8x128xf32>
    %cst_166 = arith.constant 0.000000e+00 : f32
    %745 = vector.broadcast %cst_166 : f32 to vector<8x128xf32>
    %746 = arith.maximumf %744, %745 : vector<8x128xf32>
    %747 = vector.extract_strided_slice %57 {offsets = [0, 29], sizes = [8, 1], strides = [1, 1]} : vector<8x32xf32> to vector<8x1xf32>
    %748 = vector.broadcast %747 : vector<8x1xf32> to vector<8x128xf32>
    %749 = vector.broadcast %52 : vector<1x128xf32> to vector<8x128xf32>
    %750 = arith.subf %748, %749 : vector<8x128xf32>
    %751 = math.absf %750 : vector<8x128xf32>
    %cst_167 = arith.constant 1.000000e+00 : f32
    %752 = vector.broadcast %cst_167 : f32 to vector<8x128xf32>
    %753 = arith.subf %752, %751 : vector<8x128xf32>
    %cst_168 = arith.constant 0.000000e+00 : f32
    %754 = vector.broadcast %cst_168 : f32 to vector<8x128xf32>
    %755 = arith.maximumf %753, %754 : vector<8x128xf32>
    %756 = vector.extract_strided_slice %58 {offsets = [0, 29], sizes = [8, 1], strides = [1, 1]} : vector<8x32xf32> to vector<8x1xf32>
    %757 = arith.mulf %746, %755 : vector<8x128xf32>
    %758 = vector.broadcast %756 : vector<8x1xf32> to vector<8x128xf32>
    %759 = arith.mulf %758, %757 : vector<8x128xf32>
    %760 = arith.addf %737, %759 : vector<8x128xf32>
    %761 = vector.extract_strided_slice %56 {offsets = [0, 30], sizes = [8, 1], strides = [1, 1]} : vector<8x32xf32> to vector<8x1xf32>
    %762 = vector.broadcast %761 : vector<8x1xf32> to vector<8x128xf32>
    %763 = vector.broadcast %50 : vector<1x128xf32> to vector<8x128xf32>
    %764 = arith.subf %762, %763 : vector<8x128xf32>
    %765 = math.absf %764 : vector<8x128xf32>
    %cst_169 = arith.constant 1.000000e+00 : f32
    %766 = vector.broadcast %cst_169 : f32 to vector<8x128xf32>
    %767 = arith.subf %766, %765 : vector<8x128xf32>
    %cst_170 = arith.constant 0.000000e+00 : f32
    %768 = vector.broadcast %cst_170 : f32 to vector<8x128xf32>
    %769 = arith.maximumf %767, %768 : vector<8x128xf32>
    %770 = vector.extract_strided_slice %57 {offsets = [0, 30], sizes = [8, 1], strides = [1, 1]} : vector<8x32xf32> to vector<8x1xf32>
    %771 = vector.broadcast %770 : vector<8x1xf32> to vector<8x128xf32>
    %772 = vector.broadcast %52 : vector<1x128xf32> to vector<8x128xf32>
    %773 = arith.subf %771, %772 : vector<8x128xf32>
    %774 = math.absf %773 : vector<8x128xf32>
    %cst_171 = arith.constant 1.000000e+00 : f32
    %775 = vector.broadcast %cst_171 : f32 to vector<8x128xf32>
    %776 = arith.subf %775, %774 : vector<8x128xf32>
    %cst_172 = arith.constant 0.000000e+00 : f32
    %777 = vector.broadcast %cst_172 : f32 to vector<8x128xf32>
    %778 = arith.maximumf %776, %777 : vector<8x128xf32>
    %779 = vector.extract_strided_slice %58 {offsets = [0, 30], sizes = [8, 1], strides = [1, 1]} : vector<8x32xf32> to vector<8x1xf32>
    %780 = arith.mulf %769, %778 : vector<8x128xf32>
    %781 = vector.broadcast %779 : vector<8x1xf32> to vector<8x128xf32>
    %782 = arith.mulf %781, %780 : vector<8x128xf32>
    %783 = arith.addf %760, %782 : vector<8x128xf32>
    %784 = vector.extract_strided_slice %56 {offsets = [0, 31], sizes = [8, 1], strides = [1, 1]} : vector<8x32xf32> to vector<8x1xf32>
    %785 = vector.broadcast %784 : vector<8x1xf32> to vector<8x128xf32>
    %786 = vector.broadcast %50 : vector<1x128xf32> to vector<8x128xf32>
    %787 = arith.subf %785, %786 : vector<8x128xf32>
    %788 = math.absf %787 : vector<8x128xf32>
    %cst_173 = arith.constant 1.000000e+00 : f32
    %789 = vector.broadcast %cst_173 : f32 to vector<8x128xf32>
    %790 = arith.subf %789, %788 : vector<8x128xf32>
    %cst_174 = arith.constant 0.000000e+00 : f32
    %791 = vector.broadcast %cst_174 : f32 to vector<8x128xf32>
    %792 = arith.maximumf %790, %791 : vector<8x128xf32>
    %793 = vector.extract_strided_slice %57 {offsets = [0, 31], sizes = [8, 1], strides = [1, 1]} : vector<8x32xf32> to vector<8x1xf32>
    %794 = vector.broadcast %793 : vector<8x1xf32> to vector<8x128xf32>
    %795 = vector.broadcast %52 : vector<1x128xf32> to vector<8x128xf32>
    %796 = arith.subf %794, %795 : vector<8x128xf32>
    %797 = math.absf %796 : vector<8x128xf32>
    %cst_175 = arith.constant 1.000000e+00 : f32
    %798 = vector.broadcast %cst_175 : f32 to vector<8x128xf32>
    %799 = arith.subf %798, %797 : vector<8x128xf32>
    %cst_176 = arith.constant 0.000000e+00 : f32
    %800 = vector.broadcast %cst_176 : f32 to vector<8x128xf32>
    %801 = arith.maximumf %799, %800 : vector<8x128xf32>
    %802 = vector.extract_strided_slice %58 {offsets = [0, 31], sizes = [8, 1], strides = [1, 1]} : vector<8x32xf32> to vector<8x1xf32>
    %803 = arith.mulf %792, %801 : vector<8x128xf32>
    %804 = vector.broadcast %802 : vector<8x1xf32> to vector<8x128xf32>
    %805 = arith.mulf %804, %803 : vector<8x128xf32>
    %806 = arith.addf %783, %805 : vector<8x128xf32>
    %807 = tpu.concatenate %713, %806 in 1 : vector<8x256xf32>, vector<8x128xf32> -> vector<8x384xf32>
    %808 = tpu.concatenate %246, %433, %620, %807 in 0 : vector<8x384xf32>, vector<8x384xf32>, vector<8x384xf32>, vector<8x384xf32> -> vector<32x384xf32>
    %cst_177 = arith.constant dense<0.000000e+00> : vector<32x32xf32>
    %809 = tpu.matmul %808, %59, %cst_177 {dimension_numbers = #tpu.dot_dimension_numbers<[1], [0], [0], [1], [0, 0, 1, 1], [], []>} : vector<32x384xf32>, vector<384x32xf32>, vector<32x32xf32> -> vector<32x32xf32>
    %810 = arith.mulf %809, %53 : vector<32x32xf32>
    %cst_178 = arith.constant dense<0.000000e+00> : vector<32x32xf32>
    %811 = tpu.matmul %810, %54, %cst_178 {dimension_numbers = #tpu.dot_dimension_numbers<[1], [0], [0], [1], [0, 0, 1, 1], [], []>} : vector<32x32xf32>, vector<32x32xf32>, vector<32x32xf32> -> vector<32x32xf32>
    %812 = vector.extract_strided_slice %811 {offsets = [0, 0], sizes = [8, 32], strides = [1, 1]} : vector<32x32xf32> to vector<8x32xf32>
    %813 = vector.extract_strided_slice %811 {offsets = [8, 0], sizes = [8, 32], strides = [1, 1]} : vector<32x32xf32> to vector<8x32xf32>
    %814 = arith.addf %812, %813 : vector<8x32xf32>
    %815 = vector.extract_strided_slice %811 {offsets = [16, 0], sizes = [8, 32], strides = [1, 1]} : vector<32x32xf32> to vector<8x32xf32>
    %816 = arith.addf %814, %815 : vector<8x32xf32>
    %817 = vector.extract_strided_slice %811 {offsets = [24, 0], sizes = [8, 32], strides = [1, 1]} : vector<32x32xf32> to vector<8x32xf32>
    %818 = arith.addf %816, %817 : vector<8x32xf32>
    %819 = vector.broadcast %55 : vector<1x32xf32> to vector<8x32xf32>
    %820 = arith.addf %818, %819 : vector<8x32xf32>
    %c0_179 = arith.constant 0 : index
    %c0_180 = arith.constant 0 : index
    %c0_181 = arith.constant 0 : index
    %821 = vector.load %arg14[%c0_179, %c0_180, %c0_181] : memref<2x8x32xf32, #tpu.memory_space<vmem>>, vector<1x8x32xf32>
    %822 = vector.shape_cast %821 : vector<1x8x32xf32> to vector<8x32xf32>
    %823 = vector.shape_cast %820 : vector<8x32xf32> to vector<1x8x32xf32>
    tpu.vector_store %arg14[%c0_179, %c0_180, %c0_181], %823 {strides = array<i32>} : memref<2x8x32xf32, #tpu.memory_space<vmem>>, vector<1x8x32xf32>,
    %824 = vector.extract_strided_slice %35 {offsets = [8, 0], sizes = [8, 32], strides = [1, 1]} : vector<16x32xf32> to vector<8x32xf32>
    %825 = vector.extract_strided_slice %40 {offsets = [8, 0], sizes = [8, 32], strides = [1, 1]} : vector<16x32xf32> to vector<8x32xf32>
    %826 = vector.extract_strided_slice %48 {offsets = [8, 0], sizes = [8, 32], strides = [1, 1]} : vector<16x32xf32> to vector<8x32xf32>
    %827 = vector.extract_strided_slice %6 {offsets = [384, 0], sizes = [384, 32], strides = [1, 1]} : vector<768x32xf32> to vector<384x32xf32>
    %cst_182 = arith.constant 0.000000e+00 : f32
    %828 = vector.broadcast %cst_182 : f32 to vector<8x256xf32>
    %829 = vector.extract_strided_slice %824 {offsets = [0, 0], sizes = [8, 1], strides = [1, 1]} : vector<8x32xf32> to vector<8x1xf32>
    %830 = vector.broadcast %829 : vector<8x1xf32> to vector<8x256xf32>
    %831 = vector.broadcast %49 : vector<1x256xf32> to vector<8x256xf32>
    %832 = arith.subf %830, %831 : vector<8x256xf32>
    %833 = math.absf %832 : vector<8x256xf32>
    %cst_183 = arith.constant 1.000000e+00 : f32
    %834 = vector.broadcast %cst_183 : f32 to vector<8x256xf32>
    %835 = arith.subf %834, %833 : vector<8x256xf32>
    %cst_184 = arith.constant 0.000000e+00 : f32
    %836 = vector.broadcast %cst_184 : f32 to vector<8x256xf32>
    %837 = arith.maximumf %835, %836 : vector<8x256xf32>
    %838 = vector.extract_strided_slice %825 {offsets = [0, 0], sizes = [8, 1], strides = [1, 1]} : vector<8x32xf32> to vector<8x1xf32>
    %839 = vector.broadcast %838 : vector<8x1xf32> to vector<8x256xf32>
    %840 = vector.broadcast %51 : vector<1x256xf32> to vector<8x256xf32>
    %841 = arith.subf %839, %840 : vector<8x256xf32>
    %842 = math.absf %841 : vector<8x256xf32>
    %cst_185 = arith.constant 1.000000e+00 : f32
    %843 = vector.broadcast %cst_185 : f32 to vector<8x256xf32>
    %844 = arith.subf %843, %842 : vector<8x256xf32>
    %cst_186 = arith.constant 0.000000e+00 : f32
    %845 = vector.broadcast %cst_186 : f32 to vector<8x256xf32>
    %846 = arith.maximumf %844, %845 : vector<8x256xf32>
    %847 = vector.extract_strided_slice %826 {offsets = [0, 0], sizes = [8, 1], strides = [1, 1]} : vector<8x32xf32> to vector<8x1xf32>
    %848 = arith.mulf %837, %846 : vector<8x256xf32>
    %849 = vector.broadcast %847 : vector<8x1xf32> to vector<8x256xf32>
    %850 = arith.mulf %849, %848 : vector<8x256xf32>
    %851 = arith.addf %828, %850 : vector<8x256xf32>
    %852 = vector.extract_strided_slice %824 {offsets = [0, 1], sizes = [8, 1], strides = [1, 1]} : vector<8x32xf32> to vector<8x1xf32>
    %853 = vector.broadcast %852 : vector<8x1xf32> to vector<8x256xf32>
    %854 = vector.broadcast %49 : vector<1x256xf32> to vector<8x256xf32>
    %855 = arith.subf %853, %854 : vector<8x256xf32>
    %856 = math.absf %855 : vector<8x256xf32>
    %cst_187 = arith.constant 1.000000e+00 : f32
    %857 = vector.broadcast %cst_187 : f32 to vector<8x256xf32>
    %858 = arith.subf %857, %856 : vector<8x256xf32>
    %cst_188 = arith.constant 0.000000e+00 : f32
    %859 = vector.broadcast %cst_188 : f32 to vector<8x256xf32>
    %860 = arith.maximumf %858, %859 : vector<8x256xf32>
    %861 = vector.extract_strided_slice %825 {offsets = [0, 1], sizes = [8, 1], strides = [1, 1]} : vector<8x32xf32> to vector<8x1xf32>
    %862 = vector.broadcast %861 : vector<8x1xf32> to vector<8x256xf32>
    %863 = vector.broadcast %51 : vector<1x256xf32> to vector<8x256xf32>
    %864 = arith.subf %862, %863 : vector<8x256xf32>
    %865 = math.absf %864 : vector<8x256xf32>
    %cst_189 = arith.constant 1.000000e+00 : f32
    %866 = vector.broadcast %cst_189 : f32 to vector<8x256xf32>
    %867 = arith.subf %866, %865 : vector<8x256xf32>
    %cst_190 = arith.constant 0.000000e+00 : f32
    %868 = vector.broadcast %cst_190 : f32 to vector<8x256xf32>
    %869 = arith.maximumf %867, %868 : vector<8x256xf32>
    %870 = vector.extract_strided_slice %826 {offsets = [0, 1], sizes = [8, 1], strides = [1, 1]} : vector<8x32xf32> to vector<8x1xf32>
    %871 = arith.mulf %860, %869 : vector<8x256xf32>
    %872 = vector.broadcast %870 : vector<8x1xf32> to vector<8x256xf32>
    %873 = arith.mulf %872, %871 : vector<8x256xf32>
    %874 = arith.addf %851, %873 : vector<8x256xf32>
    %875 = vector.extract_strided_slice %824 {offsets = [0, 2], sizes = [8, 1], strides = [1, 1]} : vector<8x32xf32> to vector<8x1xf32>
    %876 = vector.broadcast %875 : vector<8x1xf32> to vector<8x256xf32>
    %877 = vector.broadcast %49 : vector<1x256xf32> to vector<8x256xf32>
    %878 = arith.subf %876, %877 : vector<8x256xf32>
    %879 = math.absf %878 : vector<8x256xf32>
    %cst_191 = arith.constant 1.000000e+00 : f32
    %880 = vector.broadcast %cst_191 : f32 to vector<8x256xf32>
    %881 = arith.subf %880, %879 : vector<8x256xf32>
    %cst_192 = arith.constant 0.000000e+00 : f32
    %882 = vector.broadcast %cst_192 : f32 to vector<8x256xf32>
    %883 = arith.maximumf %881, %882 : vector<8x256xf32>
    %884 = vector.extract_strided_slice %825 {offsets = [0, 2], sizes = [8, 1], strides = [1, 1]} : vector<8x32xf32> to vector<8x1xf32>
    %885 = vector.broadcast %884 : vector<8x1xf32> to vector<8x256xf32>
    %886 = vector.broadcast %51 : vector<1x256xf32> to vector<8x256xf32>
    %887 = arith.subf %885, %886 : vector<8x256xf32>
    %888 = math.absf %887 : vector<8x256xf32>
    %cst_193 = arith.constant 1.000000e+00 : f32
    %889 = vector.broadcast %cst_193 : f32 to vector<8x256xf32>
    %890 = arith.subf %889, %888 : vector<8x256xf32>
    %cst_194 = arith.constant 0.000000e+00 : f32
    %891 = vector.broadcast %cst_194 : f32 to vector<8x256xf32>
    %892 = arith.maximumf %890, %891 : vector<8x256xf32>
    %893 = vector.extract_strided_slice %826 {offsets = [0, 2], sizes = [8, 1], strides = [1, 1]} : vector<8x32xf32> to vector<8x1xf32>
    %894 = arith.mulf %883, %892 : vector<8x256xf32>
    %895 = vector.broadcast %893 : vector<8x1xf32> to vector<8x256xf32>
    %896 = arith.mulf %895, %894 : vector<8x256xf32>
    %897 = arith.addf %874, %896 : vector<8x256xf32>
    %898 = vector.extract_strided_slice %824 {offsets = [0, 3], sizes = [8, 1], strides = [1, 1]} : vector<8x32xf32> to vector<8x1xf32>
    %899 = vector.broadcast %898 : vector<8x1xf32> to vector<8x256xf32>
    %900 = vector.broadcast %49 : vector<1x256xf32> to vector<8x256xf32>
    %901 = arith.subf %899, %900 : vector<8x256xf32>
    %902 = math.absf %901 : vector<8x256xf32>
    %cst_195 = arith.constant 1.000000e+00 : f32
    %903 = vector.broadcast %cst_195 : f32 to vector<8x256xf32>
    %904 = arith.subf %903, %902 : vector<8x256xf32>
    %cst_196 = arith.constant 0.000000e+00 : f32
    %905 = vector.broadcast %cst_196 : f32 to vector<8x256xf32>
    %906 = arith.maximumf %904, %905 : vector<8x256xf32>
    %907 = vector.extract_strided_slice %825 {offsets = [0, 3], sizes = [8, 1], strides = [1, 1]} : vector<8x32xf32> to vector<8x1xf32>
    %908 = vector.broadcast %907 : vector<8x1xf32> to vector<8x256xf32>
    %909 = vector.broadcast %51 : vector<1x256xf32> to vector<8x256xf32>
    %910 = arith.subf %908, %909 : vector<8x256xf32>
    %911 = math.absf %910 : vector<8x256xf32>
    %cst_197 = arith.constant 1.000000e+00 : f32
    %912 = vector.broadcast %cst_197 : f32 to vector<8x256xf32>
    %913 = arith.subf %912, %911 : vector<8x256xf32>
    %cst_198 = arith.constant 0.000000e+00 : f32
    %914 = vector.broadcast %cst_198 : f32 to vector<8x256xf32>
    %915 = arith.maximumf %913, %914 : vector<8x256xf32>
    %916 = vector.extract_strided_slice %826 {offsets = [0, 3], sizes = [8, 1], strides = [1, 1]} : vector<8x32xf32> to vector<8x1xf32>
    %917 = arith.mulf %906, %915 : vector<8x256xf32>
    %918 = vector.broadcast %916 : vector<8x1xf32> to vector<8x256xf32>
    %919 = arith.mulf %918, %917 : vector<8x256xf32>
    %920 = arith.addf %897, %919 : vector<8x256xf32>
    %cst_199 = arith.constant 0.000000e+00 : f32
    %921 = vector.broadcast %cst_199 : f32 to vector<8x128xf32>
    %922 = vector.extract_strided_slice %824 {offsets = [0, 4], sizes = [8, 1], strides = [1, 1]} : vector<8x32xf32> to vector<8x1xf32>
    %923 = vector.broadcast %922 : vector<8x1xf32> to vector<8x128xf32>
    %924 = vector.broadcast %50 : vector<1x128xf32> to vector<8x128xf32>
    %925 = arith.subf %923, %924 : vector<8x128xf32>
    %926 = math.absf %925 : vector<8x128xf32>
    %cst_200 = arith.constant 1.000000e+00 : f32
    %927 = vector.broadcast %cst_200 : f32 to vector<8x128xf32>
    %928 = arith.subf %927, %926 : vector<8x128xf32>
    %cst_201 = arith.constant 0.000000e+00 : f32
    %929 = vector.broadcast %cst_201 : f32 to vector<8x128xf32>
    %930 = arith.maximumf %928, %929 : vector<8x128xf32>
    %931 = vector.extract_strided_slice %825 {offsets = [0, 4], sizes = [8, 1], strides = [1, 1]} : vector<8x32xf32> to vector<8x1xf32>
    %932 = vector.broadcast %931 : vector<8x1xf32> to vector<8x128xf32>
    %933 = vector.broadcast %52 : vector<1x128xf32> to vector<8x128xf32>
    %934 = arith.subf %932, %933 : vector<8x128xf32>
    %935 = math.absf %934 : vector<8x128xf32>
    %cst_202 = arith.constant 1.000000e+00 : f32
    %936 = vector.broadcast %cst_202 : f32 to vector<8x128xf32>
    %937 = arith.subf %936, %935 : vector<8x128xf32>
    %cst_203 = arith.constant 0.000000e+00 : f32
    %938 = vector.broadcast %cst_203 : f32 to vector<8x128xf32>
    %939 = arith.maximumf %937, %938 : vector<8x128xf32>
    %940 = vector.extract_strided_slice %826 {offsets = [0, 4], sizes = [8, 1], strides = [1, 1]} : vector<8x32xf32> to vector<8x1xf32>
    %941 = arith.mulf %930, %939 : vector<8x128xf32>
    %942 = vector.broadcast %940 : vector<8x1xf32> to vector<8x128xf32>
    %943 = arith.mulf %942, %941 : vector<8x128xf32>
    %944 = arith.addf %921, %943 : vector<8x128xf32>
    %945 = vector.extract_strided_slice %824 {offsets = [0, 5], sizes = [8, 1], strides = [1, 1]} : vector<8x32xf32> to vector<8x1xf32>
    %946 = vector.broadcast %945 : vector<8x1xf32> to vector<8x128xf32>
    %947 = vector.broadcast %50 : vector<1x128xf32> to vector<8x128xf32>
    %948 = arith.subf %946, %947 : vector<8x128xf32>
    %949 = math.absf %948 : vector<8x128xf32>
    %cst_204 = arith.constant 1.000000e+00 : f32
    %950 = vector.broadcast %cst_204 : f32 to vector<8x128xf32>
    %951 = arith.subf %950, %949 : vector<8x128xf32>
    %cst_205 = arith.constant 0.000000e+00 : f32
    %952 = vector.broadcast %cst_205 : f32 to vector<8x128xf32>
    %953 = arith.maximumf %951, %952 : vector<8x128xf32>
    %954 = vector.extract_strided_slice %825 {offsets = [0, 5], sizes = [8, 1], strides = [1, 1]} : vector<8x32xf32> to vector<8x1xf32>
    %955 = vector.broadcast %954 : vector<8x1xf32> to vector<8x128xf32>
    %956 = vector.broadcast %52 : vector<1x128xf32> to vector<8x128xf32>
    %957 = arith.subf %955, %956 : vector<8x128xf32>
    %958 = math.absf %957 : vector<8x128xf32>
    %cst_206 = arith.constant 1.000000e+00 : f32
    %959 = vector.broadcast %cst_206 : f32 to vector<8x128xf32>
    %960 = arith.subf %959, %958 : vector<8x128xf32>
    %cst_207 = arith.constant 0.000000e+00 : f32
    %961 = vector.broadcast %cst_207 : f32 to vector<8x128xf32>
    %962 = arith.maximumf %960, %961 : vector<8x128xf32>
    %963 = vector.extract_strided_slice %826 {offsets = [0, 5], sizes = [8, 1], strides = [1, 1]} : vector<8x32xf32> to vector<8x1xf32>
    %964 = arith.mulf %953, %962 : vector<8x128xf32>
    %965 = vector.broadcast %963 : vector<8x1xf32> to vector<8x128xf32>
    %966 = arith.mulf %965, %964 : vector<8x128xf32>
    %967 = arith.addf %944, %966 : vector<8x128xf32>
    %968 = vector.extract_strided_slice %824 {offsets = [0, 6], sizes = [8, 1], strides = [1, 1]} : vector<8x32xf32> to vector<8x1xf32>
    %969 = vector.broadcast %968 : vector<8x1xf32> to vector<8x128xf32>
    %970 = vector.broadcast %50 : vector<1x128xf32> to vector<8x128xf32>
    %971 = arith.subf %969, %970 : vector<8x128xf32>
    %972 = math.absf %971 : vector<8x128xf32>
    %cst_208 = arith.constant 1.000000e+00 : f32
    %973 = vector.broadcast %cst_208 : f32 to vector<8x128xf32>
    %974 = arith.subf %973, %972 : vector<8x128xf32>
    %cst_209 = arith.constant 0.000000e+00 : f32
    %975 = vector.broadcast %cst_209 : f32 to vector<8x128xf32>
    %976 = arith.maximumf %974, %975 : vector<8x128xf32>
    %977 = vector.extract_strided_slice %825 {offsets = [0, 6], sizes = [8, 1], strides = [1, 1]} : vector<8x32xf32> to vector<8x1xf32>
    %978 = vector.broadcast %977 : vector<8x1xf32> to vector<8x128xf32>
    %979 = vector.broadcast %52 : vector<1x128xf32> to vector<8x128xf32>
    %980 = arith.subf %978, %979 : vector<8x128xf32>
    %981 = math.absf %980 : vector<8x128xf32>
    %cst_210 = arith.constant 1.000000e+00 : f32
    %982 = vector.broadcast %cst_210 : f32 to vector<8x128xf32>
    %983 = arith.subf %982, %981 : vector<8x128xf32>
    %cst_211 = arith.constant 0.000000e+00 : f32
    %984 = vector.broadcast %cst_211 : f32 to vector<8x128xf32>
    %985 = arith.maximumf %983, %984 : vector<8x128xf32>
    %986 = vector.extract_strided_slice %826 {offsets = [0, 6], sizes = [8, 1], strides = [1, 1]} : vector<8x32xf32> to vector<8x1xf32>
    %987 = arith.mulf %976, %985 : vector<8x128xf32>
    %988 = vector.broadcast %986 : vector<8x1xf32> to vector<8x128xf32>
    %989 = arith.mulf %988, %987 : vector<8x128xf32>
    %990 = arith.addf %967, %989 : vector<8x128xf32>
    %991 = vector.extract_strided_slice %824 {offsets = [0, 7], sizes = [8, 1], strides = [1, 1]} : vector<8x32xf32> to vector<8x1xf32>
    %992 = vector.broadcast %991 : vector<8x1xf32> to vector<8x128xf32>
    %993 = vector.broadcast %50 : vector<1x128xf32> to vector<8x128xf32>
    %994 = arith.subf %992, %993 : vector<8x128xf32>
    %995 = math.absf %994 : vector<8x128xf32>
    %cst_212 = arith.constant 1.000000e+00 : f32
    %996 = vector.broadcast %cst_212 : f32 to vector<8x128xf32>
    %997 = arith.subf %996, %995 : vector<8x128xf32>
    %cst_213 = arith.constant 0.000000e+00 : f32
    %998 = vector.broadcast %cst_213 : f32 to vector<8x128xf32>
    %999 = arith.maximumf %997, %998 : vector<8x128xf32>
    %1000 = vector.extract_strided_slice %825 {offsets = [0, 7], sizes = [8, 1], strides = [1, 1]} : vector<8x32xf32> to vector<8x1xf32>
    %1001 = vector.broadcast %1000 : vector<8x1xf32> to vector<8x128xf32>
    %1002 = vector.broadcast %52 : vector<1x128xf32> to vector<8x128xf32>
    %1003 = arith.subf %1001, %1002 : vector<8x128xf32>
    %1004 = math.absf %1003 : vector<8x128xf32>
    %cst_214 = arith.constant 1.000000e+00 : f32
    %1005 = vector.broadcast %cst_214 : f32 to vector<8x128xf32>
    %1006 = arith.subf %1005, %1004 : vector<8x128xf32>
    %cst_215 = arith.constant 0.000000e+00 : f32
    %1007 = vector.broadcast %cst_215 : f32 to vector<8x128xf32>
    %1008 = arith.maximumf %1006, %1007 : vector<8x128xf32>
    %1009 = vector.extract_strided_slice %826 {offsets = [0, 7], sizes = [8, 1], strides = [1, 1]} : vector<8x32xf32> to vector<8x1xf32>
    %1010 = arith.mulf %999, %1008 : vector<8x128xf32>
    %1011 = vector.broadcast %1009 : vector<8x1xf32> to vector<8x128xf32>
    %1012 = arith.mulf %1011, %1010 : vector<8x128xf32>
    %1013 = arith.addf %990, %1012 : vector<8x128xf32>
    %1014 = tpu.concatenate %920, %1013 in 1 : vector<8x256xf32>, vector<8x128xf32> -> vector<8x384xf32>
    %cst_216 = arith.constant 0.000000e+00 : f32
    %1015 = vector.broadcast %cst_216 : f32 to vector<8x256xf32>
    %1016 = vector.extract_strided_slice %824 {offsets = [0, 8], sizes = [8, 1], strides = [1, 1]} : vector<8x32xf32> to vector<8x1xf32>
    %1017 = vector.broadcast %1016 : vector<8x1xf32> to vector<8x256xf32>
    %1018 = vector.broadcast %49 : vector<1x256xf32> to vector<8x256xf32>
    %1019 = arith.subf %1017, %1018 : vector<8x256xf32>
    %1020 = math.absf %1019 : vector<8x256xf32>
    %cst_217 = arith.constant 1.000000e+00 : f32
    %1021 = vector.broadcast %cst_217 : f32 to vector<8x256xf32>
    %1022 = arith.subf %1021, %1020 : vector<8x256xf32>
    %cst_218 = arith.constant 0.000000e+00 : f32
    %1023 = vector.broadcast %cst_218 : f32 to vector<8x256xf32>
    %1024 = arith.maximumf %1022, %1023 : vector<8x256xf32>
    %1025 = vector.extract_strided_slice %825 {offsets = [0, 8], sizes = [8, 1], strides = [1, 1]} : vector<8x32xf32> to vector<8x1xf32>
    %1026 = vector.broadcast %1025 : vector<8x1xf32> to vector<8x256xf32>
    %1027 = vector.broadcast %51 : vector<1x256xf32> to vector<8x256xf32>
    %1028 = arith.subf %1026, %1027 : vector<8x256xf32>
    %1029 = math.absf %1028 : vector<8x256xf32>
    %cst_219 = arith.constant 1.000000e+00 : f32
    %1030 = vector.broadcast %cst_219 : f32 to vector<8x256xf32>
    %1031 = arith.subf %1030, %1029 : vector<8x256xf32>
    %cst_220 = arith.constant 0.000000e+00 : f32
    %1032 = vector.broadcast %cst_220 : f32 to vector<8x256xf32>
    %1033 = arith.maximumf %1031, %1032 : vector<8x256xf32>
    %1034 = vector.extract_strided_slice %826 {offsets = [0, 8], sizes = [8, 1], strides = [1, 1]} : vector<8x32xf32> to vector<8x1xf32>
    %1035 = arith.mulf %1024, %1033 : vector<8x256xf32>
    %1036 = vector.broadcast %1034 : vector<8x1xf32> to vector<8x256xf32>
    %1037 = arith.mulf %1036, %1035 : vector<8x256xf32>
    %1038 = arith.addf %1015, %1037 : vector<8x256xf32>
    %1039 = vector.extract_strided_slice %824 {offsets = [0, 9], sizes = [8, 1], strides = [1, 1]} : vector<8x32xf32> to vector<8x1xf32>
    %1040 = vector.broadcast %1039 : vector<8x1xf32> to vector<8x256xf32>
    %1041 = vector.broadcast %49 : vector<1x256xf32> to vector<8x256xf32>
    %1042 = arith.subf %1040, %1041 : vector<8x256xf32>
    %1043 = math.absf %1042 : vector<8x256xf32>
    %cst_221 = arith.constant 1.000000e+00 : f32
    %1044 = vector.broadcast %cst_221 : f32 to vector<8x256xf32>
    %1045 = arith.subf %1044, %1043 : vector<8x256xf32>
    %cst_222 = arith.constant 0.000000e+00 : f32
    %1046 = vector.broadcast %cst_222 : f32 to vector<8x256xf32>
    %1047 = arith.maximumf %1045, %1046 : vector<8x256xf32>
    %1048 = vector.extract_strided_slice %825 {offsets = [0, 9], sizes = [8, 1], strides = [1, 1]} : vector<8x32xf32> to vector<8x1xf32>
    %1049 = vector.broadcast %1048 : vector<8x1xf32> to vector<8x256xf32>
    %1050 = vector.broadcast %51 : vector<1x256xf32> to vector<8x256xf32>
    %1051 = arith.subf %1049, %1050 : vector<8x256xf32>
    %1052 = math.absf %1051 : vector<8x256xf32>
    %cst_223 = arith.constant 1.000000e+00 : f32
    %1053 = vector.broadcast %cst_223 : f32 to vector<8x256xf32>
    %1054 = arith.subf %1053, %1052 : vector<8x256xf32>
    %cst_224 = arith.constant 0.000000e+00 : f32
    %1055 = vector.broadcast %cst_224 : f32 to vector<8x256xf32>
    %1056 = arith.maximumf %1054, %1055 : vector<8x256xf32>
    %1057 = vector.extract_strided_slice %826 {offsets = [0, 9], sizes = [8, 1], strides = [1, 1]} : vector<8x32xf32> to vector<8x1xf32>
    %1058 = arith.mulf %1047, %1056 : vector<8x256xf32>
    %1059 = vector.broadcast %1057 : vector<8x1xf32> to vector<8x256xf32>
    %1060 = arith.mulf %1059, %1058 : vector<8x256xf32>
    %1061 = arith.addf %1038, %1060 : vector<8x256xf32>
    %1062 = vector.extract_strided_slice %824 {offsets = [0, 10], sizes = [8, 1], strides = [1, 1]} : vector<8x32xf32> to vector<8x1xf32>
    %1063 = vector.broadcast %1062 : vector<8x1xf32> to vector<8x256xf32>
    %1064 = vector.broadcast %49 : vector<1x256xf32> to vector<8x256xf32>
    %1065 = arith.subf %1063, %1064 : vector<8x256xf32>
    %1066 = math.absf %1065 : vector<8x256xf32>
    %cst_225 = arith.constant 1.000000e+00 : f32
    %1067 = vector.broadcast %cst_225 : f32 to vector<8x256xf32>
    %1068 = arith.subf %1067, %1066 : vector<8x256xf32>
    %cst_226 = arith.constant 0.000000e+00 : f32
    %1069 = vector.broadcast %cst_226 : f32 to vector<8x256xf32>
    %1070 = arith.maximumf %1068, %1069 : vector<8x256xf32>
    %1071 = vector.extract_strided_slice %825 {offsets = [0, 10], sizes = [8, 1], strides = [1, 1]} : vector<8x32xf32> to vector<8x1xf32>
    %1072 = vector.broadcast %1071 : vector<8x1xf32> to vector<8x256xf32>
    %1073 = vector.broadcast %51 : vector<1x256xf32> to vector<8x256xf32>
    %1074 = arith.subf %1072, %1073 : vector<8x256xf32>
    %1075 = math.absf %1074 : vector<8x256xf32>
    %cst_227 = arith.constant 1.000000e+00 : f32
    %1076 = vector.broadcast %cst_227 : f32 to vector<8x256xf32>
    %1077 = arith.subf %1076, %1075 : vector<8x256xf32>
    %cst_228 = arith.constant 0.000000e+00 : f32
    %1078 = vector.broadcast %cst_228 : f32 to vector<8x256xf32>
    %1079 = arith.maximumf %1077, %1078 : vector<8x256xf32>
    %1080 = vector.extract_strided_slice %826 {offsets = [0, 10], sizes = [8, 1], strides = [1, 1]} : vector<8x32xf32> to vector<8x1xf32>
    %1081 = arith.mulf %1070, %1079 : vector<8x256xf32>
    %1082 = vector.broadcast %1080 : vector<8x1xf32> to vector<8x256xf32>
    %1083 = arith.mulf %1082, %1081 : vector<8x256xf32>
    %1084 = arith.addf %1061, %1083 : vector<8x256xf32>
    %1085 = vector.extract_strided_slice %824 {offsets = [0, 11], sizes = [8, 1], strides = [1, 1]} : vector<8x32xf32> to vector<8x1xf32>
    %1086 = vector.broadcast %1085 : vector<8x1xf32> to vector<8x256xf32>
    %1087 = vector.broadcast %49 : vector<1x256xf32> to vector<8x256xf32>
    %1088 = arith.subf %1086, %1087 : vector<8x256xf32>
    %1089 = math.absf %1088 : vector<8x256xf32>
    %cst_229 = arith.constant 1.000000e+00 : f32
    %1090 = vector.broadcast %cst_229 : f32 to vector<8x256xf32>
    %1091 = arith.subf %1090, %1089 : vector<8x256xf32>
    %cst_230 = arith.constant 0.000000e+00 : f32
    %1092 = vector.broadcast %cst_230 : f32 to vector<8x256xf32>
    %1093 = arith.maximumf %1091, %1092 : vector<8x256xf32>
    %1094 = vector.extract_strided_slice %825 {offsets = [0, 11], sizes = [8, 1], strides = [1, 1]} : vector<8x32xf32> to vector<8x1xf32>
    %1095 = vector.broadcast %1094 : vector<8x1xf32> to vector<8x256xf32>
    %1096 = vector.broadcast %51 : vector<1x256xf32> to vector<8x256xf32>
    %1097 = arith.subf %1095, %1096 : vector<8x256xf32>
    %1098 = math.absf %1097 : vector<8x256xf32>
    %cst_231 = arith.constant 1.000000e+00 : f32
    %1099 = vector.broadcast %cst_231 : f32 to vector<8x256xf32>
    %1100 = arith.subf %1099, %1098 : vector<8x256xf32>
    %cst_232 = arith.constant 0.000000e+00 : f32
    %1101 = vector.broadcast %cst_232 : f32 to vector<8x256xf32>
    %1102 = arith.maximumf %1100, %1101 : vector<8x256xf32>
    %1103 = vector.extract_strided_slice %826 {offsets = [0, 11], sizes = [8, 1], strides = [1, 1]} : vector<8x32xf32> to vector<8x1xf32>
    %1104 = arith.mulf %1093, %1102 : vector<8x256xf32>
    %1105 = vector.broadcast %1103 : vector<8x1xf32> to vector<8x256xf32>
    %1106 = arith.mulf %1105, %1104 : vector<8x256xf32>
    %1107 = arith.addf %1084, %1106 : vector<8x256xf32>
    %cst_233 = arith.constant 0.000000e+00 : f32
    %1108 = vector.broadcast %cst_233 : f32 to vector<8x128xf32>
    %1109 = vector.extract_strided_slice %824 {offsets = [0, 12], sizes = [8, 1], strides = [1, 1]} : vector<8x32xf32> to vector<8x1xf32>
    %1110 = vector.broadcast %1109 : vector<8x1xf32> to vector<8x128xf32>
    %1111 = vector.broadcast %50 : vector<1x128xf32> to vector<8x128xf32>
    %1112 = arith.subf %1110, %1111 : vector<8x128xf32>
    %1113 = math.absf %1112 : vector<8x128xf32>
    %cst_234 = arith.constant 1.000000e+00 : f32
    %1114 = vector.broadcast %cst_234 : f32 to vector<8x128xf32>
    %1115 = arith.subf %1114, %1113 : vector<8x128xf32>
    %cst_235 = arith.constant 0.000000e+00 : f32
    %1116 = vector.broadcast %cst_235 : f32 to vector<8x128xf32>
    %1117 = arith.maximumf %1115, %1116 : vector<8x128xf32>
    %1118 = vector.extract_strided_slice %825 {offsets = [0, 12], sizes = [8, 1], strides = [1, 1]} : vector<8x32xf32> to vector<8x1xf32>
    %1119 = vector.broadcast %1118 : vector<8x1xf32> to vector<8x128xf32>
    %1120 = vector.broadcast %52 : vector<1x128xf32> to vector<8x128xf32>
    %1121 = arith.subf %1119, %1120 : vector<8x128xf32>
    %1122 = math.absf %1121 : vector<8x128xf32>
    %cst_236 = arith.constant 1.000000e+00 : f32
    %1123 = vector.broadcast %cst_236 : f32 to vector<8x128xf32>
    %1124 = arith.subf %1123, %1122 : vector<8x128xf32>
    %cst_237 = arith.constant 0.000000e+00 : f32
    %1125 = vector.broadcast %cst_237 : f32 to vector<8x128xf32>
    %1126 = arith.maximumf %1124, %1125 : vector<8x128xf32>
    %1127 = vector.extract_strided_slice %826 {offsets = [0, 12], sizes = [8, 1], strides = [1, 1]} : vector<8x32xf32> to vector<8x1xf32>
    %1128 = arith.mulf %1117, %1126 : vector<8x128xf32>
    %1129 = vector.broadcast %1127 : vector<8x1xf32> to vector<8x128xf32>
    %1130 = arith.mulf %1129, %1128 : vector<8x128xf32>
    %1131 = arith.addf %1108, %1130 : vector<8x128xf32>
    %1132 = vector.extract_strided_slice %824 {offsets = [0, 13], sizes = [8, 1], strides = [1, 1]} : vector<8x32xf32> to vector<8x1xf32>
    %1133 = vector.broadcast %1132 : vector<8x1xf32> to vector<8x128xf32>
    %1134 = vector.broadcast %50 : vector<1x128xf32> to vector<8x128xf32>
    %1135 = arith.subf %1133, %1134 : vector<8x128xf32>
    %1136 = math.absf %1135 : vector<8x128xf32>
    %cst_238 = arith.constant 1.000000e+00 : f32
    %1137 = vector.broadcast %cst_238 : f32 to vector<8x128xf32>
    %1138 = arith.subf %1137, %1136 : vector<8x128xf32>
    %cst_239 = arith.constant 0.000000e+00 : f32
    %1139 = vector.broadcast %cst_239 : f32 to vector<8x128xf32>
    %1140 = arith.maximumf %1138, %1139 : vector<8x128xf32>
    %1141 = vector.extract_strided_slice %825 {offsets = [0, 13], sizes = [8, 1], strides = [1, 1]} : vector<8x32xf32> to vector<8x1xf32>
    %1142 = vector.broadcast %1141 : vector<8x1xf32> to vector<8x128xf32>
    %1143 = vector.broadcast %52 : vector<1x128xf32> to vector<8x128xf32>
    %1144 = arith.subf %1142, %1143 : vector<8x128xf32>
    %1145 = math.absf %1144 : vector<8x128xf32>
    %cst_240 = arith.constant 1.000000e+00 : f32
    %1146 = vector.broadcast %cst_240 : f32 to vector<8x128xf32>
    %1147 = arith.subf %1146, %1145 : vector<8x128xf32>
    %cst_241 = arith.constant 0.000000e+00 : f32
    %1148 = vector.broadcast %cst_241 : f32 to vector<8x128xf32>
    %1149 = arith.maximumf %1147, %1148 : vector<8x128xf32>
    %1150 = vector.extract_strided_slice %826 {offsets = [0, 13], sizes = [8, 1], strides = [1, 1]} : vector<8x32xf32> to vector<8x1xf32>
    %1151 = arith.mulf %1140, %1149 : vector<8x128xf32>
    %1152 = vector.broadcast %1150 : vector<8x1xf32> to vector<8x128xf32>
    %1153 = arith.mulf %1152, %1151 : vector<8x128xf32>
    %1154 = arith.addf %1131, %1153 : vector<8x128xf32>
    %1155 = vector.extract_strided_slice %824 {offsets = [0, 14], sizes = [8, 1], strides = [1, 1]} : vector<8x32xf32> to vector<8x1xf32>
    %1156 = vector.broadcast %1155 : vector<8x1xf32> to vector<8x128xf32>
    %1157 = vector.broadcast %50 : vector<1x128xf32> to vector<8x128xf32>
    %1158 = arith.subf %1156, %1157 : vector<8x128xf32>
    %1159 = math.absf %1158 : vector<8x128xf32>
    %cst_242 = arith.constant 1.000000e+00 : f32
    %1160 = vector.broadcast %cst_242 : f32 to vector<8x128xf32>
    %1161 = arith.subf %1160, %1159 : vector<8x128xf32>
    %cst_243 = arith.constant 0.000000e+00 : f32
    %1162 = vector.broadcast %cst_243 : f32 to vector<8x128xf32>
    %1163 = arith.maximumf %1161, %1162 : vector<8x128xf32>
    %1164 = vector.extract_strided_slice %825 {offsets = [0, 14], sizes = [8, 1], strides = [1, 1]} : vector<8x32xf32> to vector<8x1xf32>
    %1165 = vector.broadcast %1164 : vector<8x1xf32> to vector<8x128xf32>
    %1166 = vector.broadcast %52 : vector<1x128xf32> to vector<8x128xf32>
    %1167 = arith.subf %1165, %1166 : vector<8x128xf32>
    %1168 = math.absf %1167 : vector<8x128xf32>
    %cst_244 = arith.constant 1.000000e+00 : f32
    %1169 = vector.broadcast %cst_244 : f32 to vector<8x128xf32>
    %1170 = arith.subf %1169, %1168 : vector<8x128xf32>
    %cst_245 = arith.constant 0.000000e+00 : f32
    %1171 = vector.broadcast %cst_245 : f32 to vector<8x128xf32>
    %1172 = arith.maximumf %1170, %1171 : vector<8x128xf32>
    %1173 = vector.extract_strided_slice %826 {offsets = [0, 14], sizes = [8, 1], strides = [1, 1]} : vector<8x32xf32> to vector<8x1xf32>
    %1174 = arith.mulf %1163, %1172 : vector<8x128xf32>
    %1175 = vector.broadcast %1173 : vector<8x1xf32> to vector<8x128xf32>
    %1176 = arith.mulf %1175, %1174 : vector<8x128xf32>
    %1177 = arith.addf %1154, %1176 : vector<8x128xf32>
    %1178 = vector.extract_strided_slice %824 {offsets = [0, 15], sizes = [8, 1], strides = [1, 1]} : vector<8x32xf32> to vector<8x1xf32>
    %1179 = vector.broadcast %1178 : vector<8x1xf32> to vector<8x128xf32>
    %1180 = vector.broadcast %50 : vector<1x128xf32> to vector<8x128xf32>
    %1181 = arith.subf %1179, %1180 : vector<8x128xf32>
    %1182 = math.absf %1181 : vector<8x128xf32>
    %cst_246 = arith.constant 1.000000e+00 : f32
    %1183 = vector.broadcast %cst_246 : f32 to vector<8x128xf32>
    %1184 = arith.subf %1183, %1182 : vector<8x128xf32>
    %cst_247 = arith.constant 0.000000e+00 : f32
    %1185 = vector.broadcast %cst_247 : f32 to vector<8x128xf32>
    %1186 = arith.maximumf %1184, %1185 : vector<8x128xf32>
    %1187 = vector.extract_strided_slice %825 {offsets = [0, 15], sizes = [8, 1], strides = [1, 1]} : vector<8x32xf32> to vector<8x1xf32>
    %1188 = vector.broadcast %1187 : vector<8x1xf32> to vector<8x128xf32>
    %1189 = vector.broadcast %52 : vector<1x128xf32> to vector<8x128xf32>
    %1190 = arith.subf %1188, %1189 : vector<8x128xf32>
    %1191 = math.absf %1190 : vector<8x128xf32>
    %cst_248 = arith.constant 1.000000e+00 : f32
    %1192 = vector.broadcast %cst_248 : f32 to vector<8x128xf32>
    %1193 = arith.subf %1192, %1191 : vector<8x128xf32>
    %cst_249 = arith.constant 0.000000e+00 : f32
    %1194 = vector.broadcast %cst_249 : f32 to vector<8x128xf32>
    %1195 = arith.maximumf %1193, %1194 : vector<8x128xf32>
    %1196 = vector.extract_strided_slice %826 {offsets = [0, 15], sizes = [8, 1], strides = [1, 1]} : vector<8x32xf32> to vector<8x1xf32>
    %1197 = arith.mulf %1186, %1195 : vector<8x128xf32>
    %1198 = vector.broadcast %1196 : vector<8x1xf32> to vector<8x128xf32>
    %1199 = arith.mulf %1198, %1197 : vector<8x128xf32>
    %1200 = arith.addf %1177, %1199 : vector<8x128xf32>
    %1201 = tpu.concatenate %1107, %1200 in 1 : vector<8x256xf32>, vector<8x128xf32> -> vector<8x384xf32>
    %cst_250 = arith.constant 0.000000e+00 : f32
    %1202 = vector.broadcast %cst_250 : f32 to vector<8x256xf32>
    %1203 = vector.extract_strided_slice %824 {offsets = [0, 16], sizes = [8, 1], strides = [1, 1]} : vector<8x32xf32> to vector<8x1xf32>
    %1204 = vector.broadcast %1203 : vector<8x1xf32> to vector<8x256xf32>
    %1205 = vector.broadcast %49 : vector<1x256xf32> to vector<8x256xf32>
    %1206 = arith.subf %1204, %1205 : vector<8x256xf32>
    %1207 = math.absf %1206 : vector<8x256xf32>
    %cst_251 = arith.constant 1.000000e+00 : f32
    %1208 = vector.broadcast %cst_251 : f32 to vector<8x256xf32>
    %1209 = arith.subf %1208, %1207 : vector<8x256xf32>
    %cst_252 = arith.constant 0.000000e+00 : f32
    %1210 = vector.broadcast %cst_252 : f32 to vector<8x256xf32>
    %1211 = arith.maximumf %1209, %1210 : vector<8x256xf32>
    %1212 = vector.extract_strided_slice %825 {offsets = [0, 16], sizes = [8, 1], strides = [1, 1]} : vector<8x32xf32> to vector<8x1xf32>
    %1213 = vector.broadcast %1212 : vector<8x1xf32> to vector<8x256xf32>
    %1214 = vector.broadcast %51 : vector<1x256xf32> to vector<8x256xf32>
    %1215 = arith.subf %1213, %1214 : vector<8x256xf32>
    %1216 = math.absf %1215 : vector<8x256xf32>
    %cst_253 = arith.constant 1.000000e+00 : f32
    %1217 = vector.broadcast %cst_253 : f32 to vector<8x256xf32>
    %1218 = arith.subf %1217, %1216 : vector<8x256xf32>
    %cst_254 = arith.constant 0.000000e+00 : f32
    %1219 = vector.broadcast %cst_254 : f32 to vector<8x256xf32>
    %1220 = arith.maximumf %1218, %1219 : vector<8x256xf32>
    %1221 = vector.extract_strided_slice %826 {offsets = [0, 16], sizes = [8, 1], strides = [1, 1]} : vector<8x32xf32> to vector<8x1xf32>
    %1222 = arith.mulf %1211, %1220 : vector<8x256xf32>
    %1223 = vector.broadcast %1221 : vector<8x1xf32> to vector<8x256xf32>
    %1224 = arith.mulf %1223, %1222 : vector<8x256xf32>
    %1225 = arith.addf %1202, %1224 : vector<8x256xf32>
    %1226 = vector.extract_strided_slice %824 {offsets = [0, 17], sizes = [8, 1], strides = [1, 1]} : vector<8x32xf32> to vector<8x1xf32>
    %1227 = vector.broadcast %1226 : vector<8x1xf32> to vector<8x256xf32>
    %1228 = vector.broadcast %49 : vector<1x256xf32> to vector<8x256xf32>
    %1229 = arith.subf %1227, %1228 : vector<8x256xf32>
    %1230 = math.absf %1229 : vector<8x256xf32>
    %cst_255 = arith.constant 1.000000e+00 : f32
    %1231 = vector.broadcast %cst_255 : f32 to vector<8x256xf32>
    %1232 = arith.subf %1231, %1230 : vector<8x256xf32>
    %cst_256 = arith.constant 0.000000e+00 : f32
    %1233 = vector.broadcast %cst_256 : f32 to vector<8x256xf32>
    %1234 = arith.maximumf %1232, %1233 : vector<8x256xf32>
    %1235 = vector.extract_strided_slice %825 {offsets = [0, 17], sizes = [8, 1], strides = [1, 1]} : vector<8x32xf32> to vector<8x1xf32>
    %1236 = vector.broadcast %1235 : vector<8x1xf32> to vector<8x256xf32>
    %1237 = vector.broadcast %51 : vector<1x256xf32> to vector<8x256xf32>
    %1238 = arith.subf %1236, %1237 : vector<8x256xf32>
    %1239 = math.absf %1238 : vector<8x256xf32>
    %cst_257 = arith.constant 1.000000e+00 : f32
    %1240 = vector.broadcast %cst_257 : f32 to vector<8x256xf32>
    %1241 = arith.subf %1240, %1239 : vector<8x256xf32>
    %cst_258 = arith.constant 0.000000e+00 : f32
    %1242 = vector.broadcast %cst_258 : f32 to vector<8x256xf32>
    %1243 = arith.maximumf %1241, %1242 : vector<8x256xf32>
    %1244 = vector.extract_strided_slice %826 {offsets = [0, 17], sizes = [8, 1], strides = [1, 1]} : vector<8x32xf32> to vector<8x1xf32>
    %1245 = arith.mulf %1234, %1243 : vector<8x256xf32>
    %1246 = vector.broadcast %1244 : vector<8x1xf32> to vector<8x256xf32>
    %1247 = arith.mulf %1246, %1245 : vector<8x256xf32>
    %1248 = arith.addf %1225, %1247 : vector<8x256xf32>
    %1249 = vector.extract_strided_slice %824 {offsets = [0, 18], sizes = [8, 1], strides = [1, 1]} : vector<8x32xf32> to vector<8x1xf32>
    %1250 = vector.broadcast %1249 : vector<8x1xf32> to vector<8x256xf32>
    %1251 = vector.broadcast %49 : vector<1x256xf32> to vector<8x256xf32>
    %1252 = arith.subf %1250, %1251 : vector<8x256xf32>
    %1253 = math.absf %1252 : vector<8x256xf32>
    %cst_259 = arith.constant 1.000000e+00 : f32
    %1254 = vector.broadcast %cst_259 : f32 to vector<8x256xf32>
    %1255 = arith.subf %1254, %1253 : vector<8x256xf32>
    %cst_260 = arith.constant 0.000000e+00 : f32
    %1256 = vector.broadcast %cst_260 : f32 to vector<8x256xf32>
    %1257 = arith.maximumf %1255, %1256 : vector<8x256xf32>
    %1258 = vector.extract_strided_slice %825 {offsets = [0, 18], sizes = [8, 1], strides = [1, 1]} : vector<8x32xf32> to vector<8x1xf32>
    %1259 = vector.broadcast %1258 : vector<8x1xf32> to vector<8x256xf32>
    %1260 = vector.broadcast %51 : vector<1x256xf32> to vector<8x256xf32>
    %1261 = arith.subf %1259, %1260 : vector<8x256xf32>
    %1262 = math.absf %1261 : vector<8x256xf32>
    %cst_261 = arith.constant 1.000000e+00 : f32
    %1263 = vector.broadcast %cst_261 : f32 to vector<8x256xf32>
    %1264 = arith.subf %1263, %1262 : vector<8x256xf32>
    %cst_262 = arith.constant 0.000000e+00 : f32
    %1265 = vector.broadcast %cst_262 : f32 to vector<8x256xf32>
    %1266 = arith.maximumf %1264, %1265 : vector<8x256xf32>
    %1267 = vector.extract_strided_slice %826 {offsets = [0, 18], sizes = [8, 1], strides = [1, 1]} : vector<8x32xf32> to vector<8x1xf32>
    %1268 = arith.mulf %1257, %1266 : vector<8x256xf32>
    %1269 = vector.broadcast %1267 : vector<8x1xf32> to vector<8x256xf32>
    %1270 = arith.mulf %1269, %1268 : vector<8x256xf32>
    %1271 = arith.addf %1248, %1270 : vector<8x256xf32>
    %1272 = vector.extract_strided_slice %824 {offsets = [0, 19], sizes = [8, 1], strides = [1, 1]} : vector<8x32xf32> to vector<8x1xf32>
    %1273 = vector.broadcast %1272 : vector<8x1xf32> to vector<8x256xf32>
    %1274 = vector.broadcast %49 : vector<1x256xf32> to vector<8x256xf32>
    %1275 = arith.subf %1273, %1274 : vector<8x256xf32>
    %1276 = math.absf %1275 : vector<8x256xf32>
    %cst_263 = arith.constant 1.000000e+00 : f32
    %1277 = vector.broadcast %cst_263 : f32 to vector<8x256xf32>
    %1278 = arith.subf %1277, %1276 : vector<8x256xf32>
    %cst_264 = arith.constant 0.000000e+00 : f32
    %1279 = vector.broadcast %cst_264 : f32 to vector<8x256xf32>
    %1280 = arith.maximumf %1278, %1279 : vector<8x256xf32>
    %1281 = vector.extract_strided_slice %825 {offsets = [0, 19], sizes = [8, 1], strides = [1, 1]} : vector<8x32xf32> to vector<8x1xf32>
    %1282 = vector.broadcast %1281 : vector<8x1xf32> to vector<8x256xf32>
    %1283 = vector.broadcast %51 : vector<1x256xf32> to vector<8x256xf32>
    %1284 = arith.subf %1282, %1283 : vector<8x256xf32>
    %1285 = math.absf %1284 : vector<8x256xf32>
    %cst_265 = arith.constant 1.000000e+00 : f32
    %1286 = vector.broadcast %cst_265 : f32 to vector<8x256xf32>
    %1287 = arith.subf %1286, %1285 : vector<8x256xf32>
    %cst_266 = arith.constant 0.000000e+00 : f32
    %1288 = vector.broadcast %cst_266 : f32 to vector<8x256xf32>
    %1289 = arith.maximumf %1287, %1288 : vector<8x256xf32>
    %1290 = vector.extract_strided_slice %826 {offsets = [0, 19], sizes = [8, 1], strides = [1, 1]} : vector<8x32xf32> to vector<8x1xf32>
    %1291 = arith.mulf %1280, %1289 : vector<8x256xf32>
    %1292 = vector.broadcast %1290 : vector<8x1xf32> to vector<8x256xf32>
    %1293 = arith.mulf %1292, %1291 : vector<8x256xf32>
    %1294 = arith.addf %1271, %1293 : vector<8x256xf32>
    %cst_267 = arith.constant 0.000000e+00 : f32
    %1295 = vector.broadcast %cst_267 : f32 to vector<8x128xf32>
    %1296 = vector.extract_strided_slice %824 {offsets = [0, 20], sizes = [8, 1], strides = [1, 1]} : vector<8x32xf32> to vector<8x1xf32>
    %1297 = vector.broadcast %1296 : vector<8x1xf32> to vector<8x128xf32>
    %1298 = vector.broadcast %50 : vector<1x128xf32> to vector<8x128xf32>
    %1299 = arith.subf %1297, %1298 : vector<8x128xf32>
    %1300 = math.absf %1299 : vector<8x128xf32>
    %cst_268 = arith.constant 1.000000e+00 : f32
    %1301 = vector.broadcast %cst_268 : f32 to vector<8x128xf32>
    %1302 = arith.subf %1301, %1300 : vector<8x128xf32>
    %cst_269 = arith.constant 0.000000e+00 : f32
    %1303 = vector.broadcast %cst_269 : f32 to vector<8x128xf32>
    %1304 = arith.maximumf %1302, %1303 : vector<8x128xf32>
    %1305 = vector.extract_strided_slice %825 {offsets = [0, 20], sizes = [8, 1], strides = [1, 1]} : vector<8x32xf32> to vector<8x1xf32>
    %1306 = vector.broadcast %1305 : vector<8x1xf32> to vector<8x128xf32>
    %1307 = vector.broadcast %52 : vector<1x128xf32> to vector<8x128xf32>
    %1308 = arith.subf %1306, %1307 : vector<8x128xf32>
    %1309 = math.absf %1308 : vector<8x128xf32>
    %cst_270 = arith.constant 1.000000e+00 : f32
    %1310 = vector.broadcast %cst_270 : f32 to vector<8x128xf32>
    %1311 = arith.subf %1310, %1309 : vector<8x128xf32>
    %cst_271 = arith.constant 0.000000e+00 : f32
    %1312 = vector.broadcast %cst_271 : f32 to vector<8x128xf32>
    %1313 = arith.maximumf %1311, %1312 : vector<8x128xf32>
    %1314 = vector.extract_strided_slice %826 {offsets = [0, 20], sizes = [8, 1], strides = [1, 1]} : vector<8x32xf32> to vector<8x1xf32>
    %1315 = arith.mulf %1304, %1313 : vector<8x128xf32>
    %1316 = vector.broadcast %1314 : vector<8x1xf32> to vector<8x128xf32>
    %1317 = arith.mulf %1316, %1315 : vector<8x128xf32>
    %1318 = arith.addf %1295, %1317 : vector<8x128xf32>
    %1319 = vector.extract_strided_slice %824 {offsets = [0, 21], sizes = [8, 1], strides = [1, 1]} : vector<8x32xf32> to vector<8x1xf32>
    %1320 = vector.broadcast %1319 : vector<8x1xf32> to vector<8x128xf32>
    %1321 = vector.broadcast %50 : vector<1x128xf32> to vector<8x128xf32>
    %1322 = arith.subf %1320, %1321 : vector<8x128xf32>
    %1323 = math.absf %1322 : vector<8x128xf32>
    %cst_272 = arith.constant 1.000000e+00 : f32
    %1324 = vector.broadcast %cst_272 : f32 to vector<8x128xf32>
    %1325 = arith.subf %1324, %1323 : vector<8x128xf32>
    %cst_273 = arith.constant 0.000000e+00 : f32
    %1326 = vector.broadcast %cst_273 : f32 to vector<8x128xf32>
    %1327 = arith.maximumf %1325, %1326 : vector<8x128xf32>
    %1328 = vector.extract_strided_slice %825 {offsets = [0, 21], sizes = [8, 1], strides = [1, 1]} : vector<8x32xf32> to vector<8x1xf32>
    %1329 = vector.broadcast %1328 : vector<8x1xf32> to vector<8x128xf32>
    %1330 = vector.broadcast %52 : vector<1x128xf32> to vector<8x128xf32>
    %1331 = arith.subf %1329, %1330 : vector<8x128xf32>
    %1332 = math.absf %1331 : vector<8x128xf32>
    %cst_274 = arith.constant 1.000000e+00 : f32
    %1333 = vector.broadcast %cst_274 : f32 to vector<8x128xf32>
    %1334 = arith.subf %1333, %1332 : vector<8x128xf32>
    %cst_275 = arith.constant 0.000000e+00 : f32
    %1335 = vector.broadcast %cst_275 : f32 to vector<8x128xf32>
    %1336 = arith.maximumf %1334, %1335 : vector<8x128xf32>
    %1337 = vector.extract_strided_slice %826 {offsets = [0, 21], sizes = [8, 1], strides = [1, 1]} : vector<8x32xf32> to vector<8x1xf32>
    %1338 = arith.mulf %1327, %1336 : vector<8x128xf32>
    %1339 = vector.broadcast %1337 : vector<8x1xf32> to vector<8x128xf32>
    %1340 = arith.mulf %1339, %1338 : vector<8x128xf32>
    %1341 = arith.addf %1318, %1340 : vector<8x128xf32>
    %1342 = vector.extract_strided_slice %824 {offsets = [0, 22], sizes = [8, 1], strides = [1, 1]} : vector<8x32xf32> to vector<8x1xf32>
    %1343 = vector.broadcast %1342 : vector<8x1xf32> to vector<8x128xf32>
    %1344 = vector.broadcast %50 : vector<1x128xf32> to vector<8x128xf32>
    %1345 = arith.subf %1343, %1344 : vector<8x128xf32>
    %1346 = math.absf %1345 : vector<8x128xf32>
    %cst_276 = arith.constant 1.000000e+00 : f32
    %1347 = vector.broadcast %cst_276 : f32 to vector<8x128xf32>
    %1348 = arith.subf %1347, %1346 : vector<8x128xf32>
    %cst_277 = arith.constant 0.000000e+00 : f32
    %1349 = vector.broadcast %cst_277 : f32 to vector<8x128xf32>
    %1350 = arith.maximumf %1348, %1349 : vector<8x128xf32>
    %1351 = vector.extract_strided_slice %825 {offsets = [0, 22], sizes = [8, 1], strides = [1, 1]} : vector<8x32xf32> to vector<8x1xf32>
    %1352 = vector.broadcast %1351 : vector<8x1xf32> to vector<8x128xf32>
    %1353 = vector.broadcast %52 : vector<1x128xf32> to vector<8x128xf32>
    %1354 = arith.subf %1352, %1353 : vector<8x128xf32>
    %1355 = math.absf %1354 : vector<8x128xf32>
    %cst_278 = arith.constant 1.000000e+00 : f32
    %1356 = vector.broadcast %cst_278 : f32 to vector<8x128xf32>
    %1357 = arith.subf %1356, %1355 : vector<8x128xf32>
    %cst_279 = arith.constant 0.000000e+00 : f32
    %1358 = vector.broadcast %cst_279 : f32 to vector<8x128xf32>
    %1359 = arith.maximumf %1357, %1358 : vector<8x128xf32>
    %1360 = vector.extract_strided_slice %826 {offsets = [0, 22], sizes = [8, 1], strides = [1, 1]} : vector<8x32xf32> to vector<8x1xf32>
    %1361 = arith.mulf %1350, %1359 : vector<8x128xf32>
    %1362 = vector.broadcast %1360 : vector<8x1xf32> to vector<8x128xf32>
    %1363 = arith.mulf %1362, %1361 : vector<8x128xf32>
    %1364 = arith.addf %1341, %1363 : vector<8x128xf32>
    %1365 = vector.extract_strided_slice %824 {offsets = [0, 23], sizes = [8, 1], strides = [1, 1]} : vector<8x32xf32> to vector<8x1xf32>
    %1366 = vector.broadcast %1365 : vector<8x1xf32> to vector<8x128xf32>
    %1367 = vector.broadcast %50 : vector<1x128xf32> to vector<8x128xf32>
    %1368 = arith.subf %1366, %1367 : vector<8x128xf32>
    %1369 = math.absf %1368 : vector<8x128xf32>
    %cst_280 = arith.constant 1.000000e+00 : f32
    %1370 = vector.broadcast %cst_280 : f32 to vector<8x128xf32>
    %1371 = arith.subf %1370, %1369 : vector<8x128xf32>
    %cst_281 = arith.constant 0.000000e+00 : f32
    %1372 = vector.broadcast %cst_281 : f32 to vector<8x128xf32>
    %1373 = arith.maximumf %1371, %1372 : vector<8x128xf32>
    %1374 = vector.extract_strided_slice %825 {offsets = [0, 23], sizes = [8, 1], strides = [1, 1]} : vector<8x32xf32> to vector<8x1xf32>
    %1375 = vector.broadcast %1374 : vector<8x1xf32> to vector<8x128xf32>
    %1376 = vector.broadcast %52 : vector<1x128xf32> to vector<8x128xf32>
    %1377 = arith.subf %1375, %1376 : vector<8x128xf32>
    %1378 = math.absf %1377 : vector<8x128xf32>
    %cst_282 = arith.constant 1.000000e+00 : f32
    %1379 = vector.broadcast %cst_282 : f32 to vector<8x128xf32>
    %1380 = arith.subf %1379, %1378 : vector<8x128xf32>
    %cst_283 = arith.constant 0.000000e+00 : f32
    %1381 = vector.broadcast %cst_283 : f32 to vector<8x128xf32>
    %1382 = arith.maximumf %1380, %1381 : vector<8x128xf32>
    %1383 = vector.extract_strided_slice %826 {offsets = [0, 23], sizes = [8, 1], strides = [1, 1]} : vector<8x32xf32> to vector<8x1xf32>
    %1384 = arith.mulf %1373, %1382 : vector<8x128xf32>
    %1385 = vector.broadcast %1383 : vector<8x1xf32> to vector<8x128xf32>
    %1386 = arith.mulf %1385, %1384 : vector<8x128xf32>
    %1387 = arith.addf %1364, %1386 : vector<8x128xf32>
    %1388 = tpu.concatenate %1294, %1387 in 1 : vector<8x256xf32>, vector<8x128xf32> -> vector<8x384xf32>
    %cst_284 = arith.constant 0.000000e+00 : f32
    %1389 = vector.broadcast %cst_284 : f32 to vector<8x256xf32>
    %1390 = vector.extract_strided_slice %824 {offsets = [0, 24], sizes = [8, 1], strides = [1, 1]} : vector<8x32xf32> to vector<8x1xf32>
    %1391 = vector.broadcast %1390 : vector<8x1xf32> to vector<8x256xf32>
    %1392 = vector.broadcast %49 : vector<1x256xf32> to vector<8x256xf32>
    %1393 = arith.subf %1391, %1392 : vector<8x256xf32>
    %1394 = math.absf %1393 : vector<8x256xf32>
    %cst_285 = arith.constant 1.000000e+00 : f32
    %1395 = vector.broadcast %cst_285 : f32 to vector<8x256xf32>
    %1396 = arith.subf %1395, %1394 : vector<8x256xf32>
    %cst_286 = arith.constant 0.000000e+00 : f32
    %1397 = vector.broadcast %cst_286 : f32 to vector<8x256xf32>
    %1398 = arith.maximumf %1396, %1397 : vector<8x256xf32>
    %1399 = vector.extract_strided_slice %825 {offsets = [0, 24], sizes = [8, 1], strides = [1, 1]} : vector<8x32xf32> to vector<8x1xf32>
    %1400 = vector.broadcast %1399 : vector<8x1xf32> to vector<8x256xf32>
    %1401 = vector.broadcast %51 : vector<1x256xf32> to vector<8x256xf32>
    %1402 = arith.subf %1400, %1401 : vector<8x256xf32>
    %1403 = math.absf %1402 : vector<8x256xf32>
    %cst_287 = arith.constant 1.000000e+00 : f32
    %1404 = vector.broadcast %cst_287 : f32 to vector<8x256xf32>
    %1405 = arith.subf %1404, %1403 : vector<8x256xf32>
    %cst_288 = arith.constant 0.000000e+00 : f32
    %1406 = vector.broadcast %cst_288 : f32 to vector<8x256xf32>
    %1407 = arith.maximumf %1405, %1406 : vector<8x256xf32>
    %1408 = vector.extract_strided_slice %826 {offsets = [0, 24], sizes = [8, 1], strides = [1, 1]} : vector<8x32xf32> to vector<8x1xf32>
    %1409 = arith.mulf %1398, %1407 : vector<8x256xf32>
    %1410 = vector.broadcast %1408 : vector<8x1xf32> to vector<8x256xf32>
    %1411 = arith.mulf %1410, %1409 : vector<8x256xf32>
    %1412 = arith.addf %1389, %1411 : vector<8x256xf32>
    %1413 = vector.extract_strided_slice %824 {offsets = [0, 25], sizes = [8, 1], strides = [1, 1]} : vector<8x32xf32> to vector<8x1xf32>
    %1414 = vector.broadcast %1413 : vector<8x1xf32> to vector<8x256xf32>
    %1415 = vector.broadcast %49 : vector<1x256xf32> to vector<8x256xf32>
    %1416 = arith.subf %1414, %1415 : vector<8x256xf32>
    %1417 = math.absf %1416 : vector<8x256xf32>
    %cst_289 = arith.constant 1.000000e+00 : f32
    %1418 = vector.broadcast %cst_289 : f32 to vector<8x256xf32>
    %1419 = arith.subf %1418, %1417 : vector<8x256xf32>
    %cst_290 = arith.constant 0.000000e+00 : f32
    %1420 = vector.broadcast %cst_290 : f32 to vector<8x256xf32>
    %1421 = arith.maximumf %1419, %1420 : vector<8x256xf32>
    %1422 = vector.extract_strided_slice %825 {offsets = [0, 25], sizes = [8, 1], strides = [1, 1]} : vector<8x32xf32> to vector<8x1xf32>
    %1423 = vector.broadcast %1422 : vector<8x1xf32> to vector<8x256xf32>
    %1424 = vector.broadcast %51 : vector<1x256xf32> to vector<8x256xf32>
    %1425 = arith.subf %1423, %1424 : vector<8x256xf32>
    %1426 = math.absf %1425 : vector<8x256xf32>
    %cst_291 = arith.constant 1.000000e+00 : f32
    %1427 = vector.broadcast %cst_291 : f32 to vector<8x256xf32>
    %1428 = arith.subf %1427, %1426 : vector<8x256xf32>
    %cst_292 = arith.constant 0.000000e+00 : f32
    %1429 = vector.broadcast %cst_292 : f32 to vector<8x256xf32>
    %1430 = arith.maximumf %1428, %1429 : vector<8x256xf32>
    %1431 = vector.extract_strided_slice %826 {offsets = [0, 25], sizes = [8, 1], strides = [1, 1]} : vector<8x32xf32> to vector<8x1xf32>
    %1432 = arith.mulf %1421, %1430 : vector<8x256xf32>
    %1433 = vector.broadcast %1431 : vector<8x1xf32> to vector<8x256xf32>
    %1434 = arith.mulf %1433, %1432 : vector<8x256xf32>
    %1435 = arith.addf %1412, %1434 : vector<8x256xf32>
    %1436 = vector.extract_strided_slice %824 {offsets = [0, 26], sizes = [8, 1], strides = [1, 1]} : vector<8x32xf32> to vector<8x1xf32>
    %1437 = vector.broadcast %1436 : vector<8x1xf32> to vector<8x256xf32>
    %1438 = vector.broadcast %49 : vector<1x256xf32> to vector<8x256xf32>
    %1439 = arith.subf %1437, %1438 : vector<8x256xf32>
    %1440 = math.absf %1439 : vector<8x256xf32>
    %cst_293 = arith.constant 1.000000e+00 : f32
    %1441 = vector.broadcast %cst_293 : f32 to vector<8x256xf32>
    %1442 = arith.subf %1441, %1440 : vector<8x256xf32>
    %cst_294 = arith.constant 0.000000e+00 : f32
    %1443 = vector.broadcast %cst_294 : f32 to vector<8x256xf32>
    %1444 = arith.maximumf %1442, %1443 : vector<8x256xf32>
    %1445 = vector.extract_strided_slice %825 {offsets = [0, 26], sizes = [8, 1], strides = [1, 1]} : vector<8x32xf32> to vector<8x1xf32>
    %1446 = vector.broadcast %1445 : vector<8x1xf32> to vector<8x256xf32>
    %1447 = vector.broadcast %51 : vector<1x256xf32> to vector<8x256xf32>
    %1448 = arith.subf %1446, %1447 : vector<8x256xf32>
    %1449 = math.absf %1448 : vector<8x256xf32>
    %cst_295 = arith.constant 1.000000e+00 : f32
    %1450 = vector.broadcast %cst_295 : f32 to vector<8x256xf32>
    %1451 = arith.subf %1450, %1449 : vector<8x256xf32>
    %cst_296 = arith.constant 0.000000e+00 : f32
    %1452 = vector.broadcast %cst_296 : f32 to vector<8x256xf32>
    %1453 = arith.maximumf %1451, %1452 : vector<8x256xf32>
    %1454 = vector.extract_strided_slice %826 {offsets = [0, 26], sizes = [8, 1], strides = [1, 1]} : vector<8x32xf32> to vector<8x1xf32>
    %1455 = arith.mulf %1444, %1453 : vector<8x256xf32>
    %1456 = vector.broadcast %1454 : vector<8x1xf32> to vector<8x256xf32>
    %1457 = arith.mulf %1456, %1455 : vector<8x256xf32>
    %1458 = arith.addf %1435, %1457 : vector<8x256xf32>
    %1459 = vector.extract_strided_slice %824 {offsets = [0, 27], sizes = [8, 1], strides = [1, 1]} : vector<8x32xf32> to vector<8x1xf32>
    %1460 = vector.broadcast %1459 : vector<8x1xf32> to vector<8x256xf32>
    %1461 = vector.broadcast %49 : vector<1x256xf32> to vector<8x256xf32>
    %1462 = arith.subf %1460, %1461 : vector<8x256xf32>
    %1463 = math.absf %1462 : vector<8x256xf32>
    %cst_297 = arith.constant 1.000000e+00 : f32
    %1464 = vector.broadcast %cst_297 : f32 to vector<8x256xf32>
    %1465 = arith.subf %1464, %1463 : vector<8x256xf32>
    %cst_298 = arith.constant 0.000000e+00 : f32
    %1466 = vector.broadcast %cst_298 : f32 to vector<8x256xf32>
    %1467 = arith.maximumf %1465, %1466 : vector<8x256xf32>
    %1468 = vector.extract_strided_slice %825 {offsets = [0, 27], sizes = [8, 1], strides = [1, 1]} : vector<8x32xf32> to vector<8x1xf32>
    %1469 = vector.broadcast %1468 : vector<8x1xf32> to vector<8x256xf32>
    %1470 = vector.broadcast %51 : vector<1x256xf32> to vector<8x256xf32>
    %1471 = arith.subf %1469, %1470 : vector<8x256xf32>
    %1472 = math.absf %1471 : vector<8x256xf32>
    %cst_299 = arith.constant 1.000000e+00 : f32
    %1473 = vector.broadcast %cst_299 : f32 to vector<8x256xf32>
    %1474 = arith.subf %1473, %1472 : vector<8x256xf32>
    %cst_300 = arith.constant 0.000000e+00 : f32
    %1475 = vector.broadcast %cst_300 : f32 to vector<8x256xf32>
    %1476 = arith.maximumf %1474, %1475 : vector<8x256xf32>
    %1477 = vector.extract_strided_slice %826 {offsets = [0, 27], sizes = [8, 1], strides = [1, 1]} : vector<8x32xf32> to vector<8x1xf32>
    %1478 = arith.mulf %1467, %1476 : vector<8x256xf32>
    %1479 = vector.broadcast %1477 : vector<8x1xf32> to vector<8x256xf32>
    %1480 = arith.mulf %1479, %1478 : vector<8x256xf32>
    %1481 = arith.addf %1458, %1480 : vector<8x256xf32>
    %cst_301 = arith.constant 0.000000e+00 : f32
    %1482 = vector.broadcast %cst_301 : f32 to vector<8x128xf32>
    %1483 = vector.extract_strided_slice %824 {offsets = [0, 28], sizes = [8, 1], strides = [1, 1]} : vector<8x32xf32> to vector<8x1xf32>
    %1484 = vector.broadcast %1483 : vector<8x1xf32> to vector<8x128xf32>
    %1485 = vector.broadcast %50 : vector<1x128xf32> to vector<8x128xf32>
    %1486 = arith.subf %1484, %1485 : vector<8x128xf32>
    %1487 = math.absf %1486 : vector<8x128xf32>
    %cst_302 = arith.constant 1.000000e+00 : f32
    %1488 = vector.broadcast %cst_302 : f32 to vector<8x128xf32>
    %1489 = arith.subf %1488, %1487 : vector<8x128xf32>
    %cst_303 = arith.constant 0.000000e+00 : f32
    %1490 = vector.broadcast %cst_303 : f32 to vector<8x128xf32>
    %1491 = arith.maximumf %1489, %1490 : vector<8x128xf32>
    %1492 = vector.extract_strided_slice %825 {offsets = [0, 28], sizes = [8, 1], strides = [1, 1]} : vector<8x32xf32> to vector<8x1xf32>
    %1493 = vector.broadcast %1492 : vector<8x1xf32> to vector<8x128xf32>
    %1494 = vector.broadcast %52 : vector<1x128xf32> to vector<8x128xf32>
    %1495 = arith.subf %1493, %1494 : vector<8x128xf32>
    %1496 = math.absf %1495 : vector<8x128xf32>
    %cst_304 = arith.constant 1.000000e+00 : f32
    %1497 = vector.broadcast %cst_304 : f32 to vector<8x128xf32>
    %1498 = arith.subf %1497, %1496 : vector<8x128xf32>
    %cst_305 = arith.constant 0.000000e+00 : f32
    %1499 = vector.broadcast %cst_305 : f32 to vector<8x128xf32>
    %1500 = arith.maximumf %1498, %1499 : vector<8x128xf32>
    %1501 = vector.extract_strided_slice %826 {offsets = [0, 28], sizes = [8, 1], strides = [1, 1]} : vector<8x32xf32> to vector<8x1xf32>
    %1502 = arith.mulf %1491, %1500 : vector<8x128xf32>
    %1503 = vector.broadcast %1501 : vector<8x1xf32> to vector<8x128xf32>
    %1504 = arith.mulf %1503, %1502 : vector<8x128xf32>
    %1505 = arith.addf %1482, %1504 : vector<8x128xf32>
    %1506 = vector.extract_strided_slice %824 {offsets = [0, 29], sizes = [8, 1], strides = [1, 1]} : vector<8x32xf32> to vector<8x1xf32>
    %1507 = vector.broadcast %1506 : vector<8x1xf32> to vector<8x128xf32>
    %1508 = vector.broadcast %50 : vector<1x128xf32> to vector<8x128xf32>
    %1509 = arith.subf %1507, %1508 : vector<8x128xf32>
    %1510 = math.absf %1509 : vector<8x128xf32>
    %cst_306 = arith.constant 1.000000e+00 : f32
    %1511 = vector.broadcast %cst_306 : f32 to vector<8x128xf32>
    %1512 = arith.subf %1511, %1510 : vector<8x128xf32>
    %cst_307 = arith.constant 0.000000e+00 : f32
    %1513 = vector.broadcast %cst_307 : f32 to vector<8x128xf32>
    %1514 = arith.maximumf %1512, %1513 : vector<8x128xf32>
    %1515 = vector.extract_strided_slice %825 {offsets = [0, 29], sizes = [8, 1], strides = [1, 1]} : vector<8x32xf32> to vector<8x1xf32>
    %1516 = vector.broadcast %1515 : vector<8x1xf32> to vector<8x128xf32>
    %1517 = vector.broadcast %52 : vector<1x128xf32> to vector<8x128xf32>
    %1518 = arith.subf %1516, %1517 : vector<8x128xf32>
    %1519 = math.absf %1518 : vector<8x128xf32>
    %cst_308 = arith.constant 1.000000e+00 : f32
    %1520 = vector.broadcast %cst_308 : f32 to vector<8x128xf32>
    %1521 = arith.subf %1520, %1519 : vector<8x128xf32>
    %cst_309 = arith.constant 0.000000e+00 : f32
    %1522 = vector.broadcast %cst_309 : f32 to vector<8x128xf32>
    %1523 = arith.maximumf %1521, %1522 : vector<8x128xf32>
    %1524 = vector.extract_strided_slice %826 {offsets = [0, 29], sizes = [8, 1], strides = [1, 1]} : vector<8x32xf32> to vector<8x1xf32>
    %1525 = arith.mulf %1514, %1523 : vector<8x128xf32>
    %1526 = vector.broadcast %1524 : vector<8x1xf32> to vector<8x128xf32>
    %1527 = arith.mulf %1526, %1525 : vector<8x128xf32>
    %1528 = arith.addf %1505, %1527 : vector<8x128xf32>
    %1529 = vector.extract_strided_slice %824 {offsets = [0, 30], sizes = [8, 1], strides = [1, 1]} : vector<8x32xf32> to vector<8x1xf32>
    %1530 = vector.broadcast %1529 : vector<8x1xf32> to vector<8x128xf32>
    %1531 = vector.broadcast %50 : vector<1x128xf32> to vector<8x128xf32>
    %1532 = arith.subf %1530, %1531 : vector<8x128xf32>
    %1533 = math.absf %1532 : vector<8x128xf32>
    %cst_310 = arith.constant 1.000000e+00 : f32
    %1534 = vector.broadcast %cst_310 : f32 to vector<8x128xf32>
    %1535 = arith.subf %1534, %1533 : vector<8x128xf32>
    %cst_311 = arith.constant 0.000000e+00 : f32
    %1536 = vector.broadcast %cst_311 : f32 to vector<8x128xf32>
    %1537 = arith.maximumf %1535, %1536 : vector<8x128xf32>
    %1538 = vector.extract_strided_slice %825 {offsets = [0, 30], sizes = [8, 1], strides = [1, 1]} : vector<8x32xf32> to vector<8x1xf32>
    %1539 = vector.broadcast %1538 : vector<8x1xf32> to vector<8x128xf32>
    %1540 = vector.broadcast %52 : vector<1x128xf32> to vector<8x128xf32>
    %1541 = arith.subf %1539, %1540 : vector<8x128xf32>
    %1542 = math.absf %1541 : vector<8x128xf32>
    %cst_312 = arith.constant 1.000000e+00 : f32
    %1543 = vector.broadcast %cst_312 : f32 to vector<8x128xf32>
    %1544 = arith.subf %1543, %1542 : vector<8x128xf32>
    %cst_313 = arith.constant 0.000000e+00 : f32
    %1545 = vector.broadcast %cst_313 : f32 to vector<8x128xf32>
    %1546 = arith.maximumf %1544, %1545 : vector<8x128xf32>
    %1547 = vector.extract_strided_slice %826 {offsets = [0, 30], sizes = [8, 1], strides = [1, 1]} : vector<8x32xf32> to vector<8x1xf32>
    %1548 = arith.mulf %1537, %1546 : vector<8x128xf32>
    %1549 = vector.broadcast %1547 : vector<8x1xf32> to vector<8x128xf32>
    %1550 = arith.mulf %1549, %1548 : vector<8x128xf32>
    %1551 = arith.addf %1528, %1550 : vector<8x128xf32>
    %1552 = vector.extract_strided_slice %824 {offsets = [0, 31], sizes = [8, 1], strides = [1, 1]} : vector<8x32xf32> to vector<8x1xf32>
    %1553 = vector.broadcast %1552 : vector<8x1xf32> to vector<8x128xf32>
    %1554 = vector.broadcast %50 : vector<1x128xf32> to vector<8x128xf32>
    %1555 = arith.subf %1553, %1554 : vector<8x128xf32>
    %1556 = math.absf %1555 : vector<8x128xf32>
    %cst_314 = arith.constant 1.000000e+00 : f32
    %1557 = vector.broadcast %cst_314 : f32 to vector<8x128xf32>
    %1558 = arith.subf %1557, %1556 : vector<8x128xf32>
    %cst_315 = arith.constant 0.000000e+00 : f32
    %1559 = vector.broadcast %cst_315 : f32 to vector<8x128xf32>
    %1560 = arith.maximumf %1558, %1559 : vector<8x128xf32>
    %1561 = vector.extract_strided_slice %825 {offsets = [0, 31], sizes = [8, 1], strides = [1, 1]} : vector<8x32xf32> to vector<8x1xf32>
    %1562 = vector.broadcast %1561 : vector<8x1xf32> to vector<8x128xf32>
    %1563 = vector.broadcast %52 : vector<1x128xf32> to vector<8x128xf32>
    %1564 = arith.subf %1562, %1563 : vector<8x128xf32>
    %1565 = math.absf %1564 : vector<8x128xf32>
    %cst_316 = arith.constant 1.000000e+00 : f32
    %1566 = vector.broadcast %cst_316 : f32 to vector<8x128xf32>
    %1567 = arith.subf %1566, %1565 : vector<8x128xf32>
    %cst_317 = arith.constant 0.000000e+00 : f32
    %1568 = vector.broadcast %cst_317 : f32 to vector<8x128xf32>
    %1569 = arith.maximumf %1567, %1568 : vector<8x128xf32>
    %1570 = vector.extract_strided_slice %826 {offsets = [0, 31], sizes = [8, 1], strides = [1, 1]} : vector<8x32xf32> to vector<8x1xf32>
    %1571 = arith.mulf %1560, %1569 : vector<8x128xf32>
    %1572 = vector.broadcast %1570 : vector<8x1xf32> to vector<8x128xf32>
    %1573 = arith.mulf %1572, %1571 : vector<8x128xf32>
    %1574 = arith.addf %1551, %1573 : vector<8x128xf32>
    %1575 = tpu.concatenate %1481, %1574 in 1 : vector<8x256xf32>, vector<8x128xf32> -> vector<8x384xf32>
    %1576 = tpu.concatenate %1014, %1201, %1388, %1575 in 0 : vector<8x384xf32>, vector<8x384xf32>, vector<8x384xf32>, vector<8x384xf32> -> vector<32x384xf32>
    %cst_318 = arith.constant dense<0.000000e+00> : vector<32x32xf32>
    %1577 = tpu.matmul %1576, %827, %cst_318 {dimension_numbers = #tpu.dot_dimension_numbers<[1], [0], [0], [1], [0, 0, 1, 1], [], []>} : vector<32x384xf32>, vector<384x32xf32>, vector<32x32xf32> -> vector<32x32xf32>
    %1578 = arith.mulf %1577, %53 : vector<32x32xf32>
    %cst_319 = arith.constant dense<0.000000e+00> : vector<32x32xf32>
    %1579 = tpu.matmul %1578, %54, %cst_319 {dimension_numbers = #tpu.dot_dimension_numbers<[1], [0], [0], [1], [0, 0, 1, 1], [], []>} : vector<32x32xf32>, vector<32x32xf32>, vector<32x32xf32> -> vector<32x32xf32>
    %1580 = vector.extract_strided_slice %1579 {offsets = [0, 0], sizes = [8, 32], strides = [1, 1]} : vector<32x32xf32> to vector<8x32xf32>
    %1581 = vector.extract_strided_slice %1579 {offsets = [8, 0], sizes = [8, 32], strides = [1, 1]} : vector<32x32xf32> to vector<8x32xf32>
    %1582 = arith.addf %1580, %1581 : vector<8x32xf32>
    %1583 = vector.extract_strided_slice %1579 {offsets = [16, 0], sizes = [8, 32], strides = [1, 1]} : vector<32x32xf32> to vector<8x32xf32>
    %1584 = arith.addf %1582, %1583 : vector<8x32xf32>
    %1585 = vector.extract_strided_slice %1579 {offsets = [24, 0], sizes = [8, 32], strides = [1, 1]} : vector<32x32xf32> to vector<8x32xf32>
    %1586 = arith.addf %1584, %1585 : vector<8x32xf32>
    %1587 = vector.broadcast %55 : vector<1x32xf32> to vector<8x32xf32>
    %1588 = arith.addf %1586, %1587 : vector<8x32xf32>
    %c1_320 = arith.constant 1 : index
    %c0_321 = arith.constant 0 : index
    %c0_322 = arith.constant 0 : index
    %1589 = vector.load %arg14[%c1_320, %c0_321, %c0_322] : memref<2x8x32xf32, #tpu.memory_space<vmem>>, vector<1x8x32xf32>
    %1590 = vector.shape_cast %1589 : vector<1x8x32xf32> to vector<8x32xf32>
    %1591 = vector.shape_cast %1588 : vector<8x32xf32> to vector<1x8x32xf32>
    tpu.vector_store %arg14[%c1_320, %c0_321, %c0_322], %1591 {strides = array<i32>} : memref<2x8x32xf32, #tpu.memory_space<vmem>>, vector<1x8x32xf32>,
    return
  }
  func.func @transform_0(%arg0: i32) -> (i32, i32, i32) {
    %c0_i32 = arith.constant 0 : i32
    %c0_i32_0 = arith.constant 0 : i32
    %c0_i32_1 = arith.constant 0 : i32
    %c0_i32_2 = arith.constant 0 : i32
    return %c0_i32, %c0_i32_0, %c0_i32_1 : i32, i32, i32
  }
  func.func @transform_1(%arg0: i32) -> (i32, i32, i32) {
    %c0_i32 = arith.constant 0 : i32
    %c0_i32_0 = arith.constant 0 : i32
    %c0_i32_1 = arith.constant 0 : i32
    %c0_i32_2 = arith.constant 0 : i32
    return %c0_i32, %c0_i32_0, %c0_i32_1 : i32, i32, i32
  }
  func.func @transform_2(%arg0: i32) -> (i32, i32, i32) {
    %c0_i32 = arith.constant 0 : i32
    %c0_i32_0 = arith.constant 0 : i32
    %c0_i32_1 = arith.constant 0 : i32
    %c0_i32_2 = arith.constant 0 : i32
    return %c0_i32, %c0_i32_0, %c0_i32_1 : i32, i32, i32
  }
  func.func @transform_3(%arg0: i32) -> (i32, i32) {
    %c0_i32 = arith.constant 0 : i32
    %c0_i32_0 = arith.constant 0 : i32
    %c0_i32_1 = arith.constant 0 : i32
    return %c0_i32, %c0_i32_0 : i32, i32
  }
  func.func @transform_4(%arg0: i32) -> (i32, i32) {
    %c0_i32 = arith.constant 0 : i32
    %c0_i32_0 = arith.constant 0 : i32
    %c0_i32_1 = arith.constant 0 : i32
    return %c0_i32, %c0_i32_0 : i32, i32
  }
  func.func @transform_5(%arg0: i32) -> (i32, i32) {
    %c0_i32 = arith.constant 0 : i32
    %c0_i32_0 = arith.constant 0 : i32
    %c0_i32_1 = arith.constant 0 : i32
    return %c0_i32, %c0_i32_0 : i32, i32
  }
  func.func @transform_6(%arg0: i32) -> (i32, i32) {
    %c0_i32 = arith.constant 0 : i32
    %c0_i32_0 = arith.constant 0 : i32
    %c0_i32_1 = arith.constant 0 : i32
    return %c0_i32, %c0_i32_0 : i32, i32
  }
  func.func @transform_7(%arg0: i32) -> (i32, i32) {
    %c0_i32 = arith.constant 0 : i32
    %c0_i32_0 = arith.constant 0 : i32
    %c0_i32_1 = arith.constant 0 : i32
    return %c0_i32, %c0_i32_0 : i32, i32
  }
  func.func @transform_8(%arg0: i32) -> (i32, i32) {
    %c0_i32 = arith.constant 0 : i32
    %c0_i32_0 = arith.constant 0 : i32
    %c0_i32_1 = arith.constant 0 : i32
    return %c0_i32, %c0_i32_0 : i32, i32
  }
  func.func @transform_9(%arg0: i32) -> (i32, i32) {
    %c0_i32 = arith.constant 0 : i32
    %c0_i32_0 = arith.constant 0 : i32
    %c0_i32_1 = arith.constant 0 : i32
    return %c0_i32, %c0_i32_0 : i32, i32
  }
  func.func @transform_10(%arg0: i32) -> (i32, i32) {
    %c0_i32 = arith.constant 0 : i32
    %c0_i32_0 = arith.constant 0 : i32
    %c0_i32_1 = arith.constant 0 : i32
    return %c0_i32, %c0_i32_0 : i32, i32
  }
  func.func @transform_11(%arg0: i32) -> (i32, i32) {
    %c0_i32 = arith.constant 0 : i32
    %c0_i32_0 = arith.constant 0 : i32
    %c0_i32_1 = arith.constant 0 : i32
    return %c0_i32, %c0_i32_0 : i32, i32
  }
  func.func @transform_12(%arg0: i32) -> (i32, i32) {
    %c0_i32 = arith.constant 0 : i32
    %c0_i32_0 = arith.constant 0 : i32
    %c0_i32_1 = arith.constant 0 : i32
    return %c0_i32, %c0_i32_0 : i32, i32
  }
  func.func @transform_13(%arg0: i32) -> (i32, i32, i32) {
    %c0_i32 = arith.constant 0 : i32
    %c0_i32_0 = arith.constant 0 : i32
    %c0_i32_1 = arith.constant 0 : i32
    %c0_i32_2 = arith.constant 0 : i32
    return %c0_i32, %c0_i32_0, %c0_i32_1 : i32, i32, i32
  }
}

</mosaic_0001>

<llo_original>
// kernel: msda_forward.1
$region0: #{msda_forward.1}
  #allocation0 [shape = 'u32[]', space=smem, size = 0x4, offset = 0x4, fixed_abs, tag = 'smem constant byte address 0x4 - core index']
  #allocation1 [shape = 'u32[144,128]{1,0:T(1,128)}', space=vmem, size = 0x12000, scoped, tag = 'internal scratch']
  %s0 = inlined_call_operand.vmem [shape: f32[2,384,32], index: 0, kind: input, shape index: {}]
  %s1 = inlined_call_operand.vmem [shape: f32[2,8,32], index: 1, kind: input, shape index: {}]
  %s2 = inlined_call_operand.vmem [shape: f32[2,8,2], index: 2, kind: input, shape index: {}]
  %s3 = inlined_call_operand.vmem [shape: f32[32,32], index: 3, kind: input, shape index: {}]
  %s4 = inlined_call_operand.vmem [shape: f32[1,32], index: 4, kind: input, shape index: {}]
  %s5 = inlined_call_operand.vmem [shape: f32[32,96], index: 5, kind: input, shape index: {}]
  %s6 = inlined_call_operand.vmem [shape: f32[1,96], index: 6, kind: input, shape index: {}]
  %s7 = inlined_call_operand.vmem [shape: f32[32,32], index: 7, kind: input, shape index: {}]
  %s8 = inlined_call_operand.vmem [shape: f32[1,32], index: 8, kind: input, shape index: {}]
  %s9 = inlined_call_operand.vmem [shape: f32[6,32], index: 9, kind: input, shape index: {}]
  %s10 = inlined_call_operand.vmem [shape: f32[2,384], index: 10, kind: input, shape index: {}]
  %s11 = inlined_call_operand.vmem [shape: f32[32,32], index: 11, kind: input, shape index: {}, may-alias: {11,12}]
  %s12 = inlined_call_operand.vmem [shape: f32[32,32], index: 12, kind: input, shape index: {}, may-alias: {11,12}]
  %s13 = inlined_call_operand.hbm [shape: f32[2,8,32], index: 13, kind: output, shape index: {}]
  %s14 = sld [smem:[#allocation0]]
  $region62: #{msda_forward.1} parent=0
    _
  %s16 = ssub.s32 1, %s14
  %s17 = scalar_select 0, %s16, %s14
  $region1: #{msda_forward.1} parent=0
    #allocation2 [shape = 'u8[8192]{0}', space=vmem, size = 0x2000, scoped, tag = 'output window, operand 0, single buffered']
    #allocation3 [shape = 's32[1]{0}', space=sflag, size = 0x4, scoped, tag = 'scoped memory for msda_forward.1']
    %18 = vsyncpa [#allocation3], 0
    // Predicated region
    $region2: #{msda_forward.1} parent=1 // pred_check
      _
    $region3: #{msda_forward.1} parent=1 // pred_check_branch
      %20 = sbr.rel (0) target = $region5
    $region4: #{msda_forward.1} parent=1 // pred_region
      _
    $region5: #{msda_forward.1} parent=1 // pred_fallthru
      _
    // Predicated region
    $region6: #{msda_forward.1} parent=1 // pred_check
      _
    $region7: #{msda_forward.1} parent=1 // pred_check_branch
      %22 = sbr.rel (0) target = $region9
    $region8: #{msda_forward.1} parent=1 // pred_region
      _
    $region9: #{msda_forward.1} parent=1 // pred_fallthru
      _
    // Predicated region
    $region10: #{msda_forward.1} parent=1 // pred_check
      _
    $region11: #{msda_forward.1} parent=1 // pred_check_branch
      %24 = sbr.rel (0) target = $region13
    $region12: #{msda_forward.1} parent=1 // pred_region
      _
    $region13: #{msda_forward.1} parent=1 // pred_fallthru
      _
    // Predicated region
    $region14: #{msda_forward.1} parent=1 // pred_check
      _
    $region15: #{msda_forward.1} parent=1 // pred_check_branch
      %26 = sbr.rel (0) target = $region17
    $region16: #{msda_forward.1} parent=1 // pred_region
      _
    $region17: #{msda_forward.1} parent=1 // pred_fallthru
      _
    // Predicated region
    $region18: #{msda_forward.1} parent=1 // pred_check
      _
    $region19: #{msda_forward.1} parent=1 // pred_check_branch
      %28 = sbr.rel (0) target = $region21
    $region20: #{msda_forward.1} parent=1 // pred_region
      _
    $region21: #{msda_forward.1} parent=1 // pred_fallthru
      _
    // Predicated region
    $region22: #{msda_forward.1} parent=1 // pred_check
      _
    $region23: #{msda_forward.1} parent=1 // pred_check_branch
      %30 = sbr.rel (0) target = $region25
    $region24: #{msda_forward.1} parent=1 // pred_region
      _
    $region25: #{msda_forward.1} parent=1 // pred_fallthru
      _
    // Predicated region
    $region26: #{msda_forward.1} parent=1 // pred_check
      _
    $region27: #{msda_forward.1} parent=1 // pred_check_branch
      %32 = sbr.rel (0) target = $region29
    $region28: #{msda_forward.1} parent=1 // pred_region
      _
    $region29: #{msda_forward.1} parent=1 // pred_fallthru
      _
    // Predicated region
    $region30: #{msda_forward.1} parent=1 // pred_check
      _
    $region31: #{msda_forward.1} parent=1 // pred_check_branch
      %34 = sbr.rel (0) target = $region33
    $region32: #{msda_forward.1} parent=1 // pred_region
      _
    $region33: #{msda_forward.1} parent=1 // pred_fallthru
      _
    // Predicated region
    $region34: #{msda_forward.1} parent=1 // pred_check
      _
    $region35: #{msda_forward.1} parent=1 // pred_check_branch
      %36 = sbr.rel (0) target = $region37
    $region36: #{msda_forward.1} parent=1 // pred_region
      _
    $region37: #{msda_forward.1} parent=1 // pred_fallthru
      _
    // Predicated region
    $region38: #{msda_forward.1} parent=1 // pred_check
      _
    $region39: #{msda_forward.1} parent=1 // pred_check_branch
      %38 = sbr.rel (0) target = $region41
    $region40: #{msda_forward.1} parent=1 // pred_region
      _
    $region41: #{msda_forward.1} parent=1 // pred_fallthru
      _
    // Predicated region
    $region42: #{msda_forward.1} parent=1 // pred_check
      _
    $region43: #{msda_forward.1} parent=1 // pred_check_branch
      %40 = sbr.rel (0) target = $region45
    $region44: #{msda_forward.1} parent=1 // pred_region
      _
    $region45: #{msda_forward.1} parent=1 // pred_fallthru
      _
    // Predicated region
    $region46: #{msda_forward.1} parent=1 // pred_check
      _
    $region47: #{msda_forward.1} parent=1 // pred_check_branch
      %42 = sbr.rel (0) target = $region49
    $region48: #{msda_forward.1} parent=1 // pred_region
      _
    $region49: #{msda_forward.1} parent=1 // pred_fallthru
      _
    // Predicated region
    $region50: #{msda_forward.1} parent=1 // pred_check
      _
    $region51: #{msda_forward.1} parent=1 // pred_check_branch
      %44 = sbr.rel (0) target = $region53
    $region52: #{msda_forward.1} parent=1 // pred_region
      _
    $region53: #{msda_forward.1} parent=1 // pred_fallthru
      _
    %v45 = vld [vmem:[%s0] sm:$0xff]
    %v46 = vld [vmem:[%s0 + $0x8] sm:$0xff]
    %v47 = vld [vmem:[%s0 + $0x10] sm:$0xff]
    %v48 = vld [vmem:[%s0 + $0x18] sm:$0xff]
    %v49 = vld [vmem:[%s0 + $0x20] sm:$0xff]
    %v50 = vld [vmem:[%s0 + $0x28] sm:$0xff]
    %v51 = vld [vmem:[%s0 + $0x30] sm:$0xff]
    %v52 = vld [vmem:[%s0 + $0x38] sm:$0xff]
    %v53 = vld [vmem:[%s0 + $0x40] sm:$0xff]
    %v54 = vld [vmem:[%s0 + $0x48] sm:$0xff]
    %v55 = vld [vmem:[%s0 + $0x50] sm:$0xff]
    %v56 = vld [vmem:[%s0 + $0x58] sm:$0xff]
    %v57 = vld [vmem:[%s0 + $0x60] sm:$0xff]
    %v58 = vld [vmem:[%s0 + $0x68] sm:$0xff]
    %v59 = vld [vmem:[%s0 + $0x70] sm:$0xff]
    %v60 = vld [vmem:[%s0 + $0x78] sm:$0xff]
    %v61 = vld [vmem:[%s0 + $0x80] sm:$0xff]
    %v62 = vld [vmem:[%s0 + $0x88] sm:$0xff]
    %v63 = vld [vmem:[%s0 + $0x90] sm:$0xff]
    %v64 = vld [vmem:[%s0 + $0x98] sm:$0xff]
    %v65 = vld [vmem:[%s0 + $0xa0] sm:$0xff]
    %v66 = vld [vmem:[%s0 + $0xa8] sm:$0xff]
    %v67 = vld [vmem:[%s0 + $0xb0] sm:$0xff]
    %v68 = vld [vmem:[%s0 + $0xb8] sm:$0xff]
    %v69 = vld [vmem:[%s0 + $0xc0] sm:$0xff]
    %v70 = vld [vmem:[%s0 + $0xc8] sm:$0xff]
    %v71 = vld [vmem:[%s0 + $0xd0] sm:$0xff]
    %v72 = vld [vmem:[%s0 + $0xd8] sm:$0xff]
    %v73 = vld [vmem:[%s0 + $0xe0] sm:$0xff]
    %v74 = vld [vmem:[%s0 + $0xe8] sm:$0xff]
    %v75 = vld [vmem:[%s0 + $0xf0] sm:$0xff]
    %v76 = vld [vmem:[%s0 + $0xf8] sm:$0xff]
    %v77 = vld [vmem:[%s0 + $0x100] sm:$0xff]
    %v78 = vld [vmem:[%s0 + $0x108] sm:$0xff]
    %v79 = vld [vmem:[%s0 + $0x110] sm:$0xff]
    %v80 = vld [vmem:[%s0 + $0x118] sm:$0xff]
    %v81 = vld [vmem:[%s0 + $0x120] sm:$0xff]
    %v82 = vld [vmem:[%s0 + $0x128] sm:$0xff]
    %v83 = vld [vmem:[%s0 + $0x130] sm:$0xff]
    %v84 = vld [vmem:[%s0 + $0x138] sm:$0xff]
    %v85 = vld [vmem:[%s0 + $0x140] sm:$0xff]
    %v86 = vld [vmem:[%s0 + $0x148] sm:$0xff]
    %v87 = vld [vmem:[%s0 + $0x150] sm:$0xff]
    %v88 = vld [vmem:[%s0 + $0x158] sm:$0xff]
    %v89 = vld [vmem:[%s0 + $0x160] sm:$0xff]
    %v90 = vld [vmem:[%s0 + $0x168] sm:$0xff]
    %v91 = vld [vmem:[%s0 + $0x170] sm:$0xff]
    %v92 = vld [vmem:[%s0 + $0x178] sm:$0xff]
    %v93 = vld [vmem:[%s0 + $0x180] sm:$0xff]
    %v94 = vld [vmem:[%s0 + $0x188] sm:$0xff]
    %v95 = vld [vmem:[%s0 + $0x190] sm:$0xff]
    %v96 = vld [vmem:[%s0 + $0x198] sm:$0xff]
    %v97 = vld [vmem:[%s0 + $0x1a0] sm:$0xff]
    %v98 = vld [vmem:[%s0 + $0x1a8] sm:$0xff]
    %v99 = vld [vmem:[%s0 + $0x1b0] sm:$0xff]
    %v100 = vld [vmem:[%s0 + $0x1b8] sm:$0xff]
    %v101 = vld [vmem:[%s0 + $0x1c0] sm:$0xff]
    %v102 = vld [vmem:[%s0 + $0x1c8] sm:$0xff]
    %v103 = vld [vmem:[%s0 + $0x1d0] sm:$0xff]
    %v104 = vld [vmem:[%s0 + $0x1d8] sm:$0xff]
    %v105 = vld [vmem:[%s0 + $0x1e0] sm:$0xff]
    %v106 = vld [vmem:[%s0 + $0x1e8] sm:$0xff]
    %v107 = vld [vmem:[%s0 + $0x1f0] sm:$0xff]
    %v108 = vld [vmem:[%s0 + $0x1f8] sm:$0xff]
    %v109 = vld [vmem:[%s0 + $0x200] sm:$0xff]
    %v110 = vld [vmem:[%s0 + $0x208] sm:$0xff]
    %v111 = vld [vmem:[%s0 + $0x210] sm:$0xff]
    %v112 = vld [vmem:[%s0 + $0x218] sm:$0xff]
    %v113 = vld [vmem:[%s0 + $0x220] sm:$0xff]
    %v114 = vld [vmem:[%s0 + $0x228] sm:$0xff]
    %v115 = vld [vmem:[%s0 + $0x230] sm:$0xff]
    %v116 = vld [vmem:[%s0 + $0x238] sm:$0xff]
    %v117 = vld [vmem:[%s0 + $0x240] sm:$0xff]
    %v118 = vld [vmem:[%s0 + $0x248] sm:$0xff]
    %v119 = vld [vmem:[%s0 + $0x250] sm:$0xff]
    %v120 = vld [vmem:[%s0 + $0x258] sm:$0xff]
    %v121 = vld [vmem:[%s0 + $0x260] sm:$0xff]
    %v122 = vld [vmem:[%s0 + $0x268] sm:$0xff]
    %v123 = vld [vmem:[%s0 + $0x270] sm:$0xff]
    %v124 = vld [vmem:[%s0 + $0x278] sm:$0xff]
    %v125 = vld [vmem:[%s0 + $0x280] sm:$0xff]
    %v126 = vld [vmem:[%s0 + $0x288] sm:$0xff]
    %v127 = vld [vmem:[%s0 + $0x290] sm:$0xff]
    %v128 = vld [vmem:[%s0 + $0x298] sm:$0xff]
    %v129 = vld [vmem:[%s0 + $0x2a0] sm:$0xff]
    %v130 = vld [vmem:[%s0 + $0x2a8] sm:$0xff]
    %v131 = vld [vmem:[%s0 + $0x2b0] sm:$0xff]
    %v132 = vld [vmem:[%s0 + $0x2b8] sm:$0xff]
    %v133 = vld [vmem:[%s0 + $0x2c0] sm:$0xff]
    %v134 = vld [vmem:[%s0 + $0x2c8] sm:$0xff]
    %v135 = vld [vmem:[%s0 + $0x2d0] sm:$0xff]
    %v136 = vld [vmem:[%s0 + $0x2d8] sm:$0xff]
    %v137 = vld [vmem:[%s0 + $0x2e0] sm:$0xff]
    %v138 = vld [vmem:[%s0 + $0x2e8] sm:$0xff]
    %v139 = vld [vmem:[%s0 + $0x2f0] sm:$0xff]
    %v140 = vld [vmem:[%s0 + $0x2f8] sm:$0xff]
    %v141 = vld [vmem:[%s3] sm:$0xff]
    %v142 = vld [vmem:[%s3 + $0x8] sm:$0xff]
    %v143 = vld [vmem:[%s3 + $0x10] sm:$0xff]
    %v144 = vld [vmem:[%s3 + $0x18] sm:$0xff]
    %v145 = vld [vmem:[%s4] sm:$0x1]
    %v147 = vlaneseq
    %v148 = vshrl.u32 %v147, 7
    %v149 = vsub.s32 0, %v148
    %v150 = vrot.slane %v145, %v149
    %vm152 = vcmask 261120
    %v154 = vsel %vm152, %v45, 0
    %v157 = vsel %vm152, %v46, 0
    %v160 = vsel %vm152, %v47, 0
    %v163 = vsel %vm152, %v48, 0
    %v166 = vsel %vm152, %v49, 0
    %v169 = vsel %vm152, %v50, 0
    %v172 = vsel %vm152, %v51, 0
    %v175 = vsel %vm152, %v52, 0
    %v178 = vsel %vm152, %v53, 0
    %v181 = vsel %vm152, %v54, 0
    %v184 = vsel %vm152, %v55, 0
    %v187 = vsel %vm152, %v56, 0
    %v190 = vsel %vm152, %v57, 0
    %v193 = vsel %vm152, %v58, 0
    %v196 = vsel %vm152, %v59, 0
    %v199 = vsel %vm152, %v60, 0
    %v202 = vsel %vm152, %v61, 0
    %v205 = vsel %vm152, %v62, 0
    %v208 = vsel %vm152, %v63, 0
    %v211 = vsel %vm152, %v64, 0
    %v214 = vsel %vm152, %v65, 0
    %v217 = vsel %vm152, %v66, 0
    %v220 = vsel %vm152, %v67, 0
    %v223 = vsel %vm152, %v68, 0
    %v226 = vsel %vm152, %v69, 0
    %v229 = vsel %vm152, %v70, 0
    %v232 = vsel %vm152, %v71, 0
    %v235 = vsel %vm152, %v72, 0
    %v238 = vsel %vm152, %v73, 0
    %v241 = vsel %vm152, %v74, 0
    %v244 = vsel %vm152, %v75, 0
    %v247 = vsel %vm152, %v76, 0
    %v250 = vsel %vm152, %v77, 0
    %v253 = vsel %vm152, %v78, 0
    %v256 = vsel %vm152, %v79, 0
    %v259 = vsel %vm152, %v80, 0
    %v262 = vsel %vm152, %v81, 0
    %v265 = vsel %vm152, %v82, 0
    %v268 = vsel %vm152, %v83, 0
    %v271 = vsel %vm152, %v84, 0
    %v274 = vsel %vm152, %v85, 0
    %v277 = vsel %vm152, %v86, 0
    %v280 = vsel %vm152, %v87, 0
    %v283 = vsel %vm152, %v88, 0
    %v286 = vsel %vm152, %v89, 0
    %v289 = vsel %vm152, %v90, 0
    %v292 = vsel %vm152, %v91, 0
    %v295 = vsel %vm152, %v92, 0
    %v298 = vsel %vm152, %v93, 0
    %v301 = vsel %vm152, %v94, 0
    %v304 = vsel %vm152, %v95, 0
    %v307 = vsel %vm152, %v96, 0
    %v310 = vsel %vm152, %v97, 0
    %v313 = vsel %vm152, %v98, 0
    %v316 = vsel %vm152, %v99, 0
    %v319 = vsel %vm152, %v100, 0
    %v322 = vsel %vm152, %v101, 0
    %v325 = vsel %vm152, %v102, 0
    %v328 = vsel %vm152, %v103, 0
    %v331 = vsel %vm152, %v104, 0
    %v334 = vsel %vm152, %v105, 0
    %v337 = vsel %vm152, %v106, 0
    %v340 = vsel %vm152, %v107, 0
    %v343 = vsel %vm152, %v108, 0
    %v346 = vsel %vm152, %v109, 0
    %v349 = vsel %vm152, %v110, 0
    %v352 = vsel %vm152, %v111, 0
    %v355 = vsel %vm152, %v112, 0
    %v358 = vsel %vm152, %v113, 0
    %v361 = vsel %vm152, %v114, 0
    %v364 = vsel %vm152, %v115, 0
    %v367 = vsel %vm152, %v116, 0
    %v370 = vsel %vm152, %v117, 0
    %v373 = vsel %vm152, %v118, 0
    %v376 = vsel %vm152, %v119, 0
    %v379 = vsel %vm152, %v120, 0
    %v382 = vsel %vm152, %v121, 0
    %v385 = vsel %vm152, %v122, 0
    %v388 = vsel %vm152, %v123, 0
    %v391 = vsel %vm152, %v124, 0
    %v394 = vsel %vm152, %v125, 0
    %v397 = vsel %vm152, %v126, 0
    %v400 = vsel %vm152, %v127, 0
    %v403 = vsel %vm152, %v128, 0
    %v406 = vsel %vm152, %v129, 0
    %v409 = vsel %vm152, %v130, 0
    %v412 = vsel %vm152, %v131, 0
    %v415 = vsel %vm152, %v132, 0
    %v418 = vsel %vm152, %v133, 0
    %v421 = vsel %vm152, %v134, 0
    %v424 = vsel %vm152, %v135, 0
    %v427 = vsel %vm152, %v136, 0
    %v430 = vsel %vm152, %v137, 0
    %v433 = vsel %vm152, %v138, 0
    %v436 = vsel %vm152, %v139, 0
    %v439 = vsel %vm152, %v140, 0
    %441 = vmatprep.subr.mxu0 0.0
    %442 = vmatpush1.msra.mxu0 %v141
    %443 = vmatprep.subr.mxu0 0.0
    %444 = vmatpush1.msra.mxu0 %v142
    %445 = vmatprep.subr.mxu0 0.0
    %446 = vmatpush1.msra.mxu0 %v143
    %447 = vmatprep.subr.mxu0 0.0
    %448 = vmatpush1.msra.mxu0 %v144
    %449 = vmatprep.subr.mxu0 0.0
    %450 = vmatpush1.msra.mxu0 0.0
    %451 = vmatprep.subr.mxu0 0.0
    %452 = vmatpush1.msra.mxu0 0.0
    %453 = vmatprep.subr.mxu0 0.0
    %454 = vmatpush1.msra.mxu0 0.0
    %455 = vmatprep.subr.mxu0 0.0
    %456 = vmatpush1.msra.mxu0 0.0
    %457 = vmatprep.subr.mxu0 0.0
    %458 = vmatpush1.msra.mxu0 0.0
    %459 = vmatprep.subr.mxu0 0.0
    %460 = vmatpush1.msra.mxu0 0.0
    %461 = vmatprep.subr.mxu0 0.0
    %462 = vmatpush1.msra.mxu0 0.0
    %463 = vmatprep.subr.mxu0 0.0
    %464 = vmatpush1.msra.mxu0 0.0
    %465 = vmatprep.subr.mxu0 0.0
    %466 = vmatpush1.msra.mxu0 0.0
    %467 = vmatprep.subr.mxu0 0.0
    %468 = vmatpush1.msra.mxu0 0.0
    %469 = vmatprep.subr.mxu0 0.0
    %470 = vmatpush1.msra.mxu0 0.0
    %471 = vmatprep.subr.mxu0 0.0
    %472 = vmatpush1.msra.mxu0 0.0
    %473 = vmatprep.subr.mxu0 0.0
    %474 = vmatpush1.msra.mxu0 0.0
    %475 = vmatprep.subr.mxu0 0.0
    %476 = vmatpush1.msra.mxu0 0.0
    %477 = vmatprep.subr.mxu0 0.0
    %478 = vmatpush1.msra.mxu0 0.0
    %479 = vmatprep.subr.mxu0 0.0
    %480 = vmatpush1.msra.mxu0 0.0
    %481 = vmatprep.subr.mxu0 0.0
    %482 = vmatpush1.msra.mxu0 0.0
    %483 = vmatprep.subr.mxu0 0.0
    %484 = vmatpush1.msra.mxu0 0.0
    %485 = vmatprep.subr.mxu0 0.0
    %486 = vmatpush1.msra.mxu0 0.0
    %487 = vmatprep.subr.mxu0 0.0
    %488 = vmatpush1.msra.mxu0 0.0
    %489 = vmatprep.subr.mxu0 0.0
    %490 = vmatpush1.msra.mxu0 0.0
    %491 = vmatprep.subr.mxu0 0.0
    %492 = vmatpush1.msra.mxu0 0.0
    %493 = vmatprep.subr.mxu0 0.0
    %494 = vmatpush1.msra.mxu0 0.0
    %495 = vmatprep.subr.mxu0 0.0
    %496 = vmatpush1.msra.mxu0 0.0
    %497 = vmatprep.subr.mxu0 0.0
    %498 = vmatpush1.msra.mxu0 0.0
    %499 = vmatprep.subr.mxu0 0.0
    %500 = vmatpush1.msra.mxu0 0.0
    %501 = vmatprep.subr.mxu0 0.0
    %502 = vmatpush1.msra.mxu0 0.0
    %503 = vmatprep.subr.mxu0 0.0
    %504 = vmatpush1.msra.mxu0 0.0
    %505 = vmatprep.mubr.f32.mxu0 0.0
    %506 = vmatmul.mubr.f32.gmra.mrb[0].mxu0 %v154
    %v507 = vpop.f32.mrb[0].mxu0
    %v508 = vadd.f32 %v150, %v507
    %v509 = vpop.f32.mrb[0].mxu0
    %510 = vmatprep.mubr.f32.mxu0 0.0
    %511 = vmatmul.mubr.f32.gmra.mrb[0].mxu0 %v157
    %v512 = vpop.f32.mrb[0].mxu0
    %v513 = vadd.f32 %v150, %v512
    %v514 = vpop.f32.mrb[0].mxu0
    %515 = vmatprep.mubr.f32.mxu0 0.0
    %516 = vmatmul.mubr.f32.gmra.mrb[0].mxu0 %v160
    %v517 = vpop.f32.mrb[0].mxu0
    %v518 = vadd.f32 %v150, %v517
    %v519 = vpop.f32.mrb[0].mxu0
    %520 = vmatprep.mubr.f32.mxu0 0.0
    %521 = vmatmul.mubr.f32.gmra.mrb[0].mxu0 %v163
    %v522 = vpop.f32.mrb[0].mxu0
    %v523 = vadd.f32 %v150, %v522
    %v524 = vpop.f32.mrb[0].mxu0
    %525 = vmatprep.mubr.f32.mxu0 0.0
    %526 = vmatmul.mubr.f32.gmra.mrb[0].mxu0 %v166
    %v527 = vpop.f32.mrb[0].mxu0
    %v528 = vadd.f32 %v150, %v527
    %v529 = vpop.f32.mrb[0].mxu0
    %530 = vmatprep.mubr.f32.mxu0 0.0
    %531 = vmatmul.mubr.f32.gmra.mrb[0].mxu0 %v169
    %v532 = vpop.f32.mrb[0].mxu0
    %v533 = vadd.f32 %v150, %v532
    %v534 = vpop.f32.mrb[0].mxu0
    %535 = vmatprep.mubr.f32.mxu0 0.0
    %536 = vmatmul.mubr.f32.gmra.mrb[0].mxu0 %v172
    %v537 = vpop.f32.mrb[0].mxu0
    %v538 = vadd.f32 %v150, %v537
    %v539 = vpop.f32.mrb[0].mxu0
    %540 = vmatprep.mubr.f32.mxu0 0.0
    %541 = vmatmul.mubr.f32.gmra.mrb[0].mxu0 %v175
    %v542 = vpop.f32.mrb[0].mxu0
    %v543 = vadd.f32 %v150, %v542
    %v544 = vpop.f32.mrb[0].mxu0
    %545 = vmatprep.mubr.f32.mxu0 0.0
    %546 = vmatmul.mubr.f32.gmra.mrb[0].mxu0 %v178
    %v547 = vpop.f32.mrb[0].mxu0
    %v548 = vadd.f32 %v150, %v547
    %v549 = vpop.f32.mrb[0].mxu0
    %550 = vmatprep.mubr.f32.mxu0 0.0
    %551 = vmatmul.mubr.f32.gmra.mrb[0].mxu0 %v181
    %v552 = vpop.f32.mrb[0].mxu0
    %v553 = vadd.f32 %v150, %v552
    %v554 = vpop.f32.mrb[0].mxu0
    %555 = vmatprep.mubr.f32.mxu0 0.0
    %556 = vmatmul.mubr.f32.gmra.mrb[0].mxu0 %v184
    %v557 = vpop.f32.mrb[0].mxu0
    %v558 = vadd.f32 %v150, %v557
    %v559 = vpop.f32.mrb[0].mxu0
    %560 = vmatprep.mubr.f32.mxu0 0.0
    %561 = vmatmul.mubr.f32.gmra.mrb[0].mxu0 %v187
    %v562 = vpop.f32.mrb[0].mxu0
    %v563 = vadd.f32 %v150, %v562
    %v564 = vpop.f32.mrb[0].mxu0
    %565 = vmatprep.mubr.f32.mxu0 0.0
    %566 = vmatmul.mubr.f32.gmra.mrb[0].mxu0 %v190
    %v567 = vpop.f32.mrb[0].mxu0
    %v568 = vadd.f32 %v150, %v567
    %v569 = vpop.f32.mrb[0].mxu0
    %570 = vmatprep.mubr.f32.mxu0 0.0
    %571 = vmatmul.mubr.f32.gmra.mrb[0].mxu0 %v193
    %v572 = vpop.f32.mrb[0].mxu0
    %v573 = vadd.f32 %v150, %v572
    %v574 = vpop.f32.mrb[0].mxu0
    %575 = vmatprep.mubr.f32.mxu0 0.0
    %576 = vmatmul.mubr.f32.gmra.mrb[0].mxu0 %v196
    %v577 = vpop.f32.mrb[0].mxu0
    %v578 = vadd.f32 %v150, %v577
    %v579 = vpop.f32.mrb[0].mxu0
    %580 = vmatprep.mubr.f32.mxu0 0.0
    %581 = vmatmul.mubr.f32.gmra.mrb[0].mxu0 %v199
    %v582 = vpop.f32.mrb[0].mxu0
    %v583 = vadd.f32 %v150, %v582
    %v584 = vpop.f32.mrb[0].mxu0
    %585 = vmatprep.mubr.f32.mxu0 0.0
    %586 = vmatmul.mubr.f32.gmra.mrb[0].mxu0 %v202
    %v587 = vpop.f32.mrb[0].mxu0
    %v588 = vadd.f32 %v150, %v587
    %v589 = vpop.f32.mrb[0].mxu0
    %590 = vmatprep.mubr.f32.mxu0 0.0
    %591 = vmatmul.mubr.f32.gmra.mrb[0].mxu0 %v205
    %v592 = vpop.f32.mrb[0].mxu0
    %v593 = vadd.f32 %v150, %v592
    %v594 = vpop.f32.mrb[0].mxu0
    %595 = vmatprep.mubr.f32.mxu0 0.0
    %596 = vmatmul.mubr.f32.gmra.mrb[0].mxu0 %v208
    %v597 = vpop.f32.mrb[0].mxu0
    %v598 = vadd.f32 %v150, %v597
    %v599 = vpop.f32.mrb[0].mxu0
    %600 = vmatprep.mubr.f32.mxu0 0.0
    %601 = vmatmul.mubr.f32.gmra.mrb[0].mxu0 %v211
    %v602 = vpop.f32.mrb[0].mxu0
    %v603 = vadd.f32 %v150, %v602
    %v604 = vpop.f32.mrb[0].mxu0
    %605 = vmatprep.mubr.f32.mxu0 0.0
    %606 = vmatmul.mubr.f32.gmra.mrb[0].mxu0 %v214
    %v607 = vpop.f32.mrb[0].mxu0
    %v608 = vadd.f32 %v150, %v607
    %v609 = vpop.f32.mrb[0].mxu0
    %610 = vmatprep.mubr.f32.mxu0 0.0
    %611 = vmatmul.mubr.f32.gmra.mrb[0].mxu0 %v217
    %v612 = vpop.f32.mrb[0].mxu0
    %v613 = vadd.f32 %v150, %v612
    %v614 = vpop.f32.mrb[0].mxu0
    %615 = vmatprep.mubr.f32.mxu0 0.0
    %616 = vmatmul.mubr.f32.gmra.mrb[0].mxu0 %v220
    %v617 = vpop.f32.mrb[0].mxu0
    %v618 = vadd.f32 %v150, %v617
    %v619 = vpop.f32.mrb[0].mxu0
    %620 = vmatprep.mubr.f32.mxu0 0.0
    %621 = vmatmul.mubr.f32.gmra.mrb[0].mxu0 %v223
    %v622 = vpop.f32.mrb[0].mxu0
    %v623 = vadd.f32 %v150, %v622
    %v624 = vpop.f32.mrb[0].mxu0
    %625 = vmatprep.mubr.f32.mxu0 0.0
    %626 = vmatmul.mubr.f32.gmra.mrb[0].mxu0 %v226
    %v627 = vpop.f32.mrb[0].mxu0
    %v628 = vadd.f32 %v150, %v627
    %v629 = vpop.f32.mrb[0].mxu0
    %630 = vmatprep.mubr.f32.mxu0 0.0
    %631 = vmatmul.mubr.f32.gmra.mrb[0].mxu0 %v229
    %v632 = vpop.f32.mrb[0].mxu0
    %v633 = vadd.f32 %v150, %v632
    %v634 = vpop.f32.mrb[0].mxu0
    %635 = vmatprep.mubr.f32.mxu0 0.0
    %636 = vmatmul.mubr.f32.gmra.mrb[0].mxu0 %v232
    %v637 = vpop.f32.mrb[0].mxu0
    %v638 = vadd.f32 %v150, %v637
    %v639 = vpop.f32.mrb[0].mxu0
    %640 = vmatprep.mubr.f32.mxu0 0.0
    %641 = vmatmul.mubr.f32.gmra.mrb[0].mxu0 %v235
    %v642 = vpop.f32.mrb[0].mxu0
    %v643 = vadd.f32 %v150, %v642
    %v644 = vpop.f32.mrb[0].mxu0
    %645 = vmatprep.mubr.f32.mxu0 0.0
    %646 = vmatmul.mubr.f32.gmra.mrb[0].mxu0 %v238
    %v647 = vpop.f32.mrb[0].mxu0
    %v648 = vadd.f32 %v150, %v647
    %v649 = vpop.f32.mrb[0].mxu0
    %650 = vmatprep.mubr.f32.mxu0 0.0
    %651 = vmatmul.mubr.f32.gmra.mrb[0].mxu0 %v241
    %v652 = vpop.f32.mrb[0].mxu0
    %v653 = vadd.f32 %v150, %v652
    %v654 = vpop.f32.mrb[0].mxu0
    %655 = vmatprep.mubr.f32.mxu0 0.0
    %656 = vmatmul.mubr.f32.gmra.mrb[0].mxu0 %v244
    %v657 = vpop.f32.mrb[0].mxu0
    %v658 = vadd.f32 %v150, %v657
    %v659 = vpop.f32.mrb[0].mxu0
    %660 = vmatprep.mubr.f32.mxu0 0.0
    %661 = vmatmul.mubr.f32.gmra.mrb[0].mxu0 %v247
    %v662 = vpop.f32.mrb[0].mxu0
    %v663 = vadd.f32 %v150, %v662
    %v664 = vpop.f32.mrb[0].mxu0
    %665 = vmatprep.mubr.f32.mxu0 0.0
    %666 = vmatmul.mubr.f32.gmra.mrb[0].mxu0 %v250
    %v667 = vpop.f32.mrb[0].mxu0
    %v668 = vadd.f32 %v150, %v667
    %v669 = vpop.f32.mrb[0].mxu0
    %670 = vmatprep.mubr.f32.mxu0 0.0
    %671 = vmatmul.mubr.f32.gmra.mrb[0].mxu0 %v253
    %v672 = vpop.f32.mrb[0].mxu0
    %v673 = vadd.f32 %v150, %v672
    %v674 = vpop.f32.mrb[0].mxu0
    %675 = vmatprep.mubr.f32.mxu0 0.0
    %676 = vmatmul.mubr.f32.gmra.mrb[0].mxu0 %v256
    %v677 = vpop.f32.mrb[0].mxu0
    %v678 = vadd.f32 %v150, %v677
    %v679 = vpop.f32.mrb[0].mxu0
    %680 = vmatprep.mubr.f32.mxu0 0.0
    %681 = vmatmul.mubr.f32.gmra.mrb[0].mxu0 %v259
    %v682 = vpop.f32.mrb[0].mxu0
    %v683 = vadd.f32 %v150, %v682
    %v684 = vpop.f32.mrb[0].mxu0
    %685 = vmatprep.mubr.f32.mxu0 0.0
    %686 = vmatmul.mubr.f32.gmra.mrb[0].mxu0 %v262
    %v687 = vpop.f32.mrb[0].mxu0
    %v688 = vadd.f32 %v150, %v687
    %v689 = vpop.f32.mrb[0].mxu0
    %690 = vmatprep.mubr.f32.mxu0 0.0
    %691 = vmatmul.mubr.f32.gmra.mrb[0].mxu0 %v265
    %v692 = vpop.f32.mrb[0].mxu0
    %v693 = vadd.f32 %v150, %v692
    %v694 = vpop.f32.mrb[0].mxu0
    %695 = vmatprep.mubr.f32.mxu0 0.0
    %696 = vmatmul.mubr.f32.gmra.mrb[0].mxu0 %v268
    %v697 = vpop.f32.mrb[0].mxu0
    %v698 = vadd.f32 %v150, %v697
    %v699 = vpop.f32.mrb[0].mxu0
    %700 = vmatprep.mubr.f32.mxu0 0.0
    %701 = vmatmul.mubr.f32.gmra.mrb[0].mxu0 %v271
    %v702 = vpop.f32.mrb[0].mxu0
    %v703 = vadd.f32 %v150, %v702
    %v704 = vpop.f32.mrb[0].mxu0
    %705 = vmatprep.mubr.f32.mxu0 0.0
    %706 = vmatmul.mubr.f32.gmra.mrb[0].mxu0 %v274
    %v707 = vpop.f32.mrb[0].mxu0
    %v708 = vadd.f32 %v150, %v707
    %v709 = vpop.f32.mrb[0].mxu0
    %710 = vmatprep.mubr.f32.mxu0 0.0
    %711 = vmatmul.mubr.f32.gmra.mrb[0].mxu0 %v277
    %v712 = vpop.f32.mrb[0].mxu0
    %v713 = vadd.f32 %v150, %v712
    %v714 = vpop.f32.mrb[0].mxu0
    %715 = vmatprep.mubr.f32.mxu0 0.0
    %716 = vmatmul.mubr.f32.gmra.mrb[0].mxu0 %v280
    %v717 = vpop.f32.mrb[0].mxu0
    %v718 = vadd.f32 %v150, %v717
    %v719 = vpop.f32.mrb[0].mxu0
    %720 = vmatprep.mubr.f32.mxu0 0.0
    %721 = vmatmul.mubr.f32.gmra.mrb[0].mxu0 %v283
    %v722 = vpop.f32.mrb[0].mxu0
    %v723 = vadd.f32 %v150, %v722
    %v724 = vpop.f32.mrb[0].mxu0
    %725 = vmatprep.mubr.f32.mxu0 0.0
    %726 = vmatmul.mubr.f32.gmra.mrb[0].mxu0 %v286
    %v727 = vpop.f32.mrb[0].mxu0
    %v728 = vadd.f32 %v150, %v727
    %v729 = vpop.f32.mrb[0].mxu0
    %730 = vmatprep.mubr.f32.mxu0 0.0
    %731 = vmatmul.mubr.f32.gmra.mrb[0].mxu0 %v289
    %v732 = vpop.f32.mrb[0].mxu0
    %v733 = vadd.f32 %v150, %v732
    %v734 = vpop.f32.mrb[0].mxu0
    %735 = vmatprep.mubr.f32.mxu0 0.0
    %736 = vmatmul.mubr.f32.gmra.mrb[0].mxu0 %v292
    %v737 = vpop.f32.mrb[0].mxu0
    %v738 = vadd.f32 %v150, %v737
    %v739 = vpop.f32.mrb[0].mxu0
    %740 = vmatprep.mubr.f32.mxu0 0.0
    %741 = vmatmul.mubr.f32.gmra.mrb[0].mxu0 %v295
    %v742 = vpop.f32.mrb[0].mxu0
    %v743 = vadd.f32 %v150, %v742
    %v744 = vpop.f32.mrb[0].mxu0
    %745 = vmatprep.mubr.f32.mxu0 0.0
    %746 = vmatmul.mubr.f32.gmra.mrb[0].mxu0 %v298
    %v747 = vpop.f32.mrb[0].mxu0
    %v748 = vadd.f32 %v150, %v747
    %v749 = vpop.f32.mrb[0].mxu0
    %750 = vmatprep.mubr.f32.mxu0 0.0
    %751 = vmatmul.mubr.f32.gmra.mrb[0].mxu0 %v301
    %v752 = vpop.f32.mrb[0].mxu0
    %v753 = vadd.f32 %v150, %v752
    %v754 = vpop.f32.mrb[0].mxu0
    %755 = vmatprep.mubr.f32.mxu0 0.0
    %756 = vmatmul.mubr.f32.gmra.mrb[0].mxu0 %v304
    %v757 = vpop.f32.mrb[0].mxu0
    %v758 = vadd.f32 %v150, %v757
    %v759 = vpop.f32.mrb[0].mxu0
    %760 = vmatprep.mubr.f32.mxu0 0.0
    %761 = vmatmul.mubr.f32.gmra.mrb[0].mxu0 %v307
    %v762 = vpop.f32.mrb[0].mxu0
    %v763 = vadd.f32 %v150, %v762
    %v764 = vpop.f32.mrb[0].mxu0
    %765 = vmatprep.mubr.f32.mxu0 0.0
    %766 = vmatmul.mubr.f32.gmra.mrb[0].mxu0 %v310
    %v767 = vpop.f32.mrb[0].mxu0
    %v768 = vadd.f32 %v150, %v767
    %v769 = vpop.f32.mrb[0].mxu0
    %770 = vmatprep.mubr.f32.mxu0 0.0
    %771 = vmatmul.mubr.f32.gmra.mrb[0].mxu0 %v313
    %v772 = vpop.f32.mrb[0].mxu0
    %v773 = vadd.f32 %v150, %v772
    %v774 = vpop.f32.mrb[0].mxu0
    %775 = vmatprep.mubr.f32.mxu0 0.0
    %776 = vmatmul.mubr.f32.gmra.mrb[0].mxu0 %v316
    %v777 = vpop.f32.mrb[0].mxu0
    %v778 = vadd.f32 %v150, %v777
    %v779 = vpop.f32.mrb[0].mxu0
    %780 = vmatprep.mubr.f32.mxu0 0.0
    %781 = vmatmul.mubr.f32.gmra.mrb[0].mxu0 %v319
    %v782 = vpop.f32.mrb[0].mxu0
    %v783 = vadd.f32 %v150, %v782
    %v784 = vpop.f32.mrb[0].mxu0
    %785 = vmatprep.mubr.f32.mxu0 0.0
    %786 = vmatmul.mubr.f32.gmra.mrb[0].mxu0 %v322
    %v787 = vpop.f32.mrb[0].mxu0
    %v788 = vadd.f32 %v150, %v787
    %v789 = vpop.f32.mrb[0].mxu0
    %790 = vmatprep.mubr.f32.mxu0 0.0
    %791 = vmatmul.mubr.f32.gmra.mrb[0].mxu0 %v325
    %v792 = vpop.f32.mrb[0].mxu0
    %v793 = vadd.f32 %v150, %v792
    %v794 = vpop.f32.mrb[0].mxu0
    %795 = vmatprep.mubr.f32.mxu0 0.0
    %796 = vmatmul.mubr.f32.gmra.mrb[0].mxu0 %v328
    %v797 = vpop.f32.mrb[0].mxu0
    %v798 = vadd.f32 %v150, %v797
    %v799 = vpop.f32.mrb[0].mxu0
    %800 = vmatprep.mubr.f32.mxu0 0.0
    %801 = vmatmul.mubr.f32.gmra.mrb[0].mxu0 %v331
    %v802 = vpop.f32.mrb[0].mxu0
    %v803 = vadd.f32 %v150, %v802
    %v804 = vpop.f32.mrb[0].mxu0
    %805 = vmatprep.mubr.f32.mxu0 0.0
    %806 = vmatmul.mubr.f32.gmra.mrb[0].mxu0 %v334
    %v807 = vpop.f32.mrb[0].mxu0
    %v808 = vadd.f32 %v150, %v807
    %v809 = vpop.f32.mrb[0].mxu0
    %810 = vmatprep.mubr.f32.mxu0 0.0
    %811 = vmatmul.mubr.f32.gmra.mrb[0].mxu0 %v337
    %v812 = vpop.f32.mrb[0].mxu0
    %v813 = vadd.f32 %v150, %v812
    %v814 = vpop.f32.mrb[0].mxu0
    %815 = vmatprep.mubr.f32.mxu0 0.0
    %816 = vmatmul.mubr.f32.gmra.mrb[0].mxu0 %v340
    %v817 = vpop.f32.mrb[0].mxu0
    %v818 = vadd.f32 %v150, %v817
    %v819 = vpop.f32.mrb[0].mxu0
    %820 = vmatprep.mubr.f32.mxu0 0.0
    %821 = vmatmul.mubr.f32.gmra.mrb[0].mxu0 %v343
    %v822 = vpop.f32.mrb[0].mxu0
    %v823 = vadd.f32 %v150, %v822
    %v824 = vpop.f32.mrb[0].mxu0
    %825 = vmatprep.mubr.f32.mxu0 0.0
    %826 = vmatmul.mubr.f32.gmra.mrb[0].mxu0 %v346
    %v827 = vpop.f32.mrb[0].mxu0
    %v828 = vadd.f32 %v150, %v827
    %v829 = vpop.f32.mrb[0].mxu0
    %830 = vmatprep.mubr.f32.mxu0 0.0
    %831 = vmatmul.mubr.f32.gmra.mrb[0].mxu0 %v349
    %v832 = vpop.f32.mrb[0].mxu0
    %v833 = vadd.f32 %v150, %v832
    %v834 = vpop.f32.mrb[0].mxu0
    %835 = vmatprep.mubr.f32.mxu0 0.0
    %836 = vmatmul.mubr.f32.gmra.mrb[0].mxu0 %v352
    %v837 = vpop.f32.mrb[0].mxu0
    %v838 = vadd.f32 %v150, %v837
    %v839 = vpop.f32.mrb[0].mxu0
    %840 = vmatprep.mubr.f32.mxu0 0.0
    %841 = vmatmul.mubr.f32.gmra.mrb[0].mxu0 %v355
    %v842 = vpop.f32.mrb[0].mxu0
    %v843 = vadd.f32 %v150, %v842
    %v844 = vpop.f32.mrb[0].mxu0
    %845 = vmatprep.mubr.f32.mxu0 0.0
    %846 = vmatmul.mubr.f32.gmra.mrb[0].mxu0 %v358
    %v847 = vpop.f32.mrb[0].mxu0
    %v848 = vadd.f32 %v150, %v847
    %v849 = vpop.f32.mrb[0].mxu0
    %850 = vmatprep.mubr.f32.mxu0 0.0
    %851 = vmatmul.mubr.f32.gmra.mrb[0].mxu0 %v361
    %v852 = vpop.f32.mrb[0].mxu0
    %v853 = vadd.f32 %v150, %v852
    %v854 = vpop.f32.mrb[0].mxu0
    %855 = vmatprep.mubr.f32.mxu0 0.0
    %856 = vmatmul.mubr.f32.gmra.mrb[0].mxu0 %v364
    %v857 = vpop.f32.mrb[0].mxu0
    %v858 = vadd.f32 %v150, %v857
    %v859 = vpop.f32.mrb[0].mxu0
    %860 = vmatprep.mubr.f32.mxu0 0.0
    %861 = vmatmul.mubr.f32.gmra.mrb[0].mxu0 %v367
    %v862 = vpop.f32.mrb[0].mxu0
    %v863 = vadd.f32 %v150, %v862
    %v864 = vpop.f32.mrb[0].mxu0
    %865 = vmatprep.mubr.f32.mxu0 0.0
    %866 = vmatmul.mubr.f32.gmra.mrb[0].mxu0 %v370
    %v867 = vpop.f32.mrb[0].mxu0
    %v868 = vadd.f32 %v150, %v867
    %v869 = vpop.f32.mrb[0].mxu0
    %870 = vmatprep.mubr.f32.mxu0 0.0
    %871 = vmatmul.mubr.f32.gmra.mrb[0].mxu0 %v373
    %v872 = vpop.f32.mrb[0].mxu0
    %v873 = vadd.f32 %v150, %v872
    %v874 = vpop.f32.mrb[0].mxu0
    %875 = vmatprep.mubr.f32.mxu0 0.0
    %876 = vmatmul.mubr.f32.gmra.mrb[0].mxu0 %v376
    %v877 = vpop.f32.mrb[0].mxu0
    %v878 = vadd.f32 %v150, %v877
    %v879 = vpop.f32.mrb[0].mxu0
    %880 = vmatprep.mubr.f32.mxu0 0.0
    %881 = vmatmul.mubr.f32.gmra.mrb[0].mxu0 %v379
    %v882 = vpop.f32.mrb[0].mxu0
    %v883 = vadd.f32 %v150, %v882
    %v884 = vpop.f32.mrb[0].mxu0
    %885 = vmatprep.mubr.f32.mxu0 0.0
    %886 = vmatmul.mubr.f32.gmra.mrb[0].mxu0 %v382
    %v887 = vpop.f32.mrb[0].mxu0
    %v888 = vadd.f32 %v150, %v887
    %v889 = vpop.f32.mrb[0].mxu0
    %890 = vmatprep.mubr.f32.mxu0 0.0
    %891 = vmatmul.mubr.f32.gmra.mrb[0].mxu0 %v385
    %v892 = vpop.f32.mrb[0].mxu0
    %v893 = vadd.f32 %v150, %v892
    %v894 = vpop.f32.mrb[0].mxu0
    %895 = vmatprep.mubr.f32.mxu0 0.0
    %896 = vmatmul.mubr.f32.gmra.mrb[0].mxu0 %v388
    %v897 = vpop.f32.mrb[0].mxu0
    %v898 = vadd.f32 %v150, %v897
    %v899 = vpop.f32.mrb[0].mxu0
    %900 = vmatprep.mubr.f32.mxu0 0.0
    %901 = vmatmul.mubr.f32.gmra.mrb[0].mxu0 %v391
    %v902 = vpop.f32.mrb[0].mxu0
    %v903 = vadd.f32 %v150, %v902
    %v904 = vpop.f32.mrb[0].mxu0
    %905 = vmatprep.mubr.f32.mxu0 0.0
    %906 = vmatmul.mubr.f32.gmra.mrb[0].mxu0 %v394
    %v907 = vpop.f32.mrb[0].mxu0
    %v908 = vadd.f32 %v150, %v907
    %v909 = vpop.f32.mrb[0].mxu0
    %910 = vmatprep.mubr.f32.mxu0 0.0
    %911 = vmatmul.mubr.f32.gmra.mrb[0].mxu0 %v397
    %v912 = vpop.f32.mrb[0].mxu0
    %v913 = vadd.f32 %v150, %v912
    %v914 = vpop.f32.mrb[0].mxu0
    %915 = vmatprep.mubr.f32.mxu0 0.0
    %916 = vmatmul.mubr.f32.gmra.mrb[0].mxu0 %v400
    %v917 = vpop.f32.mrb[0].mxu0
    %v918 = vadd.f32 %v150, %v917
    %v919 = vpop.f32.mrb[0].mxu0
    %920 = vmatprep.mubr.f32.mxu0 0.0
    %921 = vmatmul.mubr.f32.gmra.mrb[0].mxu0 %v403
    %v922 = vpop.f32.mrb[0].mxu0
    %v923 = vadd.f32 %v150, %v922
    %v924 = vpop.f32.mrb[0].mxu0
    %925 = vmatprep.mubr.f32.mxu0 0.0
    %926 = vmatmul.mubr.f32.gmra.mrb[0].mxu0 %v406
    %v927 = vpop.f32.mrb[0].mxu0
    %v928 = vadd.f32 %v150, %v927
    %v929 = vpop.f32.mrb[0].mxu0
    %930 = vmatprep.mubr.f32.mxu0 0.0
    %931 = vmatmul.mubr.f32.gmra.mrb[0].mxu0 %v409
    %v932 = vpop.f32.mrb[0].mxu0
    %v933 = vadd.f32 %v150, %v932
    %v934 = vpop.f32.mrb[0].mxu0
    %935 = vmatprep.mubr.f32.mxu0 0.0
    %936 = vmatmul.mubr.f32.gmra.mrb[0].mxu0 %v412
    %v937 = vpop.f32.mrb[0].mxu0
    %v938 = vadd.f32 %v150, %v937
    %v939 = vpop.f32.mrb[0].mxu0
    %940 = vmatprep.mubr.f32.mxu0 0.0
    %941 = vmatmul.mubr.f32.gmra.mrb[0].mxu0 %v415
    %v942 = vpop.f32.mrb[0].mxu0
    %v943 = vadd.f32 %v150, %v942
    %v944 = vpop.f32.mrb[0].mxu0
    %945 = vmatprep.mubr.f32.mxu0 0.0
    %946 = vmatmul.mubr.f32.gmra.mrb[0].mxu0 %v418
    %v947 = vpop.f32.mrb[0].mxu0
    %v948 = vadd.f32 %v150, %v947
    %v949 = vpop.f32.mrb[0].mxu0
    %950 = vmatprep.mubr.f32.mxu0 0.0
    %951 = vmatmul.mubr.f32.gmra.mrb[0].mxu0 %v421
    %v952 = vpop.f32.mrb[0].mxu0
    %v953 = vadd.f32 %v150, %v952
    %v954 = vpop.f32.mrb[0].mxu0
    %955 = vmatprep.mubr.f32.mxu0 0.0
    %956 = vmatmul.mubr.f32.gmra.mrb[0].mxu0 %v424
    %v957 = vpop.f32.mrb[0].mxu0
    %v958 = vadd.f32 %v150, %v957
    %v959 = vpop.f32.mrb[0].mxu0
    %960 = vmatprep.mubr.f32.mxu0 0.0
    %961 = vmatmul.mubr.f32.gmra.mrb[0].mxu0 %v427
    %v962 = vpop.f32.mrb[0].mxu0
    %v963 = vadd.f32 %v150, %v962
    %v964 = vpop.f32.mrb[0].mxu0
    %965 = vmatprep.mubr.f32.mxu0 0.0
    %966 = vmatmul.mubr.f32.gmra.mrb[0].mxu0 %v430
    %v967 = vpop.f32.mrb[0].mxu0
    %v968 = vadd.f32 %v150, %v967
    %v969 = vpop.f32.mrb[0].mxu0
    %970 = vmatprep.mubr.f32.mxu0 0.0
    %971 = vmatmul.mubr.f32.gmra.mrb[0].mxu0 %v433
    %v972 = vpop.f32.mrb[0].mxu0
    %v973 = vadd.f32 %v150, %v972
    %v974 = vpop.f32.mrb[0].mxu0
    %975 = vmatprep.mubr.f32.mxu0 0.0
    %976 = vmatmul.mubr.f32.gmra.mrb[0].mxu0 %v436
    %v977 = vpop.f32.mrb[0].mxu0
    %v978 = vadd.f32 %v150, %v977
    %v979 = vpop.f32.mrb[0].mxu0
    %980 = vmatprep.mubr.f32.mxu0 0.0
    %981 = vmatmul.mubr.f32.gmra.mrb[0].mxu0 %v439
    %v982 = vpop.f32.mrb[0].mxu0
    %v983 = vadd.f32 %v150, %v982
    %v984 = vpop.f32.mrb[0].mxu0
    %985 = vdwg.mxu0
    %v986 = vld [vmem:[%s1] sm:$0xff]
    %v987 = vld [vmem:[%s1 + $0x8] sm:$0xff]
    %v988 = vld [vmem:[%s5] sm:$0xff]
    %v989 = vld [vmem:[%s5 + $0x8] sm:$0xff]
    %v990 = vld [vmem:[%s5 + $0x10] sm:$0xff]
    %v991 = vld [vmem:[%s5 + $0x18] sm:$0xff]
    %v992 = vld [vmem:[%s6] sm:$0x1]
    %v994 = vlaneseq
    %v995 = vshrl.u32 %v994, 7
    %v996 = vsub.s32 0, %v995
    %v997 = vrot.slane %v992, %v996
    %v1000 = vsel %vm152, %v986, 0
    %v1003 = vsel %vm152, %v987, 0
    %1005 = vmatprep.subr.mxu0 0.0
    %1006 = vmatpush1.msra.mxu0 %v988
    %1007 = vmatprep.subr.mxu0 0.0
    %1008 = vmatpush1.msra.mxu0 %v989
    %1009 = vmatprep.subr.mxu0 0.0
    %1010 = vmatpush1.msra.mxu0 %v990
    %1011 = vmatprep.subr.mxu0 0.0
    %1012 = vmatpush1.msra.mxu0 %v991
    %1013 = vmatprep.subr.mxu0 0.0
    %1014 = vmatpush1.msra.mxu0 0.0
    %1015 = vmatprep.subr.mxu0 0.0
    %1016 = vmatpush1.msra.mxu0 0.0
    %1017 = vmatprep.subr.mxu0 0.0
    %1018 = vmatpush1.msra.mxu0 0.0
    %1019 = vmatprep.subr.mxu0 0.0
    %1020 = vmatpush1.msra.mxu0 0.0
    %1021 = vmatprep.subr.mxu0 0.0
    %1022 = vmatpush1.msra.mxu0 0.0
    %1023 = vmatprep.subr.mxu0 0.0
    %1024 = vmatpush1.msra.mxu0 0.0
    %1025 = vmatprep.subr.mxu0 0.0
    %1026 = vmatpush1.msra.mxu0 0.0
    %1027 = vmatprep.subr.mxu0 0.0
    %1028 = vmatpush1.msra.mxu0 0.0
    %1029 = vmatprep.subr.mxu0 0.0
    %1030 = vmatpush1.msra.mxu0 0.0
    %1031 = vmatprep.subr.mxu0 0.0
    %1032 = vmatpush1.msra.mxu0 0.0
    %1033 = vmatprep.subr.mxu0 0.0
    %1034 = vmatpush1.msra.mxu0 0.0
    %1035 = vmatprep.subr.mxu0 0.0
    %1036 = vmatpush1.msra.mxu0 0.0
    %1037 = vmatprep.subr.mxu0 0.0
    %1038 = vmatpush1.msra.mxu0 0.0
    %1039 = vmatprep.subr.mxu0 0.0
    %1040 = vmatpush1.msra.mxu0 0.0
    %1041 = vmatprep.subr.mxu0 0.0
    %1042 = vmatpush1.msra.mxu0 0.0
    %1043 = vmatprep.subr.mxu0 0.0
    %1044 = vmatpush1.msra.mxu0 0.0
    %1045 = vmatprep.subr.mxu0 0.0
    %1046 = vmatpush1.msra.mxu0 0.0
    %1047 = vmatprep.subr.mxu0 0.0
    %1048 = vmatpush1.msra.mxu0 0.0
    %1049 = vmatprep.subr.mxu0 0.0
    %1050 = vmatpush1.msra.mxu0 0.0
    %1051 = vmatprep.subr.mxu0 0.0
    %1052 = vmatpush1.msra.mxu0 0.0
    %1053 = vmatprep.subr.mxu0 0.0
    %1054 = vmatpush1.msra.mxu0 0.0
    %1055 = vmatprep.subr.mxu0 0.0
    %1056 = vmatpush1.msra.mxu0 0.0
    %1057 = vmatprep.subr.mxu0 0.0
    %1058 = vmatpush1.msra.mxu0 0.0
    %1059 = vmatprep.subr.mxu0 0.0
    %1060 = vmatpush1.msra.mxu0 0.0
    %1061 = vmatprep.subr.mxu0 0.0
    %1062 = vmatpush1.msra.mxu0 0.0
    %1063 = vmatprep.subr.mxu0 0.0
    %1064 = vmatpush1.msra.mxu0 0.0
    %1065 = vmatprep.subr.mxu0 0.0
    %1066 = vmatpush1.msra.mxu0 0.0
    %1067 = vmatprep.subr.mxu0 0.0
    %1068 = vmatpush1.msra.mxu0 0.0
    %1069 = vmatprep.mubr.f32.mxu0 0.0
    %1070 = vmatmul.mubr.f32.gmra.mrb[0].mxu0 %v1000
    %v1071 = vpop.f32.mrb[0].mxu0
    %v1072 = vadd.f32 %v997, %v1071
    %v1073 = vpop.f32.mrb[0].mxu0
    %1074 = vmatprep.mubr.f32.mxu0 0.0
    %1075 = vmatmul.mubr.f32.gmra.mrb[0].mxu0 %v1003
    %v1076 = vpop.f32.mrb[0].mxu0
    %v1077 = vadd.f32 %v997, %v1076
    %v1078 = vpop.f32.mrb[0].mxu0
    %1079 = vdwg.mxu0
    %v1080 = vld [vmem:[%s2] sm:$0xff]
    %v1081 = vld [vmem:[%s2 + $0x8] sm:$0xff]
    %v1082 = vld [vmem:[%s9] sm:$0x1]
    %v1083 = vlaneseq
    %v1084 = vshrl.u32 %v1083, 7
    %v1085 = vsub.s32 0, %v1084
    %v1086 = vrot.slane %v1082, %v1085
    %v1087 = vmul.f32 %v1072, %v1086
    %v1088 = vmul.f32 %v1077, %v1086
    %1090 = vset.pattern.permute.xlu0 0
    %1091 = vperm.xlu0 %1090, %v1080
    %v1092 = vpop.permute.xlu0 %1091
    %1095 = vset.pattern.permute.xlu0 0
    %1096 = vperm.xlu0 %1095, %v1081
    %v1097 = vpop.permute.xlu0 %1096
    %v1099 = vadd.f32 %v1092, %v1087
    %v1100 = vadd.f32 %v1097, %v1088
    %v1101 = vld [vmem:[%s9 + $0x1] sm:$0x1]
    %v1102 = vlaneseq
    %v1103 = vshrl.u32 %v1102, 7
    %v1104 = vsub.s32 0, %v1103
    %v1105 = vrot.slane %v1101, %v1104
    %1107 = vrot.lane.b32.xlu0 %v1105, 32
    %v1108 = vpop.permute.xlu0 %1107
    %v1110 = vmul.f32 %v1072, %v1108
    %v1111 = vmul.f32 %v1077, %v1108
    %1112 = vset.pattern.permute.xlu0 1
    %1113 = vperm.xlu0 %1112, %v1080
    %v1114 = vpop.permute.xlu0 %1113
    %1116 = vset.pattern.permute.xlu0 1
    %1117 = vperm.xlu0 %1116, %v1081
    %v1118 = vpop.permute.xlu0 %1117
    %v1120 = vadd.f32 %v1114, %v1110
    %v1121 = vadd.f32 %v1118, %v1111
    %v1122 = vld [vmem:[%s9 + $0x2] sm:$0x1]
    %v1123 = vlaneseq
    %v1124 = vshrl.u32 %v1123, 7
    %v1125 = vsub.s32 0, %v1124
    %v1126 = vrot.slane %v1122, %v1125
    %v1127 = vmul.f32 %v1099, %v1126
    %v1128 = vmul.f32 %v1100, %v1126
    %v1129 = vadd.f32 %v1127, -0.5
    %v1130 = vadd.f32 %v1128, -0.5
    %v1131 = vld [vmem:[%s9 + $0x3] sm:$0x1]
    %v1132 = vlaneseq
    %v1133 = vshrl.u32 %v1132, 7
    %v1134 = vsub.s32 0, %v1133
    %v1135 = vrot.slane %v1131, %v1134
    %1137 = vrot.lane.b32.xlu0 %v1135, 32
    %v1138 = vpop.permute.xlu0 %1137
    %v1140 = vmul.f32 %v1120, %v1138
    %v1141 = vmul.f32 %v1121, %v1138
    %v1142 = vadd.f32 %v1140, -0.5
    %v1143 = vadd.f32 %v1141, -0.5
    %vm1144 = vcmask 785920
    %v1145 = vsel %vm1144, %v1072, -inf
    %1146 = vmax.xlane.f32.xlu0 %v1145
    %v1147 = vpop.xlane.xlu0 %1146
    %v1148 = vsel %vm1144, %v1077, -inf
    %1149 = vmax.xlane.f32.xlu0 %v1148
    %v1150 = vpop.xlane.xlu0 %1149
    %v1151 = vsub.f32 %v1072, %v1147
    %v1152 = vsub.f32 %v1077, %v1150
    %v1153 = vmul.f32 %v1151, 1.442695
    %v1154 = vpow.pop %v1153
    %v1155 = vmul.f32 %v1152, 1.442695
    %v1156 = vpow.pop %v1155
    %v1157 = vld [vmem:[%s11] sm:$0xff]
    %v1158 = vld [vmem:[%s11 + $0x8] sm:$0xff]
    %v1159 = vld [vmem:[%s11 + $0x10] sm:$0xff]
    %v1160 = vld [vmem:[%s11 + $0x18] sm:$0xff]
    %1163 = vrot.lane.b32.xlu0 %v1154, 64
    %v1164 = vpop.permute.xlu0 %1163
    %1165 = vrot.lane.b32.xlu0 %v1156, 64
    %v1166 = vpop.permute.xlu0 %1165
    %v1167 = vsel %vm152, %v1164, 0
    %v1169 = vsel %vm152, %v1166, 0
    %1171 = vmatprep.subr.mxu0 0.0
    %1172 = vmatpush1.msra.mxu0 %v1157
    %1173 = vmatprep.subr.mxu0 0.0
    %1174 = vmatpush1.msra.mxu0 %v1158
    %1175 = vmatprep.subr.mxu0 0.0
    %1176 = vmatpush1.msra.mxu0 %v1159
    %1177 = vmatprep.subr.mxu0 0.0
    %1178 = vmatpush1.msra.mxu0 %v1160
    %1179 = vmatprep.subr.mxu0 0.0
    %1180 = vmatpush1.msra.mxu0 0.0
    %1181 = vmatprep.subr.mxu0 0.0
    %1182 = vmatpush1.msra.mxu0 0.0
    %1183 = vmatprep.subr.mxu0 0.0
    %1184 = vmatpush1.msra.mxu0 0.0
    %1185 = vmatprep.subr.mxu0 0.0
    %1186 = vmatpush1.msra.mxu0 0.0
    %1187 = vmatprep.subr.mxu0 0.0
    %1188 = vmatpush1.msra.mxu0 0.0
    %1189 = vmatprep.subr.mxu0 0.0
    %1190 = vmatpush1.msra.mxu0 0.0
    %1191 = vmatprep.subr.mxu0 0.0
    %1192 = vmatpush1.msra.mxu0 0.0
    %1193 = vmatprep.subr.mxu0 0.0
    %1194 = vmatpush1.msra.mxu0 0.0
    %1195 = vmatprep.subr.mxu0 0.0
    %1196 = vmatpush1.msra.mxu0 0.0
    %1197 = vmatprep.subr.mxu0 0.0
    %1198 = vmatpush1.msra.mxu0 0.0
    %1199 = vmatprep.subr.mxu0 0.0
    %1200 = vmatpush1.msra.mxu0 0.0
    %1201 = vmatprep.subr.mxu0 0.0
    %1202 = vmatpush1.msra.mxu0 0.0
    %1203 = vmatprep.subr.mxu0 0.0
    %1204 = vmatpush1.msra.mxu0 0.0
    %1205 = vmatprep.subr.mxu0 0.0
    %1206 = vmatpush1.msra.mxu0 0.0
    %1207 = vmatprep.subr.mxu0 0.0
    %1208 = vmatpush1.msra.mxu0 0.0
    %1209 = vmatprep.subr.mxu0 0.0
    %1210 = vmatpush1.msra.mxu0 0.0
    %1211 = vmatprep.subr.mxu0 0.0
    %1212 = vmatpush1.msra.mxu0 0.0
    %1213 = vmatprep.subr.mxu0 0.0
    %1214 = vmatpush1.msra.mxu0 0.0
    %1215 = vmatprep.subr.mxu0 0.0
    %1216 = vmatpush1.msra.mxu0 0.0
    %1217 = vmatprep.subr.mxu0 0.0
    %1218 = vmatpush1.msra.mxu0 0.0
    %1219 = vmatprep.subr.mxu0 0.0
    %1220 = vmatpush1.msra.mxu0 0.0
    %1221 = vmatprep.subr.mxu0 0.0
    %1222 = vmatpush1.msra.mxu0 0.0
    %1223 = vmatprep.subr.mxu0 0.0
    %1224 = vmatpush1.msra.mxu0 0.0
    %1225 = vmatprep.subr.mxu0 0.0
    %1226 = vmatpush1.msra.mxu0 0.0
    %1227 = vmatprep.subr.mxu0 0.0
    %1228 = vmatpush1.msra.mxu0 0.0
    %1229 = vmatprep.subr.mxu0 0.0
    %1230 = vmatpush1.msra.mxu0 0.0
    %1231 = vmatprep.subr.mxu0 0.0
    %1232 = vmatpush1.msra.mxu0 0.0
    %1233 = vmatprep.subr.mxu0 0.0
    %1234 = vmatpush1.msra.mxu0 0.0
    %1235 = vmatprep.mubr.f32.mxu0 0.0
    %1236 = vmatmul.mubr.f32.gmra.mrb[0].mxu0 %v1167
    %v1237 = vpop.f32.mrb[0].mxu0
    %v1238 = vadd.f32 0.0, %v1237
    %v1239 = vpop.f32.mrb[0].mxu0
    %1240 = vmatprep.mubr.f32.mxu0 0.0
    %1241 = vmatmul.mubr.f32.gmra.mrb[0].mxu0 %v1169
    %v1242 = vpop.f32.mrb[0].mxu0
    %v1243 = vadd.f32 0.0, %v1242
    %v1244 = vpop.f32.mrb[0].mxu0
    %1245 = vdwg.mxu0
    %1248 = vrot.lane.b32.xlu0 %v1238, 64
    %v1249 = vpop.permute.xlu0 %1248
    %1250 = vrot.lane.b32.xlu0 %v1243, 64
    %v1251 = vpop.permute.xlu0 %1250
    %v1254 = vrcp.pop %v1249
    %v1255 = vmul.f32 %v1154, %v1254
    %v1256 = vrcp.pop %v1251
    %v1257 = vmul.f32 %v1156, %v1256
    %v1258 = vld [vmem:[%s10] ss:$2 sm:$0x3]
    %v1259 = vld [vmem:[%s10 + $0x4] sm:$0x1]
    %s1260 = scalar_lea.vmem %s10, 1
    %v1261 = vld [vmem:[%s1260] ss:$2 sm:$0x3]
    %v1262 = vld [vmem:[%s10 + $0x5] sm:$0x1]
    %v1263 = vld [vmem:[%s12] sm:$0xff]
    %v1264 = vld [vmem:[%s12 + $0x8] sm:$0xff]
    %v1265 = vld [vmem:[%s12 + $0x10] sm:$0xff]
    %v1266 = vld [vmem:[%s12 + $0x18] sm:$0xff]
    %v1267 = vld [vmem:[%s7] sm:$0xff]
    %v1268 = vld [vmem:[%s7 + $0x8] sm:$0xff]
    %v1269 = vld [vmem:[%s7 + $0x10] sm:$0xff]
    %v1270 = vld [vmem:[%s7 + $0x18] sm:$0xff]
    %v1271 = vld [vmem:[%s8] sm:$0x1]
    %1273 = vset.pattern.permute.xlu0 0
    %1274 = vperm.xlu0 %1273, %v1129
    %v1275 = vpop.permute.xlu0 %1274
    %v1278 = vlaneseq
    %v1279 = vshrl.u32 %v1278, 7
    %v1280 = vsub.s32 0, %v1279
    %v1281 = vrot.slane %v1258, %v1280
    %v1282 = vlaneseq
    %v1283 = vshrl.u32 %v1282, 7
    %v1284 = vsub.s32 1, %v1283
    %v1285 = vrot.slane %v1258, %v1284
    %v1288 = vsub.f32 %v1275, %v1281
    %v1289 = vsub.f32 %v1275, %v1285
    %v1290 = vand.u32 2147483647, %v1288
    %v1291 = vand.u32 2147483647, %v1289
    %v1292 = vsub.f32 1.0, %v1290
    %v1293 = vsub.f32 1.0, %v1291
    %v1294 = vmax.f32 %v1292, 0.0
    %v1295 = vmax.f32 %v1293, 0.0
    %1297 = vset.pattern.permute.xlu0 32
    %1298 = vperm.xlu0 %1297, %v1142
    %v1299 = vpop.permute.xlu0 %1298
    %v1302 = vlaneseq
    %v1303 = vshrl.u32 %v1302, 7
    %v1304 = vsub.s32 0, %v1303
    %v1305 = vrot.slane %v1261, %v1304
    %v1306 = vlaneseq
    %v1307 = vshrl.u32 %v1306, 7
    %v1308 = vsub.s32 1, %v1307
    %v1309 = vrot.slane %v1261, %v1308
    %v1312 = vsub.f32 %v1299, %v1305
    %v1313 = vsub.f32 %v1299, %v1309
    %v1314 = vand.u32 2147483647, %v1312
    %v1315 = vand.u32 2147483647, %v1313
    %v1316 = vsub.f32 1.0, %v1314
    %v1317 = vsub.f32 1.0, %v1315
    %v1318 = vmax.f32 %v1316, 0.0
    %v1319 = vmax.f32 %v1317, 0.0
    %v1320 = vmul.f32 %v1294, %v1318
    %v1321 = vmul.f32 %v1295, %v1319
    %1323 = vset.pattern.permute.xlu0 64
    %1324 = vperm.xlu0 %1323, %v1255
    %v1325 = vpop.permute.xlu0 %1324
    %v1327 = vmul.f32 %v1325, %v1320
    %v1328 = vmul.f32 %v1325, %v1321
    %v1329 = vadd.f32 %v1327, 0.0
    %v1330 = vadd.f32 %v1328, 0.0
    %1331 = vset.pattern.permute.xlu0 1
    %1332 = vperm.xlu0 %1331, %v1129
    %v1333 = vpop.permute.xlu0 %1332
    %v1335 = vsub.f32 %v1333, %v1281
    %v1336 = vsub.f32 %v1333, %v1285
    %v1337 = vand.u32 2147483647, %v1335
    %v1338 = vand.u32 2147483647, %v1336
    %v1339 = vsub.f32 1.0, %v1337
    %v1340 = vsub.f32 1.0, %v1338
    %v1341 = vmax.f32 %v1339, 0.0
    %v1342 = vmax.f32 %v1340, 0.0
    %1343 = vset.pattern.permute.xlu0 33
    %1344 = vperm.xlu0 %1343, %v1142
    %v1345 = vpop.permute.xlu0 %1344
    %v1347 = vsub.f32 %v1345, %v1305
    %v1348 = vsub.f32 %v1345, %v1309
    %v1349 = vand.u32 2147483647, %v1347
    %v1350 = vand.u32 2147483647, %v1348
    %v1351 = vsub.f32 1.0, %v1349
    %v1352 = vsub.f32 1.0, %v1350
    %v1353 = vmax.f32 %v1351, 0.0
    %v1354 = vmax.f32 %v1352, 0.0
    %v1355 = vmul.f32 %v1341, %v1353
    %v1356 = vmul.f32 %v1342, %v1354
    %1357 = vset.pattern.permute.xlu0 65
    %1358 = vperm.xlu0 %1357, %v1255
    %v1359 = vpop.permute.xlu0 %1358
    %v1361 = vmul.f32 %v1359, %v1355
    %v1362 = vmul.f32 %v1359, %v1356
    %v1363 = vadd.f32 %v1329, %v1361
    %v1364 = vadd.f32 %v1330, %v1362
    %1365 = vset.pattern.permute.xlu0 2
    %1366 = vperm.xlu0 %1365, %v1129
    %v1367 = vpop.permute.xlu0 %1366
    %v1369 = vsub.f32 %v1367, %v1281
    %v1370 = vsub.f32 %v1367, %v1285
    %v1371 = vand.u32 2147483647, %v1369
    %v1372 = vand.u32 2147483647, %v1370
    %v1373 = vsub.f32 1.0, %v1371
    %v1374 = vsub.f32 1.0, %v1372
    %v1375 = vmax.f32 %v1373, 0.0
    %v1376 = vmax.f32 %v1374, 0.0
    %1377 = vset.pattern.permute.xlu0 34
    %1378 = vperm.xlu0 %1377, %v1142
    %v1379 = vpop.permute.xlu0 %1378
    %v1381 = vsub.f32 %v1379, %v1305
    %v1382 = vsub.f32 %v1379, %v1309
    %v1383 = vand.u32 2147483647, %v1381
    %v1384 = vand.u32 2147483647, %v1382
    %v1385 = vsub.f32 1.0, %v1383
    %v1386 = vsub.f32 1.0, %v1384
    %v1387 = vmax.f32 %v1385, 0.0
    %v1388 = vmax.f32 %v1386, 0.0
    %v1389 = vmul.f32 %v1375, %v1387
    %v1390 = vmul.f32 %v1376, %v1388
    %1391 = vset.pattern.permute.xlu0 66
    %1392 = vperm.xlu0 %1391, %v1255
    %v1393 = vpop.permute.xlu0 %1392
    %v1395 = vmul.f32 %v1393, %v1389
    %v1396 = vmul.f32 %v1393, %v1390
    %v1397 = vadd.f32 %v1363, %v1395
    %v1398 = vadd.f32 %v1364, %v1396
    %1399 = vset.pattern.permute.xlu0 3
    %1400 = vperm.xlu0 %1399, %v1129
    %v1401 = vpop.permute.xlu0 %1400
    %v1403 = vsub.f32 %v1401, %v1281
    %v1404 = vsub.f32 %v1401, %v1285
    %v1405 = vand.u32 2147483647, %v1403
    %v1406 = vand.u32 2147483647, %v1404
    %v1407 = vsub.f32 1.0, %v1405
    %v1408 = vsub.f32 1.0, %v1406
    %v1409 = vmax.f32 %v1407, 0.0
    %v1410 = vmax.f32 %v1408, 0.0
    %1411 = vset.pattern.permute.xlu0 35
    %1412 = vperm.xlu0 %1411, %v1142
    %v1413 = vpop.permute.xlu0 %1412
    %v1415 = vsub.f32 %v1413, %v1305
    %v1416 = vsub.f32 %v1413, %v1309
    %v1417 = vand.u32 2147483647, %v1415
    %v1418 = vand.u32 2147483647, %v1416
    %v1419 = vsub.f32 1.0, %v1417
    %v1420 = vsub.f32 1.0, %v1418
    %v1421 = vmax.f32 %v1419, 0.0
    %v1422 = vmax.f32 %v1420, 0.0
    %v1423 = vmul.f32 %v1409, %v1421
    %v1424 = vmul.f32 %v1410, %v1422
    %1425 = vset.pattern.permute.xlu0 67
    %1426 = vperm.xlu0 %1425, %v1255
    %v1427 = vpop.permute.xlu0 %1426
    %v1429 = vmul.f32 %v1427, %v1423
    %v1430 = vmul.f32 %v1427, %v1424
    %v1431 = vadd.f32 %v1397, %v1429
    %v1432 = vadd.f32 %v1398, %v1430
    %1433 = vset.pattern.permute.xlu0 4
    %1434 = vperm.xlu0 %1433, %v1129
    %v1435 = vpop.permute.xlu0 %1434
    %v1437 = vlaneseq
    %v1438 = vshrl.u32 %v1437, 7
    %v1439 = vsub.s32 0, %v1438
    %v1440 = vrot.slane %v1259, %v1439
    %v1441 = vsub.f32 %v1435, %v1440
    %v1442 = vand.u32 2147483647, %v1441
    %v1443 = vsub.f32 1.0, %v1442
    %v1444 = vmax.f32 %v1443, 0.0
    %1445 = vset.pattern.permute.xlu0 36
    %1446 = vperm.xlu0 %1445, %v1142
    %v1447 = vpop.permute.xlu0 %1446
    %v1449 = vlaneseq
    %v1450 = vshrl.u32 %v1449, 7
    %v1451 = vsub.s32 0, %v1450
    %v1452 = vrot.slane %v1262, %v1451
    %v1453 = vsub.f32 %v1447, %v1452
    %v1454 = vand.u32 2147483647, %v1453
    %v1455 = vsub.f32 1.0, %v1454
    %v1456 = vmax.f32 %v1455, 0.0
    %v1457 = vmul.f32 %v1444, %v1456
    %1458 = vset.pattern.permute.xlu0 68
    %1459 = vperm.xlu0 %1458, %v1255
    %v1460 = vpop.permute.xlu0 %1459
    %v1462 = vmul.f32 %v1460, %v1457
    %v1463 = vadd.f32 %v1462, 0.0
    %1464 = vset.pattern.permute.xlu0 5
    %1465 = vperm.xlu0 %1464, %v1129
    %v1466 = vpop.permute.xlu0 %1465
    %v1468 = vsub.f32 %v1466, %v1440
    %v1469 = vand.u32 2147483647, %v1468
    %v1470 = vsub.f32 1.0, %v1469
    %v1471 = vmax.f32 %v1470, 0.0
    %1472 = vset.pattern.permute.xlu0 37
    %1473 = vperm.xlu0 %1472, %v1142
    %v1474 = vpop.permute.xlu0 %1473
    %v1476 = vsub.f32 %v1474, %v1452
    %v1477 = vand.u32 2147483647, %v1476
    %v1478 = vsub.f32 1.0, %v1477
    %v1479 = vmax.f32 %v1478, 0.0
    %v1480 = vmul.f32 %v1471, %v1479
    %1481 = vset.pattern.permute.xlu0 69
    %1482 = vperm.xlu0 %1481, %v1255
    %v1483 = vpop.permute.xlu0 %1482
    %v1485 = vmul.f32 %v1483, %v1480
    %v1486 = vadd.f32 %v1463, %v1485
    %1487 = vset.pattern.permute.xlu0 6
    %1488 = vperm.xlu0 %1487, %v1129
    %v1489 = vpop.permute.xlu0 %1488
    %v1491 = vsub.f32 %v1489, %v1440
    %v1492 = vand.u32 2147483647, %v1491
    %v1493 = vsub.f32 1.0, %v1492
    %v1494 = vmax.f32 %v1493, 0.0
    %1495 = vset.pattern.permute.xlu0 38
    %1496 = vperm.xlu0 %1495, %v1142
    %v1497 = vpop.permute.xlu0 %1496
    %v1499 = vsub.f32 %v1497, %v1452
    %v1500 = vand.u32 2147483647, %v1499
    %v1501 = vsub.f32 1.0, %v1500
    %v1502 = vmax.f32 %v1501, 0.0
    %v1503 = vmul.f32 %v1494, %v1502
    %1504 = vset.pattern.permute.xlu0 70
    %1505 = vperm.xlu0 %1504, %v1255
    %v1506 = vpop.permute.xlu0 %1505
    %v1508 = vmul.f32 %v1506, %v1503
    %v1509 = vadd.f32 %v1486, %v1508
    %1510 = vset.pattern.permute.xlu0 7
    %1511 = vperm.xlu0 %1510, %v1129
    %v1512 = vpop.permute.xlu0 %1511
    %v1514 = vsub.f32 %v1512, %v1440
    %v1515 = vand.u32 2147483647, %v1514
    %v1516 = vsub.f32 1.0, %v1515
    %v1517 = vmax.f32 %v1516, 0.0
    %1518 = vset.pattern.permute.xlu0 39
    %1519 = vperm.xlu0 %1518, %v1142
    %v1520 = vpop.permute.xlu0 %1519
    %v1522 = vsub.f32 %v1520, %v1452
    %v1523 = vand.u32 2147483647, %v1522
    %v1524 = vsub.f32 1.0, %v1523
    %v1525 = vmax.f32 %v1524, 0.0
    %v1526 = vmul.f32 %v1517, %v1525
    %1527 = vset.pattern.permute.xlu0 71
    %1528 = vperm.xlu0 %1527, %v1255
    %v1529 = vpop.permute.xlu0 %1528
    %v1531 = vmul.f32 %v1529, %v1526
    %v1532 = vadd.f32 %v1509, %v1531
    %1533 = vset.pattern.permute.xlu0 8
    %1534 = vperm.xlu0 %1533, %v1129
    %v1535 = vpop.permute.xlu0 %1534
    %v1537 = vsub.f32 %v1535, %v1281
    %v1538 = vsub.f32 %v1535, %v1285
    %v1539 = vand.u32 2147483647, %v1537
    %v1540 = vand.u32 2147483647, %v1538
    %v1541 = vsub.f32 1.0, %v1539
    %v1542 = vsub.f32 1.0, %v1540
    %v1543 = vmax.f32 %v1541, 0.0
    %v1544 = vmax.f32 %v1542, 0.0
    %1545 = vset.pattern.permute.xlu0 40
    %1546 = vperm.xlu0 %1545, %v1142
    %v1547 = vpop.permute.xlu0 %1546
    %v1549 = vsub.f32 %v1547, %v1305
    %v1550 = vsub.f32 %v1547, %v1309
    %v1551 = vand.u32 2147483647, %v1549
    %v1552 = vand.u32 2147483647, %v1550
    %v1553 = vsub.f32 1.0, %v1551
    %v1554 = vsub.f32 1.0, %v1552
    %v1555 = vmax.f32 %v1553, 0.0
    %v1556 = vmax.f32 %v1554, 0.0
    %v1557 = vmul.f32 %v1543, %v1555
    %v1558 = vmul.f32 %v1544, %v1556
    %1559 = vset.pattern.permute.xlu0 72
    %1560 = vperm.xlu0 %1559, %v1255
    %v1561 = vpop.permute.xlu0 %1560
    %v1563 = vmul.f32 %v1561, %v1557
    %v1564 = vmul.f32 %v1561, %v1558
    %v1565 = vadd.f32 %v1563, 0.0
    %v1566 = vadd.f32 %v1564, 0.0
    %1567 = vset.pattern.permute.xlu0 9
    %1568 = vperm.xlu0 %1567, %v1129
    %v1569 = vpop.permute.xlu0 %1568
    %v1571 = vsub.f32 %v1569, %v1281
    %v1572 = vsub.f32 %v1569, %v1285
    %v1573 = vand.u32 2147483647, %v1571
    %v1574 = vand.u32 2147483647, %v1572
    %v1575 = vsub.f32 1.0, %v1573
    %v1576 = vsub.f32 1.0, %v1574
    %v1577 = vmax.f32 %v1575, 0.0
    %v1578 = vmax.f32 %v1576, 0.0
    %1579 = vset.pattern.permute.xlu0 41
    %1580 = vperm.xlu0 %1579, %v1142
    %v1581 = vpop.permute.xlu0 %1580
    %v1583 = vsub.f32 %v1581, %v1305
    %v1584 = vsub.f32 %v1581, %v1309
    %v1585 = vand.u32 2147483647, %v1583
    %v1586 = vand.u32 2147483647, %v1584
    %v1587 = vsub.f32 1.0, %v1585
    %v1588 = vsub.f32 1.0, %v1586
    %v1589 = vmax.f32 %v1587, 0.0
    %v1590 = vmax.f32 %v1588, 0.0
    %v1591 = vmul.f32 %v1577, %v1589
    %v1592 = vmul.f32 %v1578, %v1590
    %1593 = vset.pattern.permute.xlu0 73
    %1594 = vperm.xlu0 %1593, %v1255
    %v1595 = vpop.permute.xlu0 %1594
    %v1597 = vmul.f32 %v1595, %v1591
    %v1598 = vmul.f32 %v1595, %v1592
    %v1599 = vadd.f32 %v1565, %v1597
    %v1600 = vadd.f32 %v1566, %v1598
    %1601 = vset.pattern.permute.xlu0 10
    %1602 = vperm.xlu0 %1601, %v1129
    %v1603 = vpop.permute.xlu0 %1602
    %v1605 = vsub.f32 %v1603, %v1281
    %v1606 = vsub.f32 %v1603, %v1285
    %v1607 = vand.u32 2147483647, %v1605
    %v1608 = vand.u32 2147483647, %v1606
    %v1609 = vsub.f32 1.0, %v1607
    %v1610 = vsub.f32 1.0, %v1608
    %v1611 = vmax.f32 %v1609, 0.0
    %v1612 = vmax.f32 %v1610, 0.0
    %1613 = vset.pattern.permute.xlu0 42
    %1614 = vperm.xlu0 %1613, %v1142
    %v1615 = vpop.permute.xlu0 %1614
    %v1617 = vsub.f32 %v1615, %v1305
    %v1618 = vsub.f32 %v1615, %v1309
    %v1619 = vand.u32 2147483647, %v1617
    %v1620 = vand.u32 2147483647, %v1618
    %v1621 = vsub.f32 1.0, %v1619
    %v1622 = vsub.f32 1.0, %v1620
    %v1623 = vmax.f32 %v1621, 0.0
    %v1624 = vmax.f32 %v1622, 0.0
    %v1625 = vmul.f32 %v1611, %v1623
    %v1626 = vmul.f32 %v1612, %v1624
    %1627 = vset.pattern.permute.xlu0 74
    %1628 = vperm.xlu0 %1627, %v1255
    %v1629 = vpop.permute.xlu0 %1628
    %v1631 = vmul.f32 %v1629, %v1625
    %v1632 = vmul.f32 %v1629, %v1626
    %v1633 = vadd.f32 %v1599, %v1631
    %v1634 = vadd.f32 %v1600, %v1632
    %1635 = vset.pattern.permute.xlu0 11
    %1636 = vperm.xlu0 %1635, %v1129
    %v1637 = vpop.permute.xlu0 %1636
    %v1639 = vsub.f32 %v1637, %v1281
    %v1640 = vsub.f32 %v1637, %v1285
    %v1641 = vand.u32 2147483647, %v1639
    %v1642 = vand.u32 2147483647, %v1640
    %v1643 = vsub.f32 1.0, %v1641
    %v1644 = vsub.f32 1.0, %v1642
    %v1645 = vmax.f32 %v1643, 0.0
    %v1646 = vmax.f32 %v1644, 0.0
    %1647 = vset.pattern.permute.xlu0 43
    %1648 = vperm.xlu0 %1647, %v1142
    %v1649 = vpop.permute.xlu0 %1648
    %v1651 = vsub.f32 %v1649, %v1305
    %v1652 = vsub.f32 %v1649, %v1309
    %v1653 = vand.u32 2147483647, %v1651
    %v1654 = vand.u32 2147483647, %v1652
    %v1655 = vsub.f32 1.0, %v1653
    %v1656 = vsub.f32 1.0, %v1654
    %v1657 = vmax.f32 %v1655, 0.0
    %v1658 = vmax.f32 %v1656, 0.0
    %v1659 = vmul.f32 %v1645, %v1657
    %v1660 = vmul.f32 %v1646, %v1658
    %1661 = vset.pattern.permute.xlu0 75
    %1662 = vperm.xlu0 %1661, %v1255
    %v1663 = vpop.permute.xlu0 %1662
    %v1665 = vmul.f32 %v1663, %v1659
    %v1666 = vmul.f32 %v1663, %v1660
    %v1667 = vadd.f32 %v1633, %v1665
    %v1668 = vadd.f32 %v1634, %v1666
    %1669 = vset.pattern.permute.xlu0 12
    %1670 = vperm.xlu0 %1669, %v1129
    %v1671 = vpop.permute.xlu0 %1670
    %v1673 = vsub.f32 %v1671, %v1440
    %v1674 = vand.u32 2147483647, %v1673
    %v1675 = vsub.f32 1.0, %v1674
    %v1676 = vmax.f32 %v1675, 0.0
    %1677 = vset.pattern.permute.xlu0 44
    %1678 = vperm.xlu0 %1677, %v1142
    %v1679 = vpop.permute.xlu0 %1678
    %v1681 = vsub.f32 %v1679, %v1452
    %v1682 = vand.u32 2147483647, %v1681
    %v1683 = vsub.f32 1.0, %v1682
    %v1684 = vmax.f32 %v1683, 0.0
    %v1685 = vmul.f32 %v1676, %v1684
    %1686 = vset.pattern.permute.xlu0 76
    %1687 = vperm.xlu0 %1686, %v1255
    %v1688 = vpop.permute.xlu0 %1687
    %v1690 = vmul.f32 %v1688, %v1685
    %v1691 = vadd.f32 %v1690, 0.0
    %1692 = vset.pattern.permute.xlu0 13
    %1693 = vperm.xlu0 %1692, %v1129
    %v1694 = vpop.permute.xlu0 %1693
    %v1696 = vsub.f32 %v1694, %v1440
    %v1697 = vand.u32 2147483647, %v1696
    %v1698 = vsub.f32 1.0, %v1697
    %v1699 = vmax.f32 %v1698, 0.0
    %1700 = vset.pattern.permute.xlu0 45
    %1701 = vperm.xlu0 %1700, %v1142
    %v1702 = vpop.permute.xlu0 %1701
    %v1704 = vsub.f32 %v1702, %v1452
    %v1705 = vand.u32 2147483647, %v1704
    %v1706 = vsub.f32 1.0, %v1705
    %v1707 = vmax.f32 %v1706, 0.0
    %v1708 = vmul.f32 %v1699, %v1707
    %1709 = vset.pattern.permute.xlu0 77
    %1710 = vperm.xlu0 %1709, %v1255
    %v1711 = vpop.permute.xlu0 %1710
    %v1713 = vmul.f32 %v1711, %v1708
    %v1714 = vadd.f32 %v1691, %v1713
    %1715 = vset.pattern.permute.xlu0 14
    %1716 = vperm.xlu0 %1715, %v1129
    %v1717 = vpop.permute.xlu0 %1716
    %v1719 = vsub.f32 %v1717, %v1440
    %v1720 = vand.u32 2147483647, %v1719
    %v1721 = vsub.f32 1.0, %v1720
    %v1722 = vmax.f32 %v1721, 0.0
    %1723 = vset.pattern.permute.xlu0 46
    %1724 = vperm.xlu0 %1723, %v1142
    %v1725 = vpop.permute.xlu0 %1724
    %v1727 = vsub.f32 %v1725, %v1452
    %v1728 = vand.u32 2147483647, %v1727
    %v1729 = vsub.f32 1.0, %v1728
    %v1730 = vmax.f32 %v1729, 0.0
    %v1731 = vmul.f32 %v1722, %v1730
    %1732 = vset.pattern.permute.xlu0 78
    %1733 = vperm.xlu0 %1732, %v1255
    %v1734 = vpop.permute.xlu0 %1733
    %v1736 = vmul.f32 %v1734, %v1731
    %v1737 = vadd.f32 %v1714, %v1736
    %1738 = vset.pattern.permute.xlu0 15
    %1739 = vperm.xlu0 %1738, %v1129
    %v1740 = vpop.permute.xlu0 %1739
    %v1742 = vsub.f32 %v1740, %v1440
    %v1743 = vand.u32 2147483647, %v1742
    %v1744 = vsub.f32 1.0, %v1743
    %v1745 = vmax.f32 %v1744, 0.0
    %1746 = vset.pattern.permute.xlu0 47
    %1747 = vperm.xlu0 %1746, %v1142
    %v1748 = vpop.permute.xlu0 %1747
    %v1750 = vsub.f32 %v1748, %v1452
    %v1751 = vand.u32 2147483647, %v1750
    %v1752 = vsub.f32 1.0, %v1751
    %v1753 = vmax.f32 %v1752, 0.0
    %v1754 = vmul.f32 %v1745, %v1753
    %1755 = vset.pattern.permute.xlu0 79
    %1756 = vperm.xlu0 %1755, %v1255
    %v1757 = vpop.permute.xlu0 %1756
    %v1759 = vmul.f32 %v1757, %v1754
    %v1760 = vadd.f32 %v1737, %v1759
    %1761 = vset.pattern.permute.xlu0 16
    %1762 = vperm.xlu0 %1761, %v1129
    %v1763 = vpop.permute.xlu0 %1762
    %v1765 = vsub.f32 %v1763, %v1281
    %v1766 = vsub.f32 %v1763, %v1285
    %v1767 = vand.u32 2147483647, %v1765
    %v1768 = vand.u32 2147483647, %v1766
    %v1769 = vsub.f32 1.0, %v1767
    %v1770 = vsub.f32 1.0, %v1768
    %v1771 = vmax.f32 %v1769, 0.0
    %v1772 = vmax.f32 %v1770, 0.0
    %1773 = vset.pattern.permute.xlu0 48
    %1774 = vperm.xlu0 %1773, %v1142
    %v1775 = vpop.permute.xlu0 %1774
    %v1777 = vsub.f32 %v1775, %v1305
    %v1778 = vsub.f32 %v1775, %v1309
    %v1779 = vand.u32 2147483647, %v1777
    %v1780 = vand.u32 2147483647, %v1778
    %v1781 = vsub.f32 1.0, %v1779
    %v1782 = vsub.f32 1.0, %v1780
    %v1783 = vmax.f32 %v1781, 0.0
    %v1784 = vmax.f32 %v1782, 0.0
    %v1785 = vmul.f32 %v1771, %v1783
    %v1786 = vmul.f32 %v1772, %v1784
    %1787 = vset.pattern.permute.xlu0 80
    %1788 = vperm.xlu0 %1787, %v1255
    %v1789 = vpop.permute.xlu0 %1788
    %v1791 = vmul.f32 %v1789, %v1785
    %v1792 = vmul.f32 %v1789, %v1786
    %v1793 = vadd.f32 %v1791, 0.0
    %v1794 = vadd.f32 %v1792, 0.0
    %1795 = vset.pattern.permute.xlu0 17
    %1796 = vperm.xlu0 %1795, %v1129
    %v1797 = vpop.permute.xlu0 %1796
    %v1799 = vsub.f32 %v1797, %v1281
    %v1800 = vsub.f32 %v1797, %v1285
    %v1801 = vand.u32 2147483647, %v1799
    %v1802 = vand.u32 2147483647, %v1800
    %v1803 = vsub.f32 1.0, %v1801
    %v1804 = vsub.f32 1.0, %v1802
    %v1805 = vmax.f32 %v1803, 0.0
    %v1806 = vmax.f32 %v1804, 0.0
    %1807 = vset.pattern.permute.xlu0 49
    %1808 = vperm.xlu0 %1807, %v1142
    %v1809 = vpop.permute.xlu0 %1808
    %v1811 = vsub.f32 %v1809, %v1305
    %v1812 = vsub.f32 %v1809, %v1309
    %v1813 = vand.u32 2147483647, %v1811
    %v1814 = vand.u32 2147483647, %v1812
    %v1815 = vsub.f32 1.0, %v1813
    %v1816 = vsub.f32 1.0, %v1814
    %v1817 = vmax.f32 %v1815, 0.0
    %v1818 = vmax.f32 %v1816, 0.0
    %v1819 = vmul.f32 %v1805, %v1817
    %v1820 = vmul.f32 %v1806, %v1818
    %1821 = vset.pattern.permute.xlu0 81
    %1822 = vperm.xlu0 %1821, %v1255
    %v1823 = vpop.permute.xlu0 %1822
    %v1825 = vmul.f32 %v1823, %v1819
    %v1826 = vmul.f32 %v1823, %v1820
    %v1827 = vadd.f32 %v1793, %v1825
    %v1828 = vadd.f32 %v1794, %v1826
    %1829 = vset.pattern.permute.xlu0 18
    %1830 = vperm.xlu0 %1829, %v1129
    %v1831 = vpop.permute.xlu0 %1830
    %v1833 = vsub.f32 %v1831, %v1281
    %v1834 = vsub.f32 %v1831, %v1285
    %v1835 = vand.u32 2147483647, %v1833
    %v1836 = vand.u32 2147483647, %v1834
    %v1837 = vsub.f32 1.0, %v1835
    %v1838 = vsub.f32 1.0, %v1836
    %v1839 = vmax.f32 %v1837, 0.0
    %v1840 = vmax.f32 %v1838, 0.0
    %1841 = vset.pattern.permute.xlu0 50
    %1842 = vperm.xlu0 %1841, %v1142
    %v1843 = vpop.permute.xlu0 %1842
    %v1845 = vsub.f32 %v1843, %v1305
    %v1846 = vsub.f32 %v1843, %v1309
    %v1847 = vand.u32 2147483647, %v1845
    %v1848 = vand.u32 2147483647, %v1846
    %v1849 = vsub.f32 1.0, %v1847
    %v1850 = vsub.f32 1.0, %v1848
    %v1851 = vmax.f32 %v1849, 0.0
    %v1852 = vmax.f32 %v1850, 0.0
    %v1853 = vmul.f32 %v1839, %v1851
    %v1854 = vmul.f32 %v1840, %v1852
    %1855 = vset.pattern.permute.xlu0 82
    %1856 = vperm.xlu0 %1855, %v1255
    %v1857 = vpop.permute.xlu0 %1856
    %v1859 = vmul.f32 %v1857, %v1853
    %v1860 = vmul.f32 %v1857, %v1854
    %v1861 = vadd.f32 %v1827, %v1859
    %v1862 = vadd.f32 %v1828, %v1860
    %1863 = vset.pattern.permute.xlu0 19
    %1864 = vperm.xlu0 %1863, %v1129
    %v1865 = vpop.permute.xlu0 %1864
    %v1867 = vsub.f32 %v1865, %v1281
    %v1868 = vsub.f32 %v1865, %v1285
    %v1869 = vand.u32 2147483647, %v1867
    %v1870 = vand.u32 2147483647, %v1868
    %v1871 = vsub.f32 1.0, %v1869
    %v1872 = vsub.f32 1.0, %v1870
    %v1873 = vmax.f32 %v1871, 0.0
    %v1874 = vmax.f32 %v1872, 0.0
    %1875 = vset.pattern.permute.xlu0 51
    %1876 = vperm.xlu0 %1875, %v1142
    %v1877 = vpop.permute.xlu0 %1876
    %v1879 = vsub.f32 %v1877, %v1305
    %v1880 = vsub.f32 %v1877, %v1309
    %v1881 = vand.u32 2147483647, %v1879
    %v1882 = vand.u32 2147483647, %v1880
    %v1883 = vsub.f32 1.0, %v1881
    %v1884 = vsub.f32 1.0, %v1882
    %v1885 = vmax.f32 %v1883, 0.0
    %v1886 = vmax.f32 %v1884, 0.0
    %v1887 = vmul.f32 %v1873, %v1885
    %v1888 = vmul.f32 %v1874, %v1886
    %1889 = vset.pattern.permute.xlu0 83
    %1890 = vperm.xlu0 %1889, %v1255
    %v1891 = vpop.permute.xlu0 %1890
    %v1893 = vmul.f32 %v1891, %v1887
    %v1894 = vmul.f32 %v1891, %v1888
    %v1895 = vadd.f32 %v1861, %v1893
    %v1896 = vadd.f32 %v1862, %v1894
    %1897 = vset.pattern.permute.xlu0 20
    %1898 = vperm.xlu0 %1897, %v1129
    %v1899 = vpop.permute.xlu0 %1898
    %v1901 = vsub.f32 %v1899, %v1440
    %v1902 = vand.u32 2147483647, %v1901
    %v1903 = vsub.f32 1.0, %v1902
    %v1904 = vmax.f32 %v1903, 0.0
    %1905 = vset.pattern.permute.xlu0 52
    %1906 = vperm.xlu0 %1905, %v1142
    %v1907 = vpop.permute.xlu0 %1906
    %v1909 = vsub.f32 %v1907, %v1452
    %v1910 = vand.u32 2147483647, %v1909
    %v1911 = vsub.f32 1.0, %v1910
    %v1912 = vmax.f32 %v1911, 0.0
    %v1913 = vmul.f32 %v1904, %v1912
    %1914 = vset.pattern.permute.xlu0 84
    %1915 = vperm.xlu0 %1914, %v1255
    %v1916 = vpop.permute.xlu0 %1915
    %v1918 = vmul.f32 %v1916, %v1913
    %v1919 = vadd.f32 %v1918, 0.0
    %1920 = vset.pattern.permute.xlu0 21
    %1921 = vperm.xlu0 %1920, %v1129
    %v1922 = vpop.permute.xlu0 %1921
    %v1924 = vsub.f32 %v1922, %v1440
    %v1925 = vand.u32 2147483647, %v1924
    %v1926 = vsub.f32 1.0, %v1925
    %v1927 = vmax.f32 %v1926, 0.0
    %1928 = vset.pattern.permute.xlu0 53
    %1929 = vperm.xlu0 %1928, %v1142
    %v1930 = vpop.permute.xlu0 %1929
    %v1932 = vsub.f32 %v1930, %v1452
    %v1933 = vand.u32 2147483647, %v1932
    %v1934 = vsub.f32 1.0, %v1933
    %v1935 = vmax.f32 %v1934, 0.0
    %v1936 = vmul.f32 %v1927, %v1935
    %1937 = vset.pattern.permute.xlu0 85
    %1938 = vperm.xlu0 %1937, %v1255
    %v1939 = vpop.permute.xlu0 %1938
    %v1941 = vmul.f32 %v1939, %v1936
    %v1942 = vadd.f32 %v1919, %v1941
    %1943 = vset.pattern.permute.xlu0 22
    %1944 = vperm.xlu0 %1943, %v1129
    %v1945 = vpop.permute.xlu0 %1944
    %v1947 = vsub.f32 %v1945, %v1440
    %v1948 = vand.u32 2147483647, %v1947
    %v1949 = vsub.f32 1.0, %v1948
    %v1950 = vmax.f32 %v1949, 0.0
    %1951 = vset.pattern.permute.xlu0 54
    %1952 = vperm.xlu0 %1951, %v1142
    %v1953 = vpop.permute.xlu0 %1952
    %v1955 = vsub.f32 %v1953, %v1452
    %v1956 = vand.u32 2147483647, %v1955
    %v1957 = vsub.f32 1.0, %v1956
    %v1958 = vmax.f32 %v1957, 0.0
    %v1959 = vmul.f32 %v1950, %v1958
    %1960 = vset.pattern.permute.xlu0 86
    %1961 = vperm.xlu0 %1960, %v1255
    %v1962 = vpop.permute.xlu0 %1961
    %v1964 = vmul.f32 %v1962, %v1959
    %v1965 = vadd.f32 %v1942, %v1964
    %1966 = vset.pattern.permute.xlu0 23
    %1967 = vperm.xlu0 %1966, %v1129
    %v1968 = vpop.permute.xlu0 %1967
    %v1970 = vsub.f32 %v1968, %v1440
    %v1971 = vand.u32 2147483647, %v1970
    %v1972 = vsub.f32 1.0, %v1971
    %v1973 = vmax.f32 %v1972, 0.0
    %1974 = vset.pattern.permute.xlu0 55
    %1975 = vperm.xlu0 %1974, %v1142
    %v1976 = vpop.permute.xlu0 %1975
    %v1978 = vsub.f32 %v1976, %v1452
    %v1979 = vand.u32 2147483647, %v1978
    %v1980 = vsub.f32 1.0, %v1979
    %v1981 = vmax.f32 %v1980, 0.0
    %v1982 = vmul.f32 %v1973, %v1981
    %1983 = vset.pattern.permute.xlu0 87
    %1984 = vperm.xlu0 %1983, %v1255
    %v1985 = vpop.permute.xlu0 %1984
    %v1987 = vmul.f32 %v1985, %v1982
    %v1988 = vadd.f32 %v1965, %v1987
    %1989 = vset.pattern.permute.xlu0 24
    %1990 = vperm.xlu0 %1989, %v1129
    %v1991 = vpop.permute.xlu0 %1990
    %v1993 = vsub.f32 %v1991, %v1281
    %v1994 = vsub.f32 %v1991, %v1285
    %v1995 = vand.u32 2147483647, %v1993
    %v1996 = vand.u32 2147483647, %v1994
    %v1997 = vsub.f32 1.0, %v1995
    %v1998 = vsub.f32 1.0, %v1996
    %v1999 = vmax.f32 %v1997, 0.0
    %v2000 = vmax.f32 %v1998, 0.0
    %2001 = vset.pattern.permute.xlu0 56
    %2002 = vperm.xlu0 %2001, %v1142
    %v2003 = vpop.permute.xlu0 %2002
    %v2005 = vsub.f32 %v2003, %v1305
    %v2006 = vsub.f32 %v2003, %v1309
    %v2007 = vand.u32 2147483647, %v2005
    %v2008 = vand.u32 2147483647, %v2006
    %v2009 = vsub.f32 1.0, %v2007
    %v2010 = vsub.f32 1.0, %v2008
    %v2011 = vmax.f32 %v2009, 0.0
    %v2012 = vmax.f32 %v2010, 0.0
    %v2013 = vmul.f32 %v1999, %v2011
    %v2014 = vmul.f32 %v2000, %v2012
    %2015 = vset.pattern.permute.xlu0 88
    %2016 = vperm.xlu0 %2015, %v1255
    %v2017 = vpop.permute.xlu0 %2016
    %v2019 = vmul.f32 %v2017, %v2013
    %v2020 = vmul.f32 %v2017, %v2014
    %v2021 = vadd.f32 %v2019, 0.0
    %v2022 = vadd.f32 %v2020, 0.0
    %2023 = vset.pattern.permute.xlu0 25
    %2024 = vperm.xlu0 %2023, %v1129
    %v2025 = vpop.permute.xlu0 %2024
    %v2027 = vsub.f32 %v2025, %v1281
    %v2028 = vsub.f32 %v2025, %v1285
    %v2029 = vand.u32 2147483647, %v2027
    %v2030 = vand.u32 2147483647, %v2028
    %v2031 = vsub.f32 1.0, %v2029
    %v2032 = vsub.f32 1.0, %v2030
    %v2033 = vmax.f32 %v2031, 0.0
    %v2034 = vmax.f32 %v2032, 0.0
    %2035 = vset.pattern.permute.xlu0 57
    %2036 = vperm.xlu0 %2035, %v1142
    %v2037 = vpop.permute.xlu0 %2036
    %v2039 = vsub.f32 %v2037, %v1305
    %v2040 = vsub.f32 %v2037, %v1309
    %v2041 = vand.u32 2147483647, %v2039
    %v2042 = vand.u32 2147483647, %v2040
    %v2043 = vsub.f32 1.0, %v2041
    %v2044 = vsub.f32 1.0, %v2042
    %v2045 = vmax.f32 %v2043, 0.0
    %v2046 = vmax.f32 %v2044, 0.0
    %v2047 = vmul.f32 %v2033, %v2045
    %v2048 = vmul.f32 %v2034, %v2046
    %2049 = vset.pattern.permute.xlu0 89
    %2050 = vperm.xlu0 %2049, %v1255
    %v2051 = vpop.permute.xlu0 %2050
    %v2053 = vmul.f32 %v2051, %v2047
    %v2054 = vmul.f32 %v2051, %v2048
    %v2055 = vadd.f32 %v2021, %v2053
    %v2056 = vadd.f32 %v2022, %v2054
    %2057 = vset.pattern.permute.xlu0 26
    %2058 = vperm.xlu0 %2057, %v1129
    %v2059 = vpop.permute.xlu0 %2058
    %v2061 = vsub.f32 %v2059, %v1281
    %v2062 = vsub.f32 %v2059, %v1285
    %v2063 = vand.u32 2147483647, %v2061
    %v2064 = vand.u32 2147483647, %v2062
    %v2065 = vsub.f32 1.0, %v2063
    %v2066 = vsub.f32 1.0, %v2064
    %v2067 = vmax.f32 %v2065, 0.0
    %v2068 = vmax.f32 %v2066, 0.0
    %2069 = vset.pattern.permute.xlu0 58
    %2070 = vperm.xlu0 %2069, %v1142
    %v2071 = vpop.permute.xlu0 %2070
    %v2073 = vsub.f32 %v2071, %v1305
    %v2074 = vsub.f32 %v2071, %v1309
    %v2075 = vand.u32 2147483647, %v2073
    %v2076 = vand.u32 2147483647, %v2074
    %v2077 = vsub.f32 1.0, %v2075
    %v2078 = vsub.f32 1.0, %v2076
    %v2079 = vmax.f32 %v2077, 0.0
    %v2080 = vmax.f32 %v2078, 0.0
    %v2081 = vmul.f32 %v2067, %v2079
    %v2082 = vmul.f32 %v2068, %v2080
    %2083 = vset.pattern.permute.xlu0 90
    %2084 = vperm.xlu0 %2083, %v1255
    %v2085 = vpop.permute.xlu0 %2084
    %v2087 = vmul.f32 %v2085, %v2081
    %v2088 = vmul.f32 %v2085, %v2082
    %v2089 = vadd.f32 %v2055, %v2087
    %v2090 = vadd.f32 %v2056, %v2088
    %2091 = vset.pattern.permute.xlu0 27
    %2092 = vperm.xlu0 %2091, %v1129
    %v2093 = vpop.permute.xlu0 %2092
    %v2095 = vsub.f32 %v2093, %v1281
    %v2096 = vsub.f32 %v2093, %v1285
    %v2097 = vand.u32 2147483647, %v2095
    %v2098 = vand.u32 2147483647, %v2096
    %v2099 = vsub.f32 1.0, %v2097
    %v2100 = vsub.f32 1.0, %v2098
    %v2101 = vmax.f32 %v2099, 0.0
    %v2102 = vmax.f32 %v2100, 0.0
    %2103 = vset.pattern.permute.xlu0 59
    %2104 = vperm.xlu0 %2103, %v1142
    %v2105 = vpop.permute.xlu0 %2104
    %v2107 = vsub.f32 %v2105, %v1305
    %v2108 = vsub.f32 %v2105, %v1309
    %v2109 = vand.u32 2147483647, %v2107
    %v2110 = vand.u32 2147483647, %v2108
    %v2111 = vsub.f32 1.0, %v2109
    %v2112 = vsub.f32 1.0, %v2110
    %v2113 = vmax.f32 %v2111, 0.0
    %v2114 = vmax.f32 %v2112, 0.0
    %v2115 = vmul.f32 %v2101, %v2113
    %v2116 = vmul.f32 %v2102, %v2114
    %2117 = vset.pattern.permute.xlu0 91
    %2118 = vperm.xlu0 %2117, %v1255
    %v2119 = vpop.permute.xlu0 %2118
    %v2121 = vmul.f32 %v2119, %v2115
    %v2122 = vmul.f32 %v2119, %v2116
    %v2123 = vadd.f32 %v2089, %v2121
    %v2124 = vadd.f32 %v2090, %v2122
    %2125 = vset.pattern.permute.xlu0 28
    %2126 = vperm.xlu0 %2125, %v1129
    %v2127 = vpop.permute.xlu0 %2126
    %v2129 = vsub.f32 %v2127, %v1440
    %v2130 = vand.u32 2147483647, %v2129
    %v2131 = vsub.f32 1.0, %v2130
    %v2132 = vmax.f32 %v2131, 0.0
    %2133 = vset.pattern.permute.xlu0 60
    %2134 = vperm.xlu0 %2133, %v1142
    %v2135 = vpop.permute.xlu0 %2134
    %v2137 = vsub.f32 %v2135, %v1452
    %v2138 = vand.u32 2147483647, %v2137
    %v2139 = vsub.f32 1.0, %v2138
    %v2140 = vmax.f32 %v2139, 0.0
    %v2141 = vmul.f32 %v2132, %v2140
    %2142 = vset.pattern.permute.xlu0 92
    %2143 = vperm.xlu0 %2142, %v1255
    %v2144 = vpop.permute.xlu0 %2143
    %v2146 = vmul.f32 %v2144, %v2141
    %v2147 = vadd.f32 %v2146, 0.0
    %2148 = vset.pattern.permute.xlu0 29
    %2149 = vperm.xlu0 %2148, %v1129
    %v2150 = vpop.permute.xlu0 %2149
    %v2152 = vsub.f32 %v2150, %v1440
    %v2153 = vand.u32 2147483647, %v2152
    %v2154 = vsub.f32 1.0, %v2153
    %v2155 = vmax.f32 %v2154, 0.0
    %2156 = vset.pattern.permute.xlu0 61
    %2157 = vperm.xlu0 %2156, %v1142
    %v2158 = vpop.permute.xlu0 %2157
    %v2160 = vsub.f32 %v2158, %v1452
    %v2161 = vand.u32 2147483647, %v2160
    %v2162 = vsub.f32 1.0, %v2161
    %v2163 = vmax.f32 %v2162, 0.0
    %v2164 = vmul.f32 %v2155, %v2163
    %2165 = vset.pattern.permute.xlu0 93
    %2166 = vperm.xlu0 %2165, %v1255
    %v2167 = vpop.permute.xlu0 %2166
    %v2169 = vmul.f32 %v2167, %v2164
    %v2170 = vadd.f32 %v2147, %v2169
    %2171 = vset.pattern.permute.xlu0 30
    %2172 = vperm.xlu0 %2171, %v1129
    %v2173 = vpop.permute.xlu0 %2172
    %v2175 = vsub.f32 %v2173, %v1440
    %v2176 = vand.u32 2147483647, %v2175
    %v2177 = vsub.f32 1.0, %v2176
    %v2178 = vmax.f32 %v2177, 0.0
    %2179 = vset.pattern.permute.xlu0 62
    %2180 = vperm.xlu0 %2179, %v1142
    %v2181 = vpop.permute.xlu0 %2180
    %v2183 = vsub.f32 %v2181, %v1452
    %v2184 = vand.u32 2147483647, %v2183
    %v2185 = vsub.f32 1.0, %v2184
    %v2186 = vmax.f32 %v2185, 0.0
    %v2187 = vmul.f32 %v2178, %v2186
    %2188 = vset.pattern.permute.xlu0 94
    %2189 = vperm.xlu0 %2188, %v1255
    %v2190 = vpop.permute.xlu0 %2189
    %v2192 = vmul.f32 %v2190, %v2187
    %v2193 = vadd.f32 %v2170, %v2192
    %2194 = vset.pattern.permute.xlu0 31
    %2195 = vperm.xlu0 %2194, %v1129
    %v2196 = vpop.permute.xlu0 %2195
    %v2198 = vsub.f32 %v2196, %v1440
    %v2199 = vand.u32 2147483647, %v2198
    %v2200 = vsub.f32 1.0, %v2199
    %v2201 = vmax.f32 %v2200, 0.0
    %2202 = vset.pattern.permute.xlu0 63
    %2203 = vperm.xlu0 %2202, %v1142
    %v2204 = vpop.permute.xlu0 %2203
    %v2206 = vsub.f32 %v2204, %v1452
    %v2207 = vand.u32 2147483647, %v2206
    %v2208 = vsub.f32 1.0, %v2207
    %v2209 = vmax.f32 %v2208, 0.0
    %v2210 = vmul.f32 %v2201, %v2209
    %2211 = vset.pattern.permute.xlu0 95
    %2212 = vperm.xlu0 %2211, %v1255
    %v2213 = vpop.permute.xlu0 %2212
    %v2215 = vmul.f32 %v2213, %v2210
    %v2216 = vadd.f32 %v2193, %v2215
    %2217 = vmatprep.subr.mxu0 0.0
    %2218 = vmatpush1.msra.mxu0 %v508
    %2219 = vmatprep.subr.mxu0 0.0
    %2220 = vmatpush1.msra.mxu0 %v513
    %2221 = vmatprep.subr.mxu0 0.0
    %2222 = vmatpush1.msra.mxu0 %v518
    %2223 = vmatprep.subr.mxu0 0.0
    %2224 = vmatpush1.msra.mxu0 %v523
    %2225 = vmatprep.subr.mxu0 0.0
    %2226 = vmatpush1.msra.mxu0 %v528
    %2227 = vmatprep.subr.mxu0 0.0
    %2228 = vmatpush1.msra.mxu0 %v533
    %2229 = vmatprep.subr.mxu0 0.0
    %2230 = vmatpush1.msra.mxu0 %v538
    %2231 = vmatprep.subr.mxu0 0.0
    %2232 = vmatpush1.msra.mxu0 %v543
    %2233 = vmatprep.subr.mxu0 0.0
    %2234 = vmatpush1.msra.mxu0 %v548
    %2235 = vmatprep.subr.mxu0 0.0
    %2236 = vmatpush1.msra.mxu0 %v553
    %2237 = vmatprep.subr.mxu0 0.0
    %2238 = vmatpush1.msra.mxu0 %v558
    %2239 = vmatprep.subr.mxu0 0.0
    %2240 = vmatpush1.msra.mxu0 %v563
    %2241 = vmatprep.subr.mxu0 0.0
    %2242 = vmatpush1.msra.mxu0 %v568
    %2243 = vmatprep.subr.mxu0 0.0
    %2244 = vmatpush1.msra.mxu0 %v573
    %2245 = vmatprep.subr.mxu0 0.0
    %2246 = vmatpush1.msra.mxu0 %v578
    %2247 = vmatprep.subr.mxu0 0.0
    %2248 = vmatpush1.msra.mxu0 %v583
    %2249 = vmatprep.subr.mxu0 0.0
    %2250 = vmatpush1.msra.mxu0 %v588
    %2251 = vmatprep.subr.mxu0 0.0
    %2252 = vmatpush1.msra.mxu0 %v593
    %2253 = vmatprep.subr.mxu0 0.0
    %2254 = vmatpush1.msra.mxu0 %v598
    %2255 = vmatprep.subr.mxu0 0.0
    %2256 = vmatpush1.msra.mxu0 %v603
    %2257 = vmatprep.subr.mxu0 0.0
    %2258 = vmatpush1.msra.mxu0 %v608
    %2259 = vmatprep.subr.mxu0 0.0
    %2260 = vmatpush1.msra.mxu0 %v613
    %2261 = vmatprep.subr.mxu0 0.0
    %2262 = vmatpush1.msra.mxu0 %v618
    %2263 = vmatprep.subr.mxu0 0.0
    %2264 = vmatpush1.msra.mxu0 %v623
    %2265 = vmatprep.subr.mxu0 0.0
    %2266 = vmatpush1.msra.mxu0 %v628
    %2267 = vmatprep.subr.mxu0 0.0
    %2268 = vmatpush1.msra.mxu0 %v633
    %2269 = vmatprep.subr.mxu0 0.0
    %2270 = vmatpush1.msra.mxu0 %v638
    %2271 = vmatprep.subr.mxu0 0.0
    %2272 = vmatpush1.msra.mxu0 %v643
    %2273 = vmatprep.subr.mxu0 0.0
    %2274 = vmatpush1.msra.mxu0 %v648
    %2275 = vmatprep.subr.mxu0 0.0
    %2276 = vmatpush1.msra.mxu0 %v653
    %2277 = vmatprep.subr.mxu0 0.0
    %2278 = vmatpush1.msra.mxu0 %v658
    %2279 = vmatprep.subr.mxu0 0.0
    %2280 = vmatpush1.msra.mxu0 %v663
    %2281 = vmatprep.mubr.f32.mxu0 %v1432
    %2282 = vmatmul.mubr.f32.gmra.mrb[0].mxu0 %v1431
    %v2283 = vpop.f32.mrb[0].mxu0
    %v2284 = vadd.f32 0.0, %v2283
    %v2285 = vpop.f32.mrb[0].mxu0
    %2286 = vmatprep.mubr.f32.mxu0 %v1668
    %2287 = vmatmul.mubr.f32.gmra.mrb[0].mxu0 %v1667
    %v2288 = vpop.f32.mrb[0].mxu0
    %v2289 = vadd.f32 0.0, %v2288
    %v2290 = vpop.f32.mrb[0].mxu0
    %2291 = vmatprep.mubr.f32.mxu0 %v1896
    %2292 = vmatmul.mubr.f32.gmra.mrb[0].mxu0 %v1895
    %v2293 = vpop.f32.mrb[0].mxu0
    %v2294 = vadd.f32 0.0, %v2293
    %v2295 = vpop.f32.mrb[0].mxu0
    %2296 = vmatprep.mubr.f32.mxu0 %v2124
    %2297 = vmatmul.mubr.f32.gmra.mrb[0].mxu0 %v2123
    %v2298 = vpop.f32.mrb[0].mxu0
    %v2299 = vadd.f32 0.0, %v2298
    %v2300 = vpop.f32.mrb[0].mxu0
    %2301 = vdwg.mxu0
    %2302 = vmatprep.subr.mxu0 0.0
    %2303 = vmatpush1.msra.mxu0 %v668
    %2304 = vmatprep.subr.mxu0 0.0
    %2305 = vmatpush1.msra.mxu0 %v673
    %2306 = vmatprep.subr.mxu0 0.0
    %2307 = vmatpush1.msra.mxu0 %v678
    %2308 = vmatprep.subr.mxu0 0.0
    %2309 = vmatpush1.msra.mxu0 %v683
    %2310 = vmatprep.subr.mxu0 0.0
    %2311 = vmatpush1.msra.mxu0 %v688
    %2312 = vmatprep.subr.mxu0 0.0
    %2313 = vmatpush1.msra.mxu0 %v693
    %2314 = vmatprep.subr.mxu0 0.0
    %2315 = vmatpush1.msra.mxu0 %v698
    %2316 = vmatprep.subr.mxu0 0.0
    %2317 = vmatpush1.msra.mxu0 %v703
    %2318 = vmatprep.subr.mxu0 0.0
    %2319 = vmatpush1.msra.mxu0 %v708
    %2320 = vmatprep.subr.mxu0 0.0
    %2321 = vmatpush1.msra.mxu0 %v713
    %2322 = vmatprep.subr.mxu0 0.0
    %2323 = vmatpush1.msra.mxu0 %v718
    %2324 = vmatprep.subr.mxu0 0.0
    %2325 = vmatpush1.msra.mxu0 %v723
    %2326 = vmatprep.subr.mxu0 0.0
    %2327 = vmatpush1.msra.mxu0 %v728
    %2328 = vmatprep.subr.mxu0 0.0
    %2329 = vmatpush1.msra.mxu0 %v733
    %2330 = vmatprep.subr.mxu0 0.0
    %2331 = vmatpush1.msra.mxu0 %v738
    %2332 = vmatprep.subr.mxu0 0.0
    %2333 = vmatpush1.msra.mxu0 %v743
    %2334 = vmatprep.subr.mxu0 0.0
    %2335 = vmatpush1.msra.mxu0 0.0
    %2336 = vmatprep.subr.mxu0 0.0
    %2337 = vmatpush1.msra.mxu0 0.0
    %2338 = vmatprep.subr.mxu0 0.0
    %2339 = vmatpush1.msra.mxu0 0.0
    %2340 = vmatprep.subr.mxu0 0.0
    %2341 = vmatpush1.msra.mxu0 0.0
    %2342 = vmatprep.subr.mxu0 0.0
    %2343 = vmatpush1.msra.mxu0 0.0
    %2344 = vmatprep.subr.mxu0 0.0
    %2345 = vmatpush1.msra.mxu0 0.0
    %2346 = vmatprep.subr.mxu0 0.0
    %2347 = vmatpush1.msra.mxu0 0.0
    %2348 = vmatprep.subr.mxu0 0.0
    %2349 = vmatpush1.msra.mxu0 0.0
    %2350 = vmatprep.subr.mxu0 0.0
    %2351 = vmatpush1.msra.mxu0 0.0
    %2352 = vmatprep.subr.mxu0 0.0
    %2353 = vmatpush1.msra.mxu0 0.0
    %2354 = vmatprep.subr.mxu0 0.0
    %2355 = vmatpush1.msra.mxu0 0.0
    %2356 = vmatprep.subr.mxu0 0.0
    %2357 = vmatpush1.msra.mxu0 0.0
    %2358 = vmatprep.subr.mxu0 0.0
    %2359 = vmatpush1.msra.mxu0 0.0
    %2360 = vmatprep.subr.mxu0 0.0
    %2361 = vmatpush1.msra.mxu0 0.0
    %2362 = vmatprep.subr.mxu0 0.0
    %2363 = vmatpush1.msra.mxu0 0.0
    %2364 = vmatprep.subr.mxu0 0.0
    %2365 = vmatpush1.msra.mxu0 0.0
    %2366 = vmatprep.mubr.f32.mxu0 0.0
    %2367 = vmatmul.mubr.f32.gmra.mrb[0].mxu0 %v1532
    %v2368 = vpop.f32.mrb[0].mxu0
    %v2369 = vadd.f32 %v2284, %v2368
    %v2370 = vpop.f32.mrb[0].mxu0
    %2371 = vmatprep.mubr.f32.mxu0 0.0
    %2372 = vmatmul.mubr.f32.gmra.mrb[0].mxu0 %v1760
    %v2373 = vpop.f32.mrb[0].mxu0
    %v2374 = vadd.f32 %v2289, %v2373
    %v2375 = vpop.f32.mrb[0].mxu0
    %2376 = vmatprep.mubr.f32.mxu0 0.0
    %2377 = vmatmul.mubr.f32.gmra.mrb[0].mxu0 %v1988
    %v2378 = vpop.f32.mrb[0].mxu0
    %v2379 = vadd.f32 %v2294, %v2378
    %v2380 = vpop.f32.mrb[0].mxu0
    %2381 = vmatprep.mubr.f32.mxu0 0.0
    %2382 = vmatmul.mubr.f32.gmra.mrb[0].mxu0 %v2216
    %v2383 = vpop.f32.mrb[0].mxu0
    %v2384 = vadd.f32 %v2299, %v2383
    %v2385 = vpop.f32.mrb[0].mxu0
    %2386 = vdwg.mxu0
    %v2387 = vmul.f32 %v2369, %v1263
    %v2388 = vmul.f32 %v2374, %v1264
    %v2389 = vmul.f32 %v2379, %v1265
    %v2390 = vmul.f32 %v2384, %v1266
    %v2392 = vsel %vm152, %v2387, 0
    %v2395 = vsel %vm152, %v2388, 0
    %v2398 = vsel %vm152, %v2389, 0
    %v2401 = vsel %vm152, %v2390, 0
    %2403 = vmatprep.subr.mxu0 0.0
    %2404 = vmatpush1.msra.mxu0 %v1267
    %2405 = vmatprep.subr.mxu0 0.0
    %2406 = vmatpush1.msra.mxu0 %v1268
    %2407 = vmatprep.subr.mxu0 0.0
    %2408 = vmatpush1.msra.mxu0 %v1269
    %2409 = vmatprep.subr.mxu0 0.0
    %2410 = vmatpush1.msra.mxu0 %v1270
    %2411 = vmatprep.subr.mxu0 0.0
    %2412 = vmatpush1.msra.mxu0 0.0
    %2413 = vmatprep.subr.mxu0 0.0
    %2414 = vmatpush1.msra.mxu0 0.0
    %2415 = vmatprep.subr.mxu0 0.0
    %2416 = vmatpush1.msra.mxu0 0.0
    %2417 = vmatprep.subr.mxu0 0.0
    %2418 = vmatpush1.msra.mxu0 0.0
    %2419 = vmatprep.subr.mxu0 0.0
    %2420 = vmatpush1.msra.mxu0 0.0
    %2421 = vmatprep.subr.mxu0 0.0
    %2422 = vmatpush1.msra.mxu0 0.0
    %2423 = vmatprep.subr.mxu0 0.0
    %2424 = vmatpush1.msra.mxu0 0.0
    %2425 = vmatprep.subr.mxu0 0.0
    %2426 = vmatpush1.msra.mxu0 0.0
    %2427 = vmatprep.subr.mxu0 0.0
    %2428 = vmatpush1.msra.mxu0 0.0
    %2429 = vmatprep.subr.mxu0 0.0
    %2430 = vmatpush1.msra.mxu0 0.0
    %2431 = vmatprep.subr.mxu0 0.0
    %2432 = vmatpush1.msra.mxu0 0.0
    %2433 = vmatprep.subr.mxu0 0.0
    %2434 = vmatpush1.msra.mxu0 0.0
    %2435 = vmatprep.subr.mxu0 0.0
    %2436 = vmatpush1.msra.mxu0 0.0
    %2437 = vmatprep.subr.mxu0 0.0
    %2438 = vmatpush1.msra.mxu0 0.0
    %2439 = vmatprep.subr.mxu0 0.0
    %2440 = vmatpush1.msra.mxu0 0.0
    %2441 = vmatprep.subr.mxu0 0.0
    %2442 = vmatpush1.msra.mxu0 0.0
    %2443 = vmatprep.subr.mxu0 0.0
    %2444 = vmatpush1.msra.mxu0 0.0
    %2445 = vmatprep.subr.mxu0 0.0
    %2446 = vmatpush1.msra.mxu0 0.0
    %2447 = vmatprep.subr.mxu0 0.0
    %2448 = vmatpush1.msra.mxu0 0.0
    %2449 = vmatprep.subr.mxu0 0.0
    %2450 = vmatpush1.msra.mxu0 0.0
    %2451 = vmatprep.subr.mxu0 0.0
    %2452 = vmatpush1.msra.mxu0 0.0
    %2453 = vmatprep.subr.mxu0 0.0
    %2454 = vmatpush1.msra.mxu0 0.0
    %2455 = vmatprep.subr.mxu0 0.0
    %2456 = vmatpush1.msra.mxu0 0.0
    %2457 = vmatprep.subr.mxu0 0.0
    %2458 = vmatpush1.msra.mxu0 0.0
    %2459 = vmatprep.subr.mxu0 0.0
    %2460 = vmatpush1.msra.mxu0 0.0
    %2461 = vmatprep.subr.mxu0 0.0
    %2462 = vmatpush1.msra.mxu0 0.0
    %2463 = vmatprep.subr.mxu0 0.0
    %2464 = vmatpush1.msra.mxu0 0.0
    %2465 = vmatprep.subr.mxu0 0.0
    %2466 = vmatpush1.msra.mxu0 0.0
    %2467 = vmatprep.mubr.f32.mxu0 0.0
    %2468 = vmatmul.mubr.f32.gmra.mrb[0].mxu0 %v2392
    %v2469 = vpop.f32.mrb[0].mxu0
    %v2470 = vadd.f32 0.0, %v2469
    %v2471 = vpop.f32.mrb[0].mxu0
    %2472 = vmatprep.mubr.f32.mxu0 0.0
    %2473 = vmatmul.mubr.f32.gmra.mrb[0].mxu0 %v2395
    %v2474 = vpop.f32.mrb[0].mxu0
    %v2475 = vadd.f32 0.0, %v2474
    %v2476 = vpop.f32.mrb[0].mxu0
    %2477 = vmatprep.mubr.f32.mxu0 0.0
    %2478 = vmatmul.mubr.f32.gmra.mrb[0].mxu0 %v2398
    %v2479 = vpop.f32.mrb[0].mxu0
    %v2480 = vadd.f32 0.0, %v2479
    %v2481 = vpop.f32.mrb[0].mxu0
    %2482 = vmatprep.mubr.f32.mxu0 0.0
    %2483 = vmatmul.mubr.f32.gmra.mrb[0].mxu0 %v2401
    %v2484 = vpop.f32.mrb[0].mxu0
    %v2485 = vadd.f32 0.0, %v2484
    %v2486 = vpop.f32.mrb[0].mxu0
    %2487 = vdwg.mxu0
    %v2488 = vadd.f32 %v2470, %v2475
    %v2489 = vadd.f32 %v2488, %v2480
    %v2490 = vadd.f32 %v2489, %v2485
    %v2492 = vlaneseq
    %v2493 = vshrl.u32 %v2492, 7
    %v2494 = vsub.s32 0, %v2493
    %v2495 = vrot.slane %v1271, %v2494
    %v2497 = vadd.f32 %v2490, %v2495
    %2498 = vst.msk [vmem:[#allocation2] sm:$0xff] %vm152, %v2497
    %2500 = vset.pattern.permute.xlu0 0
    %2501 = vperm.xlu0 %2500, %v1130
    %v2502 = vpop.permute.xlu0 %2501
    %v2504 = vsub.f32 %v2502, %v1281
    %v2505 = vsub.f32 %v2502, %v1285
    %v2506 = vand.u32 2147483647, %v2504
    %v2507 = vand.u32 2147483647, %v2505
    %v2508 = vsub.f32 1.0, %v2506
    %v2509 = vsub.f32 1.0, %v2507
    %v2510 = vmax.f32 %v2508, 0.0
    %v2511 = vmax.f32 %v2509, 0.0
    %2513 = vset.pattern.permute.xlu0 32
    %2514 = vperm.xlu0 %2513, %v1143
    %v2515 = vpop.permute.xlu0 %2514
    %v2517 = vsub.f32 %v2515, %v1305
    %v2518 = vsub.f32 %v2515, %v1309
    %v2519 = vand.u32 2147483647, %v2517
    %v2520 = vand.u32 2147483647, %v2518
    %v2521 = vsub.f32 1.0, %v2519
    %v2522 = vsub.f32 1.0, %v2520
    %v2523 = vmax.f32 %v2521, 0.0
    %v2524 = vmax.f32 %v2522, 0.0
    %v2525 = vmul.f32 %v2510, %v2523
    %v2526 = vmul.f32 %v2511, %v2524
    %2528 = vset.pattern.permute.xlu0 64
    %2529 = vperm.xlu0 %2528, %v1257
    %v2530 = vpop.permute.xlu0 %2529
    %v2532 = vmul.f32 %v2530, %v2525
    %v2533 = vmul.f32 %v2530, %v2526
    %v2534 = vadd.f32 %v2532, 0.0
    %v2535 = vadd.f32 %v2533, 0.0
    %2536 = vset.pattern.permute.xlu0 1
    %2537 = vperm.xlu0 %2536, %v1130
    %v2538 = vpop.permute.xlu0 %2537
    %v2540 = vsub.f32 %v2538, %v1281
    %v2541 = vsub.f32 %v2538, %v1285
    %v2542 = vand.u32 2147483647, %v2540
    %v2543 = vand.u32 2147483647, %v2541
    %v2544 = vsub.f32 1.0, %v2542
    %v2545 = vsub.f32 1.0, %v2543
    %v2546 = vmax.f32 %v2544, 0.0
    %v2547 = vmax.f32 %v2545, 0.0
    %2548 = vset.pattern.permute.xlu0 33
    %2549 = vperm.xlu0 %2548, %v1143
    %v2550 = vpop.permute.xlu0 %2549
    %v2552 = vsub.f32 %v2550, %v1305
    %v2553 = vsub.f32 %v2550, %v1309
    %v2554 = vand.u32 2147483647, %v2552
    %v2555 = vand.u32 2147483647, %v2553
    %v2556 = vsub.f32 1.0, %v2554
    %v2557 = vsub.f32 1.0, %v2555
    %v2558 = vmax.f32 %v2556, 0.0
    %v2559 = vmax.f32 %v2557, 0.0
    %v2560 = vmul.f32 %v2546, %v2558
    %v2561 = vmul.f32 %v2547, %v2559
    %2562 = vset.pattern.permute.xlu0 65
    %2563 = vperm.xlu0 %2562, %v1257
    %v2564 = vpop.permute.xlu0 %2563
    %v2566 = vmul.f32 %v2564, %v2560
    %v2567 = vmul.f32 %v2564, %v2561
    %v2568 = vadd.f32 %v2534, %v2566
    %v2569 = vadd.f32 %v2535, %v2567
    %2570 = vset.pattern.permute.xlu0 2
    %2571 = vperm.xlu0 %2570, %v1130
    %v2572 = vpop.permute.xlu0 %2571
    %v2574 = vsub.f32 %v2572, %v1281
    %v2575 = vsub.f32 %v2572, %v1285
    %v2576 = vand.u32 2147483647, %v2574
    %v2577 = vand.u32 2147483647, %v2575
    %v2578 = vsub.f32 1.0, %v2576
    %v2579 = vsub.f32 1.0, %v2577
    %v2580 = vmax.f32 %v2578, 0.0
    %v2581 = vmax.f32 %v2579, 0.0
    %2582 = vset.pattern.permute.xlu0 34
    %2583 = vperm.xlu0 %2582, %v1143
    %v2584 = vpop.permute.xlu0 %2583
    %v2586 = vsub.f32 %v2584, %v1305
    %v2587 = vsub.f32 %v2584, %v1309
    %v2588 = vand.u32 2147483647, %v2586
    %v2589 = vand.u32 2147483647, %v2587
    %v2590 = vsub.f32 1.0, %v2588
    %v2591 = vsub.f32 1.0, %v2589
    %v2592 = vmax.f32 %v2590, 0.0
    %v2593 = vmax.f32 %v2591, 0.0
    %v2594 = vmul.f32 %v2580, %v2592
    %v2595 = vmul.f32 %v2581, %v2593
    %2596 = vset.pattern.permute.xlu0 66
    %2597 = vperm.xlu0 %2596, %v1257
    %v2598 = vpop.permute.xlu0 %2597
    %v2600 = vmul.f32 %v2598, %v2594
    %v2601 = vmul.f32 %v2598, %v2595
    %v2602 = vadd.f32 %v2568, %v2600
    %v2603 = vadd.f32 %v2569, %v2601
    %2604 = vset.pattern.permute.xlu0 3
    %2605 = vperm.xlu0 %2604, %v1130
    %v2606 = vpop.permute.xlu0 %2605
    %v2608 = vsub.f32 %v2606, %v1281
    %v2609 = vsub.f32 %v2606, %v1285
    %v2610 = vand.u32 2147483647, %v2608
    %v2611 = vand.u32 2147483647, %v2609
    %v2612 = vsub.f32 1.0, %v2610
    %v2613 = vsub.f32 1.0, %v2611
    %v2614 = vmax.f32 %v2612, 0.0
    %v2615 = vmax.f32 %v2613, 0.0
    %2616 = vset.pattern.permute.xlu0 35
    %2617 = vperm.xlu0 %2616, %v1143
    %v2618 = vpop.permute.xlu0 %2617
    %v2620 = vsub.f32 %v2618, %v1305
    %v2621 = vsub.f32 %v2618, %v1309
    %v2622 = vand.u32 2147483647, %v2620
    %v2623 = vand.u32 2147483647, %v2621
    %v2624 = vsub.f32 1.0, %v2622
    %v2625 = vsub.f32 1.0, %v2623
    %v2626 = vmax.f32 %v2624, 0.0
    %v2627 = vmax.f32 %v2625, 0.0
    %v2628 = vmul.f32 %v2614, %v2626
    %v2629 = vmul.f32 %v2615, %v2627
    %2630 = vset.pattern.permute.xlu0 67
    %2631 = vperm.xlu0 %2630, %v1257
    %v2632 = vpop.permute.xlu0 %2631
    %v2634 = vmul.f32 %v2632, %v2628
    %v2635 = vmul.f32 %v2632, %v2629
    %v2636 = vadd.f32 %v2602, %v2634
    %v2637 = vadd.f32 %v2603, %v2635
    %2638 = vset.pattern.permute.xlu0 4
    %2639 = vperm.xlu0 %2638, %v1130
    %v2640 = vpop.permute.xlu0 %2639
    %v2642 = vsub.f32 %v2640, %v1440
    %v2643 = vand.u32 2147483647, %v2642
    %v2644 = vsub.f32 1.0, %v2643
    %v2645 = vmax.f32 %v2644, 0.0
    %2646 = vset.pattern.permute.xlu0 36
    %2647 = vperm.xlu0 %2646, %v1143
    %v2648 = vpop.permute.xlu0 %2647
    %v2650 = vsub.f32 %v2648, %v1452
    %v2651 = vand.u32 2147483647, %v2650
    %v2652 = vsub.f32 1.0, %v2651
    %v2653 = vmax.f32 %v2652, 0.0
    %v2654 = vmul.f32 %v2645, %v2653
    %2655 = vset.pattern.permute.xlu0 68
    %2656 = vperm.xlu0 %2655, %v1257
    %v2657 = vpop.permute.xlu0 %2656
    %v2659 = vmul.f32 %v2657, %v2654
    %v2660 = vadd.f32 %v2659, 0.0
    %2661 = vset.pattern.permute.xlu0 5
    %2662 = vperm.xlu0 %2661, %v1130
    %v2663 = vpop.permute.xlu0 %2662
    %v2665 = vsub.f32 %v2663, %v1440
    %v2666 = vand.u32 2147483647, %v2665
    %v2667 = vsub.f32 1.0, %v2666
    %v2668 = vmax.f32 %v2667, 0.0
    %2669 = vset.pattern.permute.xlu0 37
    %2670 = vperm.xlu0 %2669, %v1143
    %v2671 = vpop.permute.xlu0 %2670
    %v2673 = vsub.f32 %v2671, %v1452
    %v2674 = vand.u32 2147483647, %v2673
    %v2675 = vsub.f32 1.0, %v2674
    %v2676 = vmax.f32 %v2675, 0.0
    %v2677 = vmul.f32 %v2668, %v2676
    %2678 = vset.pattern.permute.xlu0 69
    %2679 = vperm.xlu0 %2678, %v1257
    %v2680 = vpop.permute.xlu0 %2679
    %v2682 = vmul.f32 %v2680, %v2677
    %v2683 = vadd.f32 %v2660, %v2682
    %2684 = vset.pattern.permute.xlu0 6
    %2685 = vperm.xlu0 %2684, %v1130
    %v2686 = vpop.permute.xlu0 %2685
    %v2688 = vsub.f32 %v2686, %v1440
    %v2689 = vand.u32 2147483647, %v2688
    %v2690 = vsub.f32 1.0, %v2689
    %v2691 = vmax.f32 %v2690, 0.0
    %2692 = vset.pattern.permute.xlu0 38
    %2693 = vperm.xlu0 %2692, %v1143
    %v2694 = vpop.permute.xlu0 %2693
    %v2696 = vsub.f32 %v2694, %v1452
    %v2697 = vand.u32 2147483647, %v2696
    %v2698 = vsub.f32 1.0, %v2697
    %v2699 = vmax.f32 %v2698, 0.0
    %v2700 = vmul.f32 %v2691, %v2699
    %2701 = vset.pattern.permute.xlu0 70
    %2702 = vperm.xlu0 %2701, %v1257
    %v2703 = vpop.permute.xlu0 %2702
    %v2705 = vmul.f32 %v2703, %v2700
    %v2706 = vadd.f32 %v2683, %v2705
    %2707 = vset.pattern.permute.xlu0 7
    %2708 = vperm.xlu0 %2707, %v1130
    %v2709 = vpop.permute.xlu0 %2708
    %v2711 = vsub.f32 %v2709, %v1440
    %v2712 = vand.u32 2147483647, %v2711
    %v2713 = vsub.f32 1.0, %v2712
    %v2714 = vmax.f32 %v2713, 0.0
    %2715 = vset.pattern.permute.xlu0 39
    %2716 = vperm.xlu0 %2715, %v1143
    %v2717 = vpop.permute.xlu0 %2716
    %v2719 = vsub.f32 %v2717, %v1452
    %v2720 = vand.u32 2147483647, %v2719
    %v2721 = vsub.f32 1.0, %v2720
    %v2722 = vmax.f32 %v2721, 0.0
    %v2723 = vmul.f32 %v2714, %v2722
    %2724 = vset.pattern.permute.xlu0 71
    %2725 = vperm.xlu0 %2724, %v1257
    %v2726 = vpop.permute.xlu0 %2725
    %v2728 = vmul.f32 %v2726, %v2723
    %v2729 = vadd.f32 %v2706, %v2728
    %2730 = vset.pattern.permute.xlu0 8
    %2731 = vperm.xlu0 %2730, %v1130
    %v2732 = vpop.permute.xlu0 %2731
    %v2734 = vsub.f32 %v2732, %v1281
    %v2735 = vsub.f32 %v2732, %v1285
    %v2736 = vand.u32 2147483647, %v2734
    %v2737 = vand.u32 2147483647, %v2735
    %v2738 = vsub.f32 1.0, %v2736
    %v2739 = vsub.f32 1.0, %v2737
    %v2740 = vmax.f32 %v2738, 0.0
    %v2741 = vmax.f32 %v2739, 0.0
    %2742 = vset.pattern.permute.xlu0 40
    %2743 = vperm.xlu0 %2742, %v1143
    %v2744 = vpop.permute.xlu0 %2743
    %v2746 = vsub.f32 %v2744, %v1305
    %v2747 = vsub.f32 %v2744, %v1309
    %v2748 = vand.u32 2147483647, %v2746
    %v2749 = vand.u32 2147483647, %v2747
    %v2750 = vsub.f32 1.0, %v2748
    %v2751 = vsub.f32 1.0, %v2749
    %v2752 = vmax.f32 %v2750, 0.0
    %v2753 = vmax.f32 %v2751, 0.0
    %v2754 = vmul.f32 %v2740, %v2752
    %v2755 = vmul.f32 %v2741, %v2753
    %2756 = vset.pattern.permute.xlu0 72
    %2757 = vperm.xlu0 %2756, %v1257
    %v2758 = vpop.permute.xlu0 %2757
    %v2760 = vmul.f32 %v2758, %v2754
    %v2761 = vmul.f32 %v2758, %v2755
    %v2762 = vadd.f32 %v2760, 0.0
    %v2763 = vadd.f32 %v2761, 0.0
    %2764 = vset.pattern.permute.xlu0 9
    %2765 = vperm.xlu0 %2764, %v1130
    %v2766 = vpop.permute.xlu0 %2765
    %v2768 = vsub.f32 %v2766, %v1281
    %v2769 = vsub.f32 %v2766, %v1285
    %v2770 = vand.u32 2147483647, %v2768
    %v2771 = vand.u32 2147483647, %v2769
    %v2772 = vsub.f32 1.0, %v2770
    %v2773 = vsub.f32 1.0, %v2771
    %v2774 = vmax.f32 %v2772, 0.0
    %v2775 = vmax.f32 %v2773, 0.0
    %2776 = vset.pattern.permute.xlu0 41
    %2777 = vperm.xlu0 %2776, %v1143
    %v2778 = vpop.permute.xlu0 %2777
    %v2780 = vsub.f32 %v2778, %v1305
    %v2781 = vsub.f32 %v2778, %v1309
    %v2782 = vand.u32 2147483647, %v2780
    %v2783 = vand.u32 2147483647, %v2781
    %v2784 = vsub.f32 1.0, %v2782
    %v2785 = vsub.f32 1.0, %v2783
    %v2786 = vmax.f32 %v2784, 0.0
    %v2787 = vmax.f32 %v2785, 0.0
    %v2788 = vmul.f32 %v2774, %v2786
    %v2789 = vmul.f32 %v2775, %v2787
    %2790 = vset.pattern.permute.xlu0 73
    %2791 = vperm.xlu0 %2790, %v1257
    %v2792 = vpop.permute.xlu0 %2791
    %v2794 = vmul.f32 %v2792, %v2788
    %v2795 = vmul.f32 %v2792, %v2789
    %v2796 = vadd.f32 %v2762, %v2794
    %v2797 = vadd.f32 %v2763, %v2795
    %2798 = vset.pattern.permute.xlu0 10
    %2799 = vperm.xlu0 %2798, %v1130
    %v2800 = vpop.permute.xlu0 %2799
    %v2802 = vsub.f32 %v2800, %v1281
    %v2803 = vsub.f32 %v2800, %v1285
    %v2804 = vand.u32 2147483647, %v2802
    %v2805 = vand.u32 2147483647, %v2803
    %v2806 = vsub.f32 1.0, %v2804
    %v2807 = vsub.f32 1.0, %v2805
    %v2808 = vmax.f32 %v2806, 0.0
    %v2809 = vmax.f32 %v2807, 0.0
    %2810 = vset.pattern.permute.xlu0 42
    %2811 = vperm.xlu0 %2810, %v1143
    %v2812 = vpop.permute.xlu0 %2811
    %v2814 = vsub.f32 %v2812, %v1305
    %v2815 = vsub.f32 %v2812, %v1309
    %v2816 = vand.u32 2147483647, %v2814
    %v2817 = vand.u32 2147483647, %v2815
    %v2818 = vsub.f32 1.0, %v2816
    %v2819 = vsub.f32 1.0, %v2817
    %v2820 = vmax.f32 %v2818, 0.0
    %v2821 = vmax.f32 %v2819, 0.0
    %v2822 = vmul.f32 %v2808, %v2820
    %v2823 = vmul.f32 %v2809, %v2821
    %2824 = vset.pattern.permute.xlu0 74
    %2825 = vperm.xlu0 %2824, %v1257
    %v2826 = vpop.permute.xlu0 %2825
    %v2828 = vmul.f32 %v2826, %v2822
    %v2829 = vmul.f32 %v2826, %v2823
    %v2830 = vadd.f32 %v2796, %v2828
    %v2831 = vadd.f32 %v2797, %v2829
    %2832 = vset.pattern.permute.xlu0 11
    %2833 = vperm.xlu0 %2832, %v1130
    %v2834 = vpop.permute.xlu0 %2833
    %v2836 = vsub.f32 %v2834, %v1281
    %v2837 = vsub.f32 %v2834, %v1285
    %v2838 = vand.u32 2147483647, %v2836
    %v2839 = vand.u32 2147483647, %v2837
    %v2840 = vsub.f32 1.0, %v2838
    %v2841 = vsub.f32 1.0, %v2839
    %v2842 = vmax.f32 %v2840, 0.0
    %v2843 = vmax.f32 %v2841, 0.0
    %2844 = vset.pattern.permute.xlu0 43
    %2845 = vperm.xlu0 %2844, %v1143
    %v2846 = vpop.permute.xlu0 %2845
    %v2848 = vsub.f32 %v2846, %v1305
    %v2849 = vsub.f32 %v2846, %v1309
    %v2850 = vand.u32 2147483647, %v2848
    %v2851 = vand.u32 2147483647, %v2849
    %v2852 = vsub.f32 1.0, %v2850
    %v2853 = vsub.f32 1.0, %v2851
    %v2854 = vmax.f32 %v2852, 0.0
    %v2855 = vmax.f32 %v2853, 0.0
    %v2856 = vmul.f32 %v2842, %v2854
    %v2857 = vmul.f32 %v2843, %v2855
    %2858 = vset.pattern.permute.xlu0 75
    %2859 = vperm.xlu0 %2858, %v1257
    %v2860 = vpop.permute.xlu0 %2859
    %v2862 = vmul.f32 %v2860, %v2856
    %v2863 = vmul.f32 %v2860, %v2857
    %v2864 = vadd.f32 %v2830, %v2862
    %v2865 = vadd.f32 %v2831, %v2863
    %2866 = vset.pattern.permute.xlu0 12
    %2867 = vperm.xlu0 %2866, %v1130
    %v2868 = vpop.permute.xlu0 %2867
    %v2870 = vsub.f32 %v2868, %v1440
    %v2871 = vand.u32 2147483647, %v2870
    %v2872 = vsub.f32 1.0, %v2871
    %v2873 = vmax.f32 %v2872, 0.0
    %2874 = vset.pattern.permute.xlu0 44
    %2875 = vperm.xlu0 %2874, %v1143
    %v2876 = vpop.permute.xlu0 %2875
    %v2878 = vsub.f32 %v2876, %v1452
    %v2879 = vand.u32 2147483647, %v2878
    %v2880 = vsub.f32 1.0, %v2879
    %v2881 = vmax.f32 %v2880, 0.0
    %v2882 = vmul.f32 %v2873, %v2881
    %2883 = vset.pattern.permute.xlu0 76
    %2884 = vperm.xlu0 %2883, %v1257
    %v2885 = vpop.permute.xlu0 %2884
    %v2887 = vmul.f32 %v2885, %v2882
    %v2888 = vadd.f32 %v2887, 0.0
    %2889 = vset.pattern.permute.xlu0 13
    %2890 = vperm.xlu0 %2889, %v1130
    %v2891 = vpop.permute.xlu0 %2890
    %v2893 = vsub.f32 %v2891, %v1440
    %v2894 = vand.u32 2147483647, %v2893
    %v2895 = vsub.f32 1.0, %v2894
    %v2896 = vmax.f32 %v2895, 0.0
    %2897 = vset.pattern.permute.xlu0 45
    %2898 = vperm.xlu0 %2897, %v1143
    %v2899 = vpop.permute.xlu0 %2898
    %v2901 = vsub.f32 %v2899, %v1452
    %v2902 = vand.u32 2147483647, %v2901
    %v2903 = vsub.f32 1.0, %v2902
    %v2904 = vmax.f32 %v2903, 0.0
    %v2905 = vmul.f32 %v2896, %v2904
    %2906 = vset.pattern.permute.xlu0 77
    %2907 = vperm.xlu0 %2906, %v1257
    %v2908 = vpop.permute.xlu0 %2907
    %v2910 = vmul.f32 %v2908, %v2905
    %v2911 = vadd.f32 %v2888, %v2910
    %2912 = vset.pattern.permute.xlu0 14
    %2913 = vperm.xlu0 %2912, %v1130
    %v2914 = vpop.permute.xlu0 %2913
    %v2916 = vsub.f32 %v2914, %v1440
    %v2917 = vand.u32 2147483647, %v2916
    %v2918 = vsub.f32 1.0, %v2917
    %v2919 = vmax.f32 %v2918, 0.0
    %2920 = vset.pattern.permute.xlu0 46
    %2921 = vperm.xlu0 %2920, %v1143
    %v2922 = vpop.permute.xlu0 %2921
    %v2924 = vsub.f32 %v2922, %v1452
    %v2925 = vand.u32 2147483647, %v2924
    %v2926 = vsub.f32 1.0, %v2925
    %v2927 = vmax.f32 %v2926, 0.0
    %v2928 = vmul.f32 %v2919, %v2927
    %2929 = vset.pattern.permute.xlu0 78
    %2930 = vperm.xlu0 %2929, %v1257
    %v2931 = vpop.permute.xlu0 %2930
    %v2933 = vmul.f32 %v2931, %v2928
    %v2934 = vadd.f32 %v2911, %v2933
    %2935 = vset.pattern.permute.xlu0 15
    %2936 = vperm.xlu0 %2935, %v1130
    %v2937 = vpop.permute.xlu0 %2936
    %v2939 = vsub.f32 %v2937, %v1440
    %v2940 = vand.u32 2147483647, %v2939
    %v2941 = vsub.f32 1.0, %v2940
    %v2942 = vmax.f32 %v2941, 0.0
    %2943 = vset.pattern.permute.xlu0 47
    %2944 = vperm.xlu0 %2943, %v1143
    %v2945 = vpop.permute.xlu0 %2944
    %v2947 = vsub.f32 %v2945, %v1452
    %v2948 = vand.u32 2147483647, %v2947
    %v2949 = vsub.f32 1.0, %v2948
    %v2950 = vmax.f32 %v2949, 0.0
    %v2951 = vmul.f32 %v2942, %v2950
    %2952 = vset.pattern.permute.xlu0 79
    %2953 = vperm.xlu0 %2952, %v1257
    %v2954 = vpop.permute.xlu0 %2953
    %v2956 = vmul.f32 %v2954, %v2951
    %v2957 = vadd.f32 %v2934, %v2956
    %2958 = vset.pattern.permute.xlu0 16
    %2959 = vperm.xlu0 %2958, %v1130
    %v2960 = vpop.permute.xlu0 %2959
    %v2962 = vsub.f32 %v2960, %v1281
    %v2963 = vsub.f32 %v2960, %v1285
    %v2964 = vand.u32 2147483647, %v2962
    %v2965 = vand.u32 2147483647, %v2963
    %v2966 = vsub.f32 1.0, %v2964
    %v2967 = vsub.f32 1.0, %v2965
    %v2968 = vmax.f32 %v2966, 0.0
    %v2969 = vmax.f32 %v2967, 0.0
    %2970 = vset.pattern.permute.xlu0 48
    %2971 = vperm.xlu0 %2970, %v1143
    %v2972 = vpop.permute.xlu0 %2971
    %v2974 = vsub.f32 %v2972, %v1305
    %v2975 = vsub.f32 %v2972, %v1309
    %v2976 = vand.u32 2147483647, %v2974
    %v2977 = vand.u32 2147483647, %v2975
    %v2978 = vsub.f32 1.0, %v2976
    %v2979 = vsub.f32 1.0, %v2977
    %v2980 = vmax.f32 %v2978, 0.0
    %v2981 = vmax.f32 %v2979, 0.0
    %v2982 = vmul.f32 %v2968, %v2980
    %v2983 = vmul.f32 %v2969, %v2981
    %2984 = vset.pattern.permute.xlu0 80
    %2985 = vperm.xlu0 %2984, %v1257
    %v2986 = vpop.permute.xlu0 %2985
    %v2988 = vmul.f32 %v2986, %v2982
    %v2989 = vmul.f32 %v2986, %v2983
    %v2990 = vadd.f32 %v2988, 0.0
    %v2991 = vadd.f32 %v2989, 0.0
    %2992 = vset.pattern.permute.xlu0 17
    %2993 = vperm.xlu0 %2992, %v1130
    %v2994 = vpop.permute.xlu0 %2993
    %v2996 = vsub.f32 %v2994, %v1281
    %v2997 = vsub.f32 %v2994, %v1285
    %v2998 = vand.u32 2147483647, %v2996
    %v2999 = vand.u32 2147483647, %v2997
    %v3000 = vsub.f32 1.0, %v2998
    %v3001 = vsub.f32 1.0, %v2999
    %v3002 = vmax.f32 %v3000, 0.0
    %v3003 = vmax.f32 %v3001, 0.0
    %3004 = vset.pattern.permute.xlu0 49
    %3005 = vperm.xlu0 %3004, %v1143
    %v3006 = vpop.permute.xlu0 %3005
    %v3008 = vsub.f32 %v3006, %v1305
    %v3009 = vsub.f32 %v3006, %v1309
    %v3010 = vand.u32 2147483647, %v3008
    %v3011 = vand.u32 2147483647, %v3009
    %v3012 = vsub.f32 1.0, %v3010
    %v3013 = vsub.f32 1.0, %v3011
    %v3014 = vmax.f32 %v3012, 0.0
    %v3015 = vmax.f32 %v3013, 0.0
    %v3016 = vmul.f32 %v3002, %v3014
    %v3017 = vmul.f32 %v3003, %v3015
    %3018 = vset.pattern.permute.xlu0 81
    %3019 = vperm.xlu0 %3018, %v1257
    %v3020 = vpop.permute.xlu0 %3019
    %v3022 = vmul.f32 %v3020, %v3016
    %v3023 = vmul.f32 %v3020, %v3017
    %v3024 = vadd.f32 %v2990, %v3022
    %v3025 = vadd.f32 %v2991, %v3023
    %3026 = vset.pattern.permute.xlu0 18
    %3027 = vperm.xlu0 %3026, %v1130
    %v3028 = vpop.permute.xlu0 %3027
    %v3030 = vsub.f32 %v3028, %v1281
    %v3031 = vsub.f32 %v3028, %v1285
    %v3032 = vand.u32 2147483647, %v3030
    %v3033 = vand.u32 2147483647, %v3031
    %v3034 = vsub.f32 1.0, %v3032
    %v3035 = vsub.f32 1.0, %v3033
    %v3036 = vmax.f32 %v3034, 0.0
    %v3037 = vmax.f32 %v3035, 0.0
    %3038 = vset.pattern.permute.xlu0 50
    %3039 = vperm.xlu0 %3038, %v1143
    %v3040 = vpop.permute.xlu0 %3039
    %v3042 = vsub.f32 %v3040, %v1305
    %v3043 = vsub.f32 %v3040, %v1309
    %v3044 = vand.u32 2147483647, %v3042
    %v3045 = vand.u32 2147483647, %v3043
    %v3046 = vsub.f32 1.0, %v3044
    %v3047 = vsub.f32 1.0, %v3045
    %v3048 = vmax.f32 %v3046, 0.0
    %v3049 = vmax.f32 %v3047, 0.0
    %v3050 = vmul.f32 %v3036, %v3048
    %v3051 = vmul.f32 %v3037, %v3049
    %3052 = vset.pattern.permute.xlu0 82
    %3053 = vperm.xlu0 %3052, %v1257
    %v3054 = vpop.permute.xlu0 %3053
    %v3056 = vmul.f32 %v3054, %v3050
    %v3057 = vmul.f32 %v3054, %v3051
    %v3058 = vadd.f32 %v3024, %v3056
    %v3059 = vadd.f32 %v3025, %v3057
    %3060 = vset.pattern.permute.xlu0 19
    %3061 = vperm.xlu0 %3060, %v1130
    %v3062 = vpop.permute.xlu0 %3061
    %v3064 = vsub.f32 %v3062, %v1281
    %v3065 = vsub.f32 %v3062, %v1285
    %v3066 = vand.u32 2147483647, %v3064
    %v3067 = vand.u32 2147483647, %v3065
    %v3068 = vsub.f32 1.0, %v3066
    %v3069 = vsub.f32 1.0, %v3067
    %v3070 = vmax.f32 %v3068, 0.0
    %v3071 = vmax.f32 %v3069, 0.0
    %3072 = vset.pattern.permute.xlu0 51
    %3073 = vperm.xlu0 %3072, %v1143
    %v3074 = vpop.permute.xlu0 %3073
    %v3076 = vsub.f32 %v3074, %v1305
    %v3077 = vsub.f32 %v3074, %v1309
    %v3078 = vand.u32 2147483647, %v3076
    %v3079 = vand.u32 2147483647, %v3077
    %v3080 = vsub.f32 1.0, %v3078
    %v3081 = vsub.f32 1.0, %v3079
    %v3082 = vmax.f32 %v3080, 0.0
    %v3083 = vmax.f32 %v3081, 0.0
    %v3084 = vmul.f32 %v3070, %v3082
    %v3085 = vmul.f32 %v3071, %v3083
    %3086 = vset.pattern.permute.xlu0 83
    %3087 = vperm.xlu0 %3086, %v1257
    %v3088 = vpop.permute.xlu0 %3087
    %v3090 = vmul.f32 %v3088, %v3084
    %v3091 = vmul.f32 %v3088, %v3085
    %v3092 = vadd.f32 %v3058, %v3090
    %v3093 = vadd.f32 %v3059, %v3091
    %3094 = vset.pattern.permute.xlu0 20
    %3095 = vperm.xlu0 %3094, %v1130
    %v3096 = vpop.permute.xlu0 %3095
    %v3098 = vsub.f32 %v3096, %v1440
    %v3099 = vand.u32 2147483647, %v3098
    %v3100 = vsub.f32 1.0, %v3099
    %v3101 = vmax.f32 %v3100, 0.0
    %3102 = vset.pattern.permute.xlu0 52
    %3103 = vperm.xlu0 %3102, %v1143
    %v3104 = vpop.permute.xlu0 %3103
    %v3106 = vsub.f32 %v3104, %v1452
    %v3107 = vand.u32 2147483647, %v3106
    %v3108 = vsub.f32 1.0, %v3107
    %v3109 = vmax.f32 %v3108, 0.0
    %v3110 = vmul.f32 %v3101, %v3109
    %3111 = vset.pattern.permute.xlu0 84
    %3112 = vperm.xlu0 %3111, %v1257
    %v3113 = vpop.permute.xlu0 %3112
    %v3115 = vmul.f32 %v3113, %v3110
    %v3116 = vadd.f32 %v3115, 0.0
    %3117 = vset.pattern.permute.xlu0 21
    %3118 = vperm.xlu0 %3117, %v1130
    %v3119 = vpop.permute.xlu0 %3118
    %v3121 = vsub.f32 %v3119, %v1440
    %v3122 = vand.u32 2147483647, %v3121
    %v3123 = vsub.f32 1.0, %v3122
    %v3124 = vmax.f32 %v3123, 0.0
    %3125 = vset.pattern.permute.xlu0 53
    %3126 = vperm.xlu0 %3125, %v1143
    %v3127 = vpop.permute.xlu0 %3126
    %v3129 = vsub.f32 %v3127, %v1452
    %v3130 = vand.u32 2147483647, %v3129
    %v3131 = vsub.f32 1.0, %v3130
    %v3132 = vmax.f32 %v3131, 0.0
    %v3133 = vmul.f32 %v3124, %v3132
    %3134 = vset.pattern.permute.xlu0 85
    %3135 = vperm.xlu0 %3134, %v1257
    %v3136 = vpop.permute.xlu0 %3135
    %v3138 = vmul.f32 %v3136, %v3133
    %v3139 = vadd.f32 %v3116, %v3138
    %3140 = vset.pattern.permute.xlu0 22
    %3141 = vperm.xlu0 %3140, %v1130
    %v3142 = vpop.permute.xlu0 %3141
    %v3144 = vsub.f32 %v3142, %v1440
    %v3145 = vand.u32 2147483647, %v3144
    %v3146 = vsub.f32 1.0, %v3145
    %v3147 = vmax.f32 %v3146, 0.0
    %3148 = vset.pattern.permute.xlu0 54
    %3149 = vperm.xlu0 %3148, %v1143
    %v3150 = vpop.permute.xlu0 %3149
    %v3152 = vsub.f32 %v3150, %v1452
    %v3153 = vand.u32 2147483647, %v3152
    %v3154 = vsub.f32 1.0, %v3153
    %v3155 = vmax.f32 %v3154, 0.0
    %v3156 = vmul.f32 %v3147, %v3155
    %3157 = vset.pattern.permute.xlu0 86
    %3158 = vperm.xlu0 %3157, %v1257
    %v3159 = vpop.permute.xlu0 %3158
    %v3161 = vmul.f32 %v3159, %v3156
    %v3162 = vadd.f32 %v3139, %v3161
    %3163 = vset.pattern.permute.xlu0 23
    %3164 = vperm.xlu0 %3163, %v1130
    %v3165 = vpop.permute.xlu0 %3164
    %v3167 = vsub.f32 %v3165, %v1440
    %v3168 = vand.u32 2147483647, %v3167
    %v3169 = vsub.f32 1.0, %v3168
    %v3170 = vmax.f32 %v3169, 0.0
    %3171 = vset.pattern.permute.xlu0 55
    %3172 = vperm.xlu0 %3171, %v1143
    %v3173 = vpop.permute.xlu0 %3172
    %v3175 = vsub.f32 %v3173, %v1452
    %v3176 = vand.u32 2147483647, %v3175
    %v3177 = vsub.f32 1.0, %v3176
    %v3178 = vmax.f32 %v3177, 0.0
    %v3179 = vmul.f32 %v3170, %v3178
    %3180 = vset.pattern.permute.xlu0 87
    %3181 = vperm.xlu0 %3180, %v1257
    %v3182 = vpop.permute.xlu0 %3181
    %v3184 = vmul.f32 %v3182, %v3179
    %v3185 = vadd.f32 %v3162, %v3184
    %3186 = vset.pattern.permute.xlu0 24
    %3187 = vperm.xlu0 %3186, %v1130
    %v3188 = vpop.permute.xlu0 %3187
    %v3190 = vsub.f32 %v3188, %v1281
    %v3191 = vsub.f32 %v3188, %v1285
    %v3192 = vand.u32 2147483647, %v3190
    %v3193 = vand.u32 2147483647, %v3191
    %v3194 = vsub.f32 1.0, %v3192
    %v3195 = vsub.f32 1.0, %v3193
    %v3196 = vmax.f32 %v3194, 0.0
    %v3197 = vmax.f32 %v3195, 0.0
    %3198 = vset.pattern.permute.xlu0 56
    %3199 = vperm.xlu0 %3198, %v1143
    %v3200 = vpop.permute.xlu0 %3199
    %v3202 = vsub.f32 %v3200, %v1305
    %v3203 = vsub.f32 %v3200, %v1309
    %v3204 = vand.u32 2147483647, %v3202
    %v3205 = vand.u32 2147483647, %v3203
    %v3206 = vsub.f32 1.0, %v3204
    %v3207 = vsub.f32 1.0, %v3205
    %v3208 = vmax.f32 %v3206, 0.0
    %v3209 = vmax.f32 %v3207, 0.0
    %v3210 = vmul.f32 %v3196, %v3208
    %v3211 = vmul.f32 %v3197, %v3209
    %3212 = vset.pattern.permute.xlu0 88
    %3213 = vperm.xlu0 %3212, %v1257
    %v3214 = vpop.permute.xlu0 %3213
    %v3216 = vmul.f32 %v3214, %v3210
    %v3217 = vmul.f32 %v3214, %v3211
    %v3218 = vadd.f32 %v3216, 0.0
    %v3219 = vadd.f32 %v3217, 0.0
    %3220 = vset.pattern.permute.xlu0 25
    %3221 = vperm.xlu0 %3220, %v1130
    %v3222 = vpop.permute.xlu0 %3221
    %v3224 = vsub.f32 %v3222, %v1281
    %v3225 = vsub.f32 %v3222, %v1285
    %v3226 = vand.u32 2147483647, %v3224
    %v3227 = vand.u32 2147483647, %v3225
    %v3228 = vsub.f32 1.0, %v3226
    %v3229 = vsub.f32 1.0, %v3227
    %v3230 = vmax.f32 %v3228, 0.0
    %v3231 = vmax.f32 %v3229, 0.0
    %3232 = vset.pattern.permute.xlu0 57
    %3233 = vperm.xlu0 %3232, %v1143
    %v3234 = vpop.permute.xlu0 %3233
    %v3236 = vsub.f32 %v3234, %v1305
    %v3237 = vsub.f32 %v3234, %v1309
    %v3238 = vand.u32 2147483647, %v3236
    %v3239 = vand.u32 2147483647, %v3237
    %v3240 = vsub.f32 1.0, %v3238
    %v3241 = vsub.f32 1.0, %v3239
    %v3242 = vmax.f32 %v3240, 0.0
    %v3243 = vmax.f32 %v3241, 0.0
    %v3244 = vmul.f32 %v3230, %v3242
    %v3245 = vmul.f32 %v3231, %v3243
    %3246 = vset.pattern.permute.xlu0 89
    %3247 = vperm.xlu0 %3246, %v1257
    %v3248 = vpop.permute.xlu0 %3247
    %v3250 = vmul.f32 %v3248, %v3244
    %v3251 = vmul.f32 %v3248, %v3245
    %v3252 = vadd.f32 %v3218, %v3250
    %v3253 = vadd.f32 %v3219, %v3251
    %3254 = vset.pattern.permute.xlu0 26
    %3255 = vperm.xlu0 %3254, %v1130
    %v3256 = vpop.permute.xlu0 %3255
    %v3258 = vsub.f32 %v3256, %v1281
    %v3259 = vsub.f32 %v3256, %v1285
    %v3260 = vand.u32 2147483647, %v3258
    %v3261 = vand.u32 2147483647, %v3259
    %v3262 = vsub.f32 1.0, %v3260
    %v3263 = vsub.f32 1.0, %v3261
    %v3264 = vmax.f32 %v3262, 0.0
    %v3265 = vmax.f32 %v3263, 0.0
    %3266 = vset.pattern.permute.xlu0 58
    %3267 = vperm.xlu0 %3266, %v1143
    %v3268 = vpop.permute.xlu0 %3267
    %v3270 = vsub.f32 %v3268, %v1305
    %v3271 = vsub.f32 %v3268, %v1309
    %v3272 = vand.u32 2147483647, %v3270
    %v3273 = vand.u32 2147483647, %v3271
    %v3274 = vsub.f32 1.0, %v3272
    %v3275 = vsub.f32 1.0, %v3273
    %v3276 = vmax.f32 %v3274, 0.0
    %v3277 = vmax.f32 %v3275, 0.0
    %v3278 = vmul.f32 %v3264, %v3276
    %v3279 = vmul.f32 %v3265, %v3277
    %3280 = vset.pattern.permute.xlu0 90
    %3281 = vperm.xlu0 %3280, %v1257
    %v3282 = vpop.permute.xlu0 %3281
    %v3284 = vmul.f32 %v3282, %v3278
    %v3285 = vmul.f32 %v3282, %v3279
    %v3286 = vadd.f32 %v3252, %v3284
    %v3287 = vadd.f32 %v3253, %v3285
    %3288 = vset.pattern.permute.xlu0 27
    %3289 = vperm.xlu0 %3288, %v1130
    %v3290 = vpop.permute.xlu0 %3289
    %v3292 = vsub.f32 %v3290, %v1281
    %v3293 = vsub.f32 %v3290, %v1285
    %v3294 = vand.u32 2147483647, %v3292
    %v3295 = vand.u32 2147483647, %v3293
    %v3296 = vsub.f32 1.0, %v3294
    %v3297 = vsub.f32 1.0, %v3295
    %v3298 = vmax.f32 %v3296, 0.0
    %v3299 = vmax.f32 %v3297, 0.0
    %3300 = vset.pattern.permute.xlu0 59
    %3301 = vperm.xlu0 %3300, %v1143
    %v3302 = vpop.permute.xlu0 %3301
    %v3304 = vsub.f32 %v3302, %v1305
    %v3305 = vsub.f32 %v3302, %v1309
    %v3306 = vand.u32 2147483647, %v3304
    %v3307 = vand.u32 2147483647, %v3305
    %v3308 = vsub.f32 1.0, %v3306
    %v3309 = vsub.f32 1.0, %v3307
    %v3310 = vmax.f32 %v3308, 0.0
    %v3311 = vmax.f32 %v3309, 0.0
    %v3312 = vmul.f32 %v3298, %v3310
    %v3313 = vmul.f32 %v3299, %v3311
    %3314 = vset.pattern.permute.xlu0 91
    %3315 = vperm.xlu0 %3314, %v1257
    %v3316 = vpop.permute.xlu0 %3315
    %v3318 = vmul.f32 %v3316, %v3312
    %v3319 = vmul.f32 %v3316, %v3313
    %v3320 = vadd.f32 %v3286, %v3318
    %v3321 = vadd.f32 %v3287, %v3319
    %3322 = vset.pattern.permute.xlu0 28
    %3323 = vperm.xlu0 %3322, %v1130
    %v3324 = vpop.permute.xlu0 %3323
    %v3326 = vsub.f32 %v3324, %v1440
    %v3327 = vand.u32 2147483647, %v3326
    %v3328 = vsub.f32 1.0, %v3327
    %v3329 = vmax.f32 %v3328, 0.0
    %3330 = vset.pattern.permute.xlu0 60
    %3331 = vperm.xlu0 %3330, %v1143
    %v3332 = vpop.permute.xlu0 %3331
    %v3334 = vsub.f32 %v3332, %v1452
    %v3335 = vand.u32 2147483647, %v3334
    %v3336 = vsub.f32 1.0, %v3335
    %v3337 = vmax.f32 %v3336, 0.0
    %v3338 = vmul.f32 %v3329, %v3337
    %3339 = vset.pattern.permute.xlu0 92
    %3340 = vperm.xlu0 %3339, %v1257
    %v3341 = vpop.permute.xlu0 %3340
    %v3343 = vmul.f32 %v3341, %v3338
    %v3344 = vadd.f32 %v3343, 0.0
    %3345 = vset.pattern.permute.xlu0 29
    %3346 = vperm.xlu0 %3345, %v1130
    %v3347 = vpop.permute.xlu0 %3346
    %v3349 = vsub.f32 %v3347, %v1440
    %v3350 = vand.u32 2147483647, %v3349
    %v3351 = vsub.f32 1.0, %v3350
    %v3352 = vmax.f32 %v3351, 0.0
    %3353 = vset.pattern.permute.xlu0 61
    %3354 = vperm.xlu0 %3353, %v1143
    %v3355 = vpop.permute.xlu0 %3354
    %v3357 = vsub.f32 %v3355, %v1452
    %v3358 = vand.u32 2147483647, %v3357
    %v3359 = vsub.f32 1.0, %v3358
    %v3360 = vmax.f32 %v3359, 0.0
    %v3361 = vmul.f32 %v3352, %v3360
    %3362 = vset.pattern.permute.xlu0 93
    %3363 = vperm.xlu0 %3362, %v1257
    %v3364 = vpop.permute.xlu0 %3363
    %v3366 = vmul.f32 %v3364, %v3361
    %v3367 = vadd.f32 %v3344, %v3366
    %3368 = vset.pattern.permute.xlu0 30
    %3369 = vperm.xlu0 %3368, %v1130
    %v3370 = vpop.permute.xlu0 %3369
    %v3372 = vsub.f32 %v3370, %v1440
    %v3373 = vand.u32 2147483647, %v3372
    %v3374 = vsub.f32 1.0, %v3373
    %v3375 = vmax.f32 %v3374, 0.0
    %3376 = vset.pattern.permute.xlu0 62
    %3377 = vperm.xlu0 %3376, %v1143
    %v3378 = vpop.permute.xlu0 %3377
    %v3380 = vsub.f32 %v3378, %v1452
    %v3381 = vand.u32 2147483647, %v3380
    %v3382 = vsub.f32 1.0, %v3381
    %v3383 = vmax.f32 %v3382, 0.0
    %v3384 = vmul.f32 %v3375, %v3383
    %3385 = vset.pattern.permute.xlu0 94
    %3386 = vperm.xlu0 %3385, %v1257
    %v3387 = vpop.permute.xlu0 %3386
    %v3389 = vmul.f32 %v3387, %v3384
    %v3390 = vadd.f32 %v3367, %v3389
    %3391 = vset.pattern.permute.xlu0 31
    %3392 = vperm.xlu0 %3391, %v1130
    %v3393 = vpop.permute.xlu0 %3392
    %v3395 = vsub.f32 %v3393, %v1440
    %v3396 = vand.u32 2147483647, %v3395
    %v3397 = vsub.f32 1.0, %v3396
    %v3398 = vmax.f32 %v3397, 0.0
    %3399 = vset.pattern.permute.xlu0 63
    %3400 = vperm.xlu0 %3399, %v1143
    %v3401 = vpop.permute.xlu0 %3400
    %v3403 = vsub.f32 %v3401, %v1452
    %v3404 = vand.u32 2147483647, %v3403
    %v3405 = vsub.f32 1.0, %v3404
    %v3406 = vmax.f32 %v3405, 0.0
    %v3407 = vmul.f32 %v3398, %v3406
    %3408 = vset.pattern.permute.xlu0 95
    %3409 = vperm.xlu0 %3408, %v1257
    %v3410 = vpop.permute.xlu0 %3409
    %v3412 = vmul.f32 %v3410, %v3407
    %v3413 = vadd.f32 %v3390, %v3412
    %3414 = vmatprep.subr.mxu0 0.0
    %3415 = vmatpush1.msra.mxu0 %v748
    %3416 = vmatprep.subr.mxu0 0.0
    %3417 = vmatpush1.msra.mxu0 %v753
    %3418 = vmatprep.subr.mxu0 0.0
    %3419 = vmatpush1.msra.mxu0 %v758
    %3420 = vmatprep.subr.mxu0 0.0
    %3421 = vmatpush1.msra.mxu0 %v763
    %3422 = vmatprep.subr.mxu0 0.0
    %3423 = vmatpush1.msra.mxu0 %v768
    %3424 = vmatprep.subr.mxu0 0.0
    %3425 = vmatpush1.msra.mxu0 %v773
    %3426 = vmatprep.subr.mxu0 0.0
    %3427 = vmatpush1.msra.mxu0 %v778
    %3428 = vmatprep.subr.mxu0 0.0
    %3429 = vmatpush1.msra.mxu0 %v783
    %3430 = vmatprep.subr.mxu0 0.0
    %3431 = vmatpush1.msra.mxu0 %v788
    %3432 = vmatprep.subr.mxu0 0.0
    %3433 = vmatpush1.msra.mxu0 %v793
    %3434 = vmatprep.subr.mxu0 0.0
    %3435 = vmatpush1.msra.mxu0 %v798
    %3436 = vmatprep.subr.mxu0 0.0
    %3437 = vmatpush1.msra.mxu0 %v803
    %3438 = vmatprep.subr.mxu0 0.0
    %3439 = vmatpush1.msra.mxu0 %v808
    %3440 = vmatprep.subr.mxu0 0.0
    %3441 = vmatpush1.msra.mxu0 %v813
    %3442 = vmatprep.subr.mxu0 0.0
    %3443 = vmatpush1.msra.mxu0 %v818
    %3444 = vmatprep.subr.mxu0 0.0
    %3445 = vmatpush1.msra.mxu0 %v823
    %3446 = vmatprep.subr.mxu0 0.0
    %3447 = vmatpush1.msra.mxu0 %v828
    %3448 = vmatprep.subr.mxu0 0.0
    %3449 = vmatpush1.msra.mxu0 %v833
    %3450 = vmatprep.subr.mxu0 0.0
    %3451 = vmatpush1.msra.mxu0 %v838
    %3452 = vmatprep.subr.mxu0 0.0
    %3453 = vmatpush1.msra.mxu0 %v843
    %3454 = vmatprep.subr.mxu0 0.0
    %3455 = vmatpush1.msra.mxu0 %v848
    %3456 = vmatprep.subr.mxu0 0.0
    %3457 = vmatpush1.msra.mxu0 %v853
    %3458 = vmatprep.subr.mxu0 0.0
    %3459 = vmatpush1.msra.mxu0 %v858
    %3460 = vmatprep.subr.mxu0 0.0
    %3461 = vmatpush1.msra.mxu0 %v863
    %3462 = vmatprep.subr.mxu0 0.0
    %3463 = vmatpush1.msra.mxu0 %v868
    %3464 = vmatprep.subr.mxu0 0.0
    %3465 = vmatpush1.msra.mxu0 %v873
    %3466 = vmatprep.subr.mxu0 0.0
    %3467 = vmatpush1.msra.mxu0 %v878
    %3468 = vmatprep.subr.mxu0 0.0
    %3469 = vmatpush1.msra.mxu0 %v883
    %3470 = vmatprep.subr.mxu0 0.0
    %3471 = vmatpush1.msra.mxu0 %v888
    %3472 = vmatprep.subr.mxu0 0.0
    %3473 = vmatpush1.msra.mxu0 %v893
    %3474 = vmatprep.subr.mxu0 0.0
    %3475 = vmatpush1.msra.mxu0 %v898
    %3476 = vmatprep.subr.mxu0 0.0
    %3477 = vmatpush1.msra.mxu0 %v903
    %3478 = vmatprep.mubr.f32.mxu0 %v2637
    %3479 = vmatmul.mubr.f32.gmra.mrb[0].mxu0 %v2636
    %v3480 = vpop.f32.mrb[0].mxu0
    %v3481 = vadd.f32 0.0, %v3480
    %v3482 = vpop.f32.mrb[0].mxu0
    %3483 = vmatprep.mubr.f32.mxu0 %v2865
    %3484 = vmatmul.mubr.f32.gmra.mrb[0].mxu0 %v2864
    %v3485 = vpop.f32.mrb[0].mxu0
    %v3486 = vadd.f32 0.0, %v3485
    %v3487 = vpop.f32.mrb[0].mxu0
    %3488 = vmatprep.mubr.f32.mxu0 %v3093
    %3489 = vmatmul.mubr.f32.gmra.mrb[0].mxu0 %v3092
    %v3490 = vpop.f32.mrb[0].mxu0
    %v3491 = vadd.f32 0.0, %v3490
    %v3492 = vpop.f32.mrb[0].mxu0
    %3493 = vmatprep.mubr.f32.mxu0 %v3321
    %3494 = vmatmul.mubr.f32.gmra.mrb[0].mxu0 %v3320
    %v3495 = vpop.f32.mrb[0].mxu0
    %v3496 = vadd.f32 0.0, %v3495
    %v3497 = vpop.f32.mrb[0].mxu0
    %3498 = vdwg.mxu0
    %3499 = vmatprep.subr.mxu0 0.0
    %3500 = vmatpush1.msra.mxu0 %v908
    %3501 = vmatprep.subr.mxu0 0.0
    %3502 = vmatpush1.msra.mxu0 %v913
    %3503 = vmatprep.subr.mxu0 0.0
    %3504 = vmatpush1.msra.mxu0 %v918
    %3505 = vmatprep.subr.mxu0 0.0
    %3506 = vmatpush1.msra.mxu0 %v923
    %3507 = vmatprep.subr.mxu0 0.0
    %3508 = vmatpush1.msra.mxu0 %v928
    %3509 = vmatprep.subr.mxu0 0.0
    %3510 = vmatpush1.msra.mxu0 %v933
    %3511 = vmatprep.subr.mxu0 0.0
    %3512 = vmatpush1.msra.mxu0 %v938
    %3513 = vmatprep.subr.mxu0 0.0
    %3514 = vmatpush1.msra.mxu0 %v943
    %3515 = vmatprep.subr.mxu0 0.0
    %3516 = vmatpush1.msra.mxu0 %v948
    %3517 = vmatprep.subr.mxu0 0.0
    %3518 = vmatpush1.msra.mxu0 %v953
    %3519 = vmatprep.subr.mxu0 0.0
    %3520 = vmatpush1.msra.mxu0 %v958
    %3521 = vmatprep.subr.mxu0 0.0
    %3522 = vmatpush1.msra.mxu0 %v963
    %3523 = vmatprep.subr.mxu0 0.0
    %3524 = vmatpush1.msra.mxu0 %v968
    %3525 = vmatprep.subr.mxu0 0.0
    %3526 = vmatpush1.msra.mxu0 %v973
    %3527 = vmatprep.subr.mxu0 0.0
    %3528 = vmatpush1.msra.mxu0 %v978
    %3529 = vmatprep.subr.mxu0 0.0
    %3530 = vmatpush1.msra.mxu0 %v983
    %3531 = vmatprep.subr.mxu0 0.0
    %3532 = vmatpush1.msra.mxu0 0.0
    %3533 = vmatprep.subr.mxu0 0.0
    %3534 = vmatpush1.msra.mxu0 0.0
    %3535 = vmatprep.subr.mxu0 0.0
    %3536 = vmatpush1.msra.mxu0 0.0
    %3537 = vmatprep.subr.mxu0 0.0
    %3538 = vmatpush1.msra.mxu0 0.0
    %3539 = vmatprep.subr.mxu0 0.0
    %3540 = vmatpush1.msra.mxu0 0.0
    %3541 = vmatprep.subr.mxu0 0.0
    %3542 = vmatpush1.msra.mxu0 0.0
    %3543 = vmatprep.subr.mxu0 0.0
    %3544 = vmatpush1.msra.mxu0 0.0
    %3545 = vmatprep.subr.mxu0 0.0
    %3546 = vmatpush1.msra.mxu0 0.0
    %3547 = vmatprep.subr.mxu0 0.0
    %3548 = vmatpush1.msra.mxu0 0.0
    %3549 = vmatprep.subr.mxu0 0.0
    %3550 = vmatpush1.msra.mxu0 0.0
    %3551 = vmatprep.subr.mxu0 0.0
    %3552 = vmatpush1.msra.mxu0 0.0
    %3553 = vmatprep.subr.mxu0 0.0
    %3554 = vmatpush1.msra.mxu0 0.0
    %3555 = vmatprep.subr.mxu0 0.0
    %3556 = vmatpush1.msra.mxu0 0.0
    %3557 = vmatprep.subr.mxu0 0.0
    %3558 = vmatpush1.msra.mxu0 0.0
    %3559 = vmatprep.subr.mxu0 0.0
    %3560 = vmatpush1.msra.mxu0 0.0
    %3561 = vmatprep.subr.mxu0 0.0
    %3562 = vmatpush1.msra.mxu0 0.0
    %3563 = vmatprep.mubr.f32.mxu0 0.0
    %3564 = vmatmul.mubr.f32.gmra.mrb[0].mxu0 %v2729
    %v3565 = vpop.f32.mrb[0].mxu0
    %v3566 = vadd.f32 %v3481, %v3565
    %v3567 = vpop.f32.mrb[0].mxu0
    %3568 = vmatprep.mubr.f32.mxu0 0.0
    %3569 = vmatmul.mubr.f32.gmra.mrb[0].mxu0 %v2957
    %v3570 = vpop.f32.mrb[0].mxu0
    %v3571 = vadd.f32 %v3486, %v3570
    %v3572 = vpop.f32.mrb[0].mxu0
    %3573 = vmatprep.mubr.f32.mxu0 0.0
    %3574 = vmatmul.mubr.f32.gmra.mrb[0].mxu0 %v3185
    %v3575 = vpop.f32.mrb[0].mxu0
    %v3576 = vadd.f32 %v3491, %v3575
    %v3577 = vpop.f32.mrb[0].mxu0
    %3578 = vmatprep.mubr.f32.mxu0 0.0
    %3579 = vmatmul.mubr.f32.gmra.mrb[0].mxu0 %v3413
    %v3580 = vpop.f32.mrb[0].mxu0
    %v3581 = vadd.f32 %v3496, %v3580
    %v3582 = vpop.f32.mrb[0].mxu0
    %3583 = vdwg.mxu0
    %v3584 = vmul.f32 %v3566, %v1263
    %v3585 = vmul.f32 %v3571, %v1264
    %v3586 = vmul.f32 %v3576, %v1265
    %v3587 = vmul.f32 %v3581, %v1266
    %v3589 = vsel %vm152, %v3584, 0
    %v3592 = vsel %vm152, %v3585, 0
    %v3595 = vsel %vm152, %v3586, 0
    %v3598 = vsel %vm152, %v3587, 0
    %3600 = vmatprep.subr.mxu0 0.0
    %3601 = vmatpush1.msra.mxu0 %v1267
    %3602 = vmatprep.subr.mxu0 0.0
    %3603 = vmatpush1.msra.mxu0 %v1268
    %3604 = vmatprep.subr.mxu0 0.0
    %3605 = vmatpush1.msra.mxu0 %v1269
    %3606 = vmatprep.subr.mxu0 0.0
    %3607 = vmatpush1.msra.mxu0 %v1270
    %3608 = vmatprep.subr.mxu0 0.0
    %3609 = vmatpush1.msra.mxu0 0.0
    %3610 = vmatprep.subr.mxu0 0.0
    %3611 = vmatpush1.msra.mxu0 0.0
    %3612 = vmatprep.subr.mxu0 0.0
    %3613 = vmatpush1.msra.mxu0 0.0
    %3614 = vmatprep.subr.mxu0 0.0
    %3615 = vmatpush1.msra.mxu0 0.0
    %3616 = vmatprep.subr.mxu0 0.0
    %3617 = vmatpush1.msra.mxu0 0.0
    %3618 = vmatprep.subr.mxu0 0.0
    %3619 = vmatpush1.msra.mxu0 0.0
    %3620 = vmatprep.subr.mxu0 0.0
    %3621 = vmatpush1.msra.mxu0 0.0
    %3622 = vmatprep.subr.mxu0 0.0
    %3623 = vmatpush1.msra.mxu0 0.0
    %3624 = vmatprep.subr.mxu0 0.0
    %3625 = vmatpush1.msra.mxu0 0.0
    %3626 = vmatprep.subr.mxu0 0.0
    %3627 = vmatpush1.msra.mxu0 0.0
    %3628 = vmatprep.subr.mxu0 0.0
    %3629 = vmatpush1.msra.mxu0 0.0
    %3630 = vmatprep.subr.mxu0 0.0
    %3631 = vmatpush1.msra.mxu0 0.0
    %3632 = vmatprep.subr.mxu0 0.0
    %3633 = vmatpush1.msra.mxu0 0.0
    %3634 = vmatprep.subr.mxu0 0.0
    %3635 = vmatpush1.msra.mxu0 0.0
    %3636 = vmatprep.subr.mxu0 0.0
    %3637 = vmatpush1.msra.mxu0 0.0
    %3638 = vmatprep.subr.mxu0 0.0
    %3639 = vmatpush1.msra.mxu0 0.0
    %3640 = vmatprep.subr.mxu0 0.0
    %3641 = vmatpush1.msra.mxu0 0.0
    %3642 = vmatprep.subr.mxu0 0.0
    %3643 = vmatpush1.msra.mxu0 0.0
    %3644 = vmatprep.subr.mxu0 0.0
    %3645 = vmatpush1.msra.mxu0 0.0
    %3646 = vmatprep.subr.mxu0 0.0
    %3647 = vmatpush1.msra.mxu0 0.0
    %3648 = vmatprep.subr.mxu0 0.0
    %3649 = vmatpush1.msra.mxu0 0.0
    %3650 = vmatprep.subr.mxu0 0.0
    %3651 = vmatpush1.msra.mxu0 0.0
    %3652 = vmatprep.subr.mxu0 0.0
    %3653 = vmatpush1.msra.mxu0 0.0
    %3654 = vmatprep.subr.mxu0 0.0
    %3655 = vmatpush1.msra.mxu0 0.0
    %3656 = vmatprep.subr.mxu0 0.0
    %3657 = vmatpush1.msra.mxu0 0.0
    %3658 = vmatprep.subr.mxu0 0.0
    %3659 = vmatpush1.msra.mxu0 0.0
    %3660 = vmatprep.subr.mxu0 0.0
    %3661 = vmatpush1.msra.mxu0 0.0
    %3662 = vmatprep.subr.mxu0 0.0
    %3663 = vmatpush1.msra.mxu0 0.0
    %3664 = vmatprep.mubr.f32.mxu0 0.0
    %3665 = vmatmul.mubr.f32.gmra.mrb[0].mxu0 %v3589
    %v3666 = vpop.f32.mrb[0].mxu0
    %v3667 = vadd.f32 0.0, %v3666
    %v3668 = vpop.f32.mrb[0].mxu0
    %3669 = vmatprep.mubr.f32.mxu0 0.0
    %3670 = vmatmul.mubr.f32.gmra.mrb[0].mxu0 %v3592
    %v3671 = vpop.f32.mrb[0].mxu0
    %v3672 = vadd.f32 0.0, %v3671
    %v3673 = vpop.f32.mrb[0].mxu0
    %3674 = vmatprep.mubr.f32.mxu0 0.0
    %3675 = vmatmul.mubr.f32.gmra.mrb[0].mxu0 %v3595
    %v3676 = vpop.f32.mrb[0].mxu0
    %v3677 = vadd.f32 0.0, %v3676
    %v3678 = vpop.f32.mrb[0].mxu0
    %3679 = vmatprep.mubr.f32.mxu0 0.0
    %3680 = vmatmul.mubr.f32.gmra.mrb[0].mxu0 %v3598
    %v3681 = vpop.f32.mrb[0].mxu0
    %v3682 = vadd.f32 0.0, %v3681
    %v3683 = vpop.f32.mrb[0].mxu0
    %3684 = vdwg.mxu0
    %v3685 = vadd.f32 %v3667, %v3672
    %v3686 = vadd.f32 %v3685, %v3677
    %v3687 = vadd.f32 %v3686, %v3682
    %v3688 = vadd.f32 %v3687, %v2495
    %s3689 = scalar_lea.vmem [#allocation2], 8
    %3690 = vst.msk [vmem:[%s3689] sm:$0xff] %vm152, %v3688
    // Predicated region
    $region54: #{msda_forward.1} parent=1 // pred_check
      _
    $region55: #{msda_forward.1} parent=1 // pred_check_branch
      %3692 = sbr.rel (0) target = $region57
    $region56: #{msda_forward.1} parent=1 // pred_region
      %s3694 = ssub.s32 256, 256
      %3695 = vsyncadd [#allocation3], %s3694
      %s3696 = sshll.u32 [#allocation2], 4
      %s3697 = int_to_ptr.vmem [resolvable:$true] %s3696
      %3702 = dma.vmem_to_hbm [thread:$0]  %s3697, 256, %s13, [#allocation3], 128, 128, 8
    $region57: #{msda_forward.1} parent=1 // pred_fallthru
      _
    // Predicated region
    $region58: #{msda_forward.1} parent=1 // pred_check
      _
    $region59: #{msda_forward.1} parent=1 // pred_check_branch
      %3704 = sbr.rel (0) target = $region61
    $region60: #{msda_forward.1} parent=1 // pred_region
      %3705 = dma.done [#allocation3], 256
    $region61: #{msda_forward.1} parent=1 // pred_fallthru
      _
    %3706 = vsyncpa [#allocation3], 1

</llo_original>
